<compile_context>
chip_gen: v5e
topology: v5e:2x2
jax: 0.10.0
libtpu: 0.0.40
codegen_flags: <defaults>
</compile_context>

<pallas_src>
import math

import jax
import jax.numpy as jnp
from jax.experimental import pallas as pl
from jax.experimental.pallas import tpu as pltpu

# Lane-aligned (padded) dimensions.
_D_IN = 100
_D_IN_PAD = 128        # 100 -> 128
_H1, _H2, _H3 = 256, 512, 1024
_D_OUT = 784
_D_OUT_PAD = 896       # 784 -> 7*128


def _generator_kernel(x_ref,
                      w1_ref, b1_ref,
                      w2_ref, b2_ref,
                      w3_ref, b3_ref,
                      w4_ref, b4_ref,
                      out_ref):
    """Fused 4-layer MLP (ReLU x3 + Tanh) for one batch tile.

    x_ref:   (TM, 128)  bf16
    w*_ref:  bf16 weights in (in, out) layout (VMEM-resident across the grid)
    b*_ref:  (1, out)   f32
    out_ref: (TM, 896)  f32
    """
    h = jnp.dot(x_ref[...], w1_ref[...],
                preferred_element_type=jnp.float32) + b1_ref[...]
    h = jnp.maximum(h, 0.0).astype(jnp.bfloat16)

    h = jnp.dot(h, w2_ref[...],
                preferred_element_type=jnp.float32) + b2_ref[...]
    h = jnp.maximum(h, 0.0).astype(jnp.bfloat16)

    h = jnp.dot(h, w3_ref[...],
                preferred_element_type=jnp.float32) + b3_ref[...]
    h = jnp.maximum(h, 0.0).astype(jnp.bfloat16)

    h = jnp.dot(h, w4_ref[...],
                preferred_element_type=jnp.float32) + b4_ref[...]
    out_ref[...] = jnp.tanh(h)          # tanh goes to the EUP slot (cheap), f32


def generator_forward(x, params, *, tile_m=256):
    """x: (B, 100) float32 -> (B, 1, 28, 28) float32."""
    (w1, b1), (w2, b2), (w3, b3), (w4, b4) = params
    B = x.shape[0]

    # Batch tile: fill the MXU M dim (256) at large B; for small B round up to
    # the sublane granule (8) so the whole batch is one tile.
    tm = tile_m if B >= tile_m else max(8, ((B + 7) // 8) * 8)
    b_pad = ((B + tm - 1) // tm) * tm
    grid = (b_pad // tm,)

    # Zero-pad to lane-aligned shapes (no effect on results).
    x_p = jnp.zeros((b_pad, _D_IN_PAD), jnp.float32).at[:B, :_D_IN].set(x)
    w1_p = jnp.zeros((_D_IN_PAD, _H1), jnp.float32).at[:_D_IN, :].set(w1)
    w4_p = jnp.zeros((_H3, _D_OUT_PAD), jnp.float32).at[:, :_D_OUT].set(w4)
    b4_p = jnp.zeros((1, _D_OUT_PAD), jnp.float32).at[:, :_D_OUT].set(b4)

    # bf16 operands into the MXU; accumulation stays f32 inside the kernel.
    x_bf = x_p.astype(jnp.bfloat16)
    w1_bf = w1_p.astype(jnp.bfloat16)
    w2_bf = w2.astype(jnp.bfloat16)
    w3_bf = w3.astype(jnp.bfloat16)
    w4_bf = w4_p.astype(jnp.bfloat16)

    def const_spec(shape):
        # Same block for every grid step -> fetched once, VMEM-resident.
        return pl.BlockSpec(shape, lambda i: (0, 0))

    flops = 2 * b_pad * (_D_IN_PAD * _H1 + _H1 * _H2 + _H2 * _H3 + _H3 * _D_OUT_PAD)
    weight_bytes = 2 * (_D_IN_PAD * _H1 + _H1 * _H2 + _H2 * _H3 + _H3 * _D_OUT_PAD)
    bias_bytes = 4 * (_H1 + _H2 + _H3 + _D_OUT_PAD)
    io_bytes = 2 * b_pad * _D_IN_PAD + 4 * b_pad * _D_OUT_PAD

    out_flat = pl.pallas_call(
        _generator_kernel,
        out_shape=jax.ShapeDtypeStruct((b_pad, _D_OUT_PAD), jnp.float32),
        grid_spec=pltpu.PrefetchScalarGridSpec(
            num_scalar_prefetch=0,
            grid=grid,
            in_specs=[
                pl.BlockSpec((tm, _D_IN_PAD), lambda i: (i, 0)),      # x tile
                const_spec((_D_IN_PAD, _H1)), const_spec((1, _H1)),   # layer 1
                const_spec((_H1, _H2)),       const_spec((1, _H2)),   # layer 2
                const_spec((_H2, _H3)),       const_spec((1, _H3)),   # layer 3
                const_spec((_H3, _D_OUT_PAD)), const_spec((1, _D_OUT_PAD)),  # layer 4
            ],
            out_specs=pl.BlockSpec((tm, _D_OUT_PAD), lambda i: (i, 0)),
        ),
        compiler_params=pltpu.CompilerParams(
            dimension_semantics=("parallel",),      # megacore sharding on v7x
            vmem_limit_bytes=32 << 20,              # fits all gens incl. v7x (64 MiB)
        ),
        cost_estimate=pl.CostEstimate(
            flops=flops,
            transcendentals=b_pad * _D_OUT_PAD,
            bytes_accessed=weight_bytes + bias_bytes + io_bytes,
        ),
    )(x_bf, w1_bf, b1, w2_bf, b2, w3_bf, b3, w4_bf, b4_p)

    return out_flat[:B, :_D_OUT].reshape(B, 1, 28, 28)


def init_generator_params(key):
    """Deterministic init matching PyTorch nn.Linear defaults:
    U(-1/sqrt(fan_in), 1/sqrt(fan_in)) for both weight and bias.
    Weights stored as (in_features, out_features). Biases stored as (1, out)."""
    dims = [(_D_IN, _H1), (_H1, _H2), (_H2, _H3), (_H3, _D_OUT)]
    params = []
    for (fan_in, fan_out) in dims:
        key, kw, kb = jax.random.split(key, 3)
        bound = 1.0 / math.sqrt(fan_in)
        w = jax.random.uniform(kw, (fan_in, fan_out), jnp.float32, -bound, bound)
        b = jax.random.uniform(kb, (1, fan_out), jnp.float32, -bound, bound)
        params.append((w, b))
    return params


def _reference_forward_f32(x, params):
    """Full-f32 pure-JAX reference."""
    (w1, b1), (w2, b2), (w3, b3), (w4, b4) = params
    h = jnp.maximum(x @ w1 + b1, 0.0)
    h = jnp.maximum(h @ w2 + b2, 0.0)
    h = jnp.maximum(h @ w3 + b3, 0.0)
    h = jnp.tanh(h @ w4 + b4)
    return h.reshape(x.shape[0], 1, 28, 28)


def _reference_forward_bf16(x, params):
    """Pure-JAX reference mirroring the kernel's bf16-operand / f32-accumulate math."""
    (w1, b1), (w2, b2), (w3, b3), (w4, b4) = params

    def dot(a, w):
        return jnp.dot(a.astype(jnp.bfloat16), w.astype(jnp.bfloat16),
                       preferred_element_type=jnp.float32)

    h = jnp.maximum(dot(x, w1) + b1, 0.0)
    h = jnp.maximum(dot(h, w2) + b2, 0.0)
    h = jnp.maximum(dot(h, w3) + b3, 0.0)
    h = jnp.tanh(dot(h, w4) + b4)
    return h.reshape(x.shape[0], 1, 28, 28)


if __name__ == "__main__":
    key = jax.random.PRNGKey(0)
    key, kx = jax.random.split(key)

    B = 8  # small batch (sublane-friendly)
    x = jax.random.normal(kx, (B, 100), jnp.float32)  # latent noise z

    params = init_generator_params(key)

    out = jax.block_until_ready(generator_forward(x, params))
    assert out.shape == (B, 1, 28, 28), out.shape

    # Exact-semantics check against a bf16-matched JAX reference.
    ref_bf16 = _reference_forward_bf16(x, params)
    assert jnp.allclose(out, ref_bf16, atol=1e-3, rtol=1e-3), \
        float(jnp.max(jnp.abs(out - ref_bf16)))

    # Sanity check against the full-f32 reference (bf16 operand rounding only).
    ref_f32 = _reference_forward_f32(x, params)
    assert jnp.allclose(out, ref_f32, atol=6e-2, rtol=6e-2), \
        float(jnp.max(jnp.abs(out - ref_f32)))

    print("KERNEL_OK")
</pallas_src>

<mosaic_0001>
module attributes {stable_mosaic.version = 11 : i64} {
  func.func @_generator_kernel(%arg0: i32, %arg1: memref<8x128xbf16, #tpu.memory_space<vmem>>, %arg2: memref<128x256xbf16, #tpu.memory_space<vmem>>, %arg3: memref<1x256xf32, #tpu.memory_space<vmem>>, %arg4: memref<256x512xbf16, #tpu.memory_space<vmem>>, %arg5: memref<1x512xf32, #tpu.memory_space<vmem>>, %arg6: memref<512x1024xbf16, #tpu.memory_space<vmem>>, %arg7: memref<1x1024xf32, #tpu.memory_space<vmem>>, %arg8: memref<1024x896xbf16, #tpu.memory_space<vmem>>, %arg9: memref<1x896xf32, #tpu.memory_space<vmem>>, %arg10: memref<8x896xf32, #tpu.memory_space<vmem>>) attributes {dimension_semantics = [#tpu.dimension_semantics<parallel>], iteration_bounds = array<i64: 1>, scalar_prefetch = 0 : i64, scratch_operands = 0 : i64, tpu.core_type = #tpu.core_type<tc>, window_params = [{transform_indices = @transform_0, window_bounds = array<i64: 8, 128>}, {pipeline_mode = #tpu.pipeline_mode<synchronous>, transform_indices = @transform_1, window_bounds = array<i64: 128, 256>}, {pipeline_mode = #tpu.pipeline_mode<synchronous>, transform_indices = @transform_2, window_bounds = array<i64: 1, 256>}, {pipeline_mode = #tpu.pipeline_mode<synchronous>, transform_indices = @transform_3, window_bounds = array<i64: 256, 512>}, {pipeline_mode = #tpu.pipeline_mode<synchronous>, transform_indices = @transform_4, window_bounds = array<i64: 1, 512>}, {pipeline_mode = #tpu.pipeline_mode<synchronous>, transform_indices = @transform_5, window_bounds = array<i64: 512, 1024>}, {pipeline_mode = #tpu.pipeline_mode<synchronous>, transform_indices = @transform_6, window_bounds = array<i64: 1, 1024>}, {pipeline_mode = #tpu.pipeline_mode<synchronous>, transform_indices = @transform_7, window_bounds = array<i64: 1024, 896>}, {pipeline_mode = #tpu.pipeline_mode<synchronous>, transform_indices = @transform_8, window_bounds = array<i64: 1, 896>}, {transform_indices = @transform_9, window_bounds = array<i64: 8, 896>}]} {
    %c0 = arith.constant 0 : index
    %c0_0 = arith.constant 0 : index
    %0 = vector.load %arg1[%c0, %c0_0] : memref<8x128xbf16, #tpu.memory_space<vmem>>, vector<8x128xbf16>
    %c0_1 = arith.constant 0 : index
    %c0_2 = arith.constant 0 : index
    %1 = vector.load %arg2[%c0_1, %c0_2] : memref<128x256xbf16, #tpu.memory_space<vmem>>, vector<128x256xbf16>
    %cst = arith.constant dense<0.000000e+00> : vector<8x256xf32>
    %2 = tpu.matmul %0, %1, %cst {dimension_numbers = #tpu.dot_dimension_numbers<[1], [0], [0], [1], [0, 0, 1, 1], [], []>} : vector<8x128xbf16>, vector<128x256xbf16>, vector<8x256xf32> -> vector<8x256xf32>
    %c0_3 = arith.constant 0 : index
    %c0_4 = arith.constant 0 : index
    %3 = vector.load %arg3[%c0_3, %c0_4] : memref<1x256xf32, #tpu.memory_space<vmem>>, vector<1x256xf32>
    %4 = vector.broadcast %3 : vector<1x256xf32> to vector<8x256xf32>
    %5 = arith.addf %2, %4 : vector<8x256xf32>
    %cst_5 = arith.constant 0.000000e+00 : f32
    %6 = vector.broadcast %cst_5 : f32 to vector<8x256xf32>
    %7 = arith.maximumf %5, %6 : vector<8x256xf32>
    %8 = arith.truncf %7 : vector<8x256xf32> to vector<8x256xbf16>
    %c0_6 = arith.constant 0 : index
    %c0_7 = arith.constant 0 : index
    %9 = vector.load %arg4[%c0_6, %c0_7] : memref<256x512xbf16, #tpu.memory_space<vmem>>, vector<256x512xbf16>
    %cst_8 = arith.constant dense<0.000000e+00> : vector<8x512xf32>
    %10 = tpu.matmul %8, %9, %cst_8 {dimension_numbers = #tpu.dot_dimension_numbers<[1], [0], [0], [1], [0, 0, 1, 1], [], []>} : vector<8x256xbf16>, vector<256x512xbf16>, vector<8x512xf32> -> vector<8x512xf32>
    %c0_9 = arith.constant 0 : index
    %c0_10 = arith.constant 0 : index
    %11 = vector.load %arg5[%c0_9, %c0_10] : memref<1x512xf32, #tpu.memory_space<vmem>>, vector<1x512xf32>
    %12 = vector.broadcast %11 : vector<1x512xf32> to vector<8x512xf32>
    %13 = arith.addf %10, %12 : vector<8x512xf32>
    %cst_11 = arith.constant 0.000000e+00 : f32
    %14 = vector.broadcast %cst_11 : f32 to vector<8x512xf32>
    %15 = arith.maximumf %13, %14 : vector<8x512xf32>
    %16 = arith.truncf %15 : vector<8x512xf32> to vector<8x512xbf16>
    %c0_12 = arith.constant 0 : index
    %c0_13 = arith.constant 0 : index
    %17 = vector.load %arg6[%c0_12, %c0_13] : memref<512x1024xbf16, #tpu.memory_space<vmem>>, vector<512x1024xbf16>
    %cst_14 = arith.constant dense<0.000000e+00> : vector<8x1024xf32>
    %18 = tpu.matmul %16, %17, %cst_14 {dimension_numbers = #tpu.dot_dimension_numbers<[1], [0], [0], [1], [0, 0, 1, 1], [], []>} : vector<8x512xbf16>, vector<512x1024xbf16>, vector<8x1024xf32> -> vector<8x1024xf32>
    %c0_15 = arith.constant 0 : index
    %c0_16 = arith.constant 0 : index
    %19 = vector.load %arg7[%c0_15, %c0_16] : memref<1x1024xf32, #tpu.memory_space<vmem>>, vector<1x1024xf32>
    %20 = vector.broadcast %19 : vector<1x1024xf32> to vector<8x1024xf32>
    %21 = arith.addf %18, %20 : vector<8x1024xf32>
    %cst_17 = arith.constant 0.000000e+00 : f32
    %22 = vector.broadcast %cst_17 : f32 to vector<8x1024xf32>
    %23 = arith.maximumf %21, %22 : vector<8x1024xf32>
    %24 = arith.truncf %23 : vector<8x1024xf32> to vector<8x1024xbf16>
    %c0_18 = arith.constant 0 : index
    %c0_19 = arith.constant 0 : index
    %25 = vector.load %arg8[%c0_18, %c0_19] : memref<1024x896xbf16, #tpu.memory_space<vmem>>, vector<1024x896xbf16>
    %cst_20 = arith.constant dense<0.000000e+00> : vector<8x896xf32>
    %26 = tpu.matmul %24, %25, %cst_20 {dimension_numbers = #tpu.dot_dimension_numbers<[1], [0], [0], [1], [0, 0, 1, 1], [], []>} : vector<8x1024xbf16>, vector<1024x896xbf16>, vector<8x896xf32> -> vector<8x896xf32>
    %c0_21 = arith.constant 0 : index
    %c0_22 = arith.constant 0 : index
    %27 = vector.load %arg9[%c0_21, %c0_22] : memref<1x896xf32, #tpu.memory_space<vmem>>, vector<1x896xf32>
    %28 = vector.broadcast %27 : vector<1x896xf32> to vector<8x896xf32>
    %29 = arith.addf %26, %28 : vector<8x896xf32>
    %30 = math.tanh %29 : vector<8x896xf32>
    %c0_23 = arith.constant 0 : index
    %c0_24 = arith.constant 0 : index
    %31 = vector.load %arg10[%c0_23, %c0_24] : memref<8x896xf32, #tpu.memory_space<vmem>>, vector<8x896xf32>
    tpu.vector_store %arg10[%c0_23, %c0_24], %30 {strides = array<i32>} : memref<8x896xf32, #tpu.memory_space<vmem>>, vector<8x896xf32>,
    return
  }
  func.func @transform_0(%arg0: i32) -> (i32, i32) {
    %c0_i32 = arith.constant 0 : i32
    %c0_i32_0 = arith.constant 0 : i32
    return %arg0, %c0_i32 : i32, i32
  }
  func.func @transform_1(%arg0: i32) -> (i32, i32) {
    %c0_i32 = arith.constant 0 : i32
    %c0_i32_0 = arith.constant 0 : i32
    %c0_i32_1 = arith.constant 0 : i32
    return %c0_i32, %c0_i32_0 : i32, i32
  }
  func.func @transform_2(%arg0: i32) -> (i32, i32) {
    %c0_i32 = arith.constant 0 : i32
    %c0_i32_0 = arith.constant 0 : i32
    %c0_i32_1 = arith.constant 0 : i32
    return %c0_i32, %c0_i32_0 : i32, i32
  }
  func.func @transform_3(%arg0: i32) -> (i32, i32) {
    %c0_i32 = arith.constant 0 : i32
    %c0_i32_0 = arith.constant 0 : i32
    %c0_i32_1 = arith.constant 0 : i32
    return %c0_i32, %c0_i32_0 : i32, i32
  }
  func.func @transform_4(%arg0: i32) -> (i32, i32) {
    %c0_i32 = arith.constant 0 : i32
    %c0_i32_0 = arith.constant 0 : i32
    %c0_i32_1 = arith.constant 0 : i32
    return %c0_i32, %c0_i32_0 : i32, i32
  }
  func.func @transform_5(%arg0: i32) -> (i32, i32) {
    %c0_i32 = arith.constant 0 : i32
    %c0_i32_0 = arith.constant 0 : i32
    %c0_i32_1 = arith.constant 0 : i32
    return %c0_i32, %c0_i32_0 : i32, i32
  }
  func.func @transform_6(%arg0: i32) -> (i32, i32) {
    %c0_i32 = arith.constant 0 : i32
    %c0_i32_0 = arith.constant 0 : i32
    %c0_i32_1 = arith.constant 0 : i32
    return %c0_i32, %c0_i32_0 : i32, i32
  }
  func.func @transform_7(%arg0: i32) -> (i32, i32) {
    %c0_i32 = arith.constant 0 : i32
    %c0_i32_0 = arith.constant 0 : i32
    %c0_i32_1 = arith.constant 0 : i32
    return %c0_i32, %c0_i32_0 : i32, i32
  }
  func.func @transform_8(%arg0: i32) -> (i32, i32) {
    %c0_i32 = arith.constant 0 : i32
    %c0_i32_0 = arith.constant 0 : i32
    %c0_i32_1 = arith.constant 0 : i32
    return %c0_i32, %c0_i32_0 : i32, i32
  }
  func.func @transform_9(%arg0: i32) -> (i32, i32) {
    %c0_i32 = arith.constant 0 : i32
    %c0_i32_0 = arith.constant 0 : i32
    return %arg0, %c0_i32 : i32, i32
  }
}

</mosaic_0001>

<llo_original>
// kernel: tpu_custom_call.1
$region0: #{tpu_custom_call.1}
  #allocation0 [shape = 'u32[]', space=smem, size = 0x4, offset = 0x4, fixed_abs, tag = 'smem constant byte address 0x4 - core index']
  #allocation1 [shape = 'u32[72,128]{1,0:T(1,128)}', space=vmem, size = 0x9000, scoped, tag = 'internal scratch']
  %s0 = inlined_call_operand.hbm [shape: bf16[8,128], index: 0, kind: input, shape index: {}]
  %s1 = inlined_call_operand.hbm [shape: bf16[128,256], index: 1, kind: input, shape index: {}]
  %s2 = inlined_call_operand.hbm [shape: f32[1,256], index: 2, kind: input, shape index: {}]
  %s3 = inlined_call_operand.hbm [shape: bf16[256,512], index: 3, kind: input, shape index: {}]
  %s4 = inlined_call_operand.hbm [shape: f32[1,512], index: 4, kind: input, shape index: {}]
  %s5 = inlined_call_operand.hbm [shape: bf16[512,1024], index: 5, kind: input, shape index: {}]
  %s6 = inlined_call_operand.hbm [shape: f32[1,1024], index: 6, kind: input, shape index: {}]
  %s7 = inlined_call_operand.hbm [shape: bf16[1024,896], index: 7, kind: input, shape index: {}]
  %s8 = inlined_call_operand.hbm [shape: f32[1,896], index: 8, kind: input, shape index: {}]
  %s9 = inlined_call_operand.hbm [shape: f32[8,896], index: 9, kind: output, shape index: {}]
  %s10 = sld [smem:[#allocation0]]
  $region82: #{tpu_custom_call.1} parent=0
    _
  %s12 = ssub.s32 1, %s10
  %s13 = scalar_select 0, %s12, %s10
  $region1: #{tpu_custom_call.1} parent=0
    #allocation2 [shape = 'u8[2048]{0}', space=vmem, size = 0x800, scoped, tag = 'input window, operand 0, single buffered']
    #allocation3 [shape = 's32[1]{0}', space=sflag, size = 0x4, scoped, tag = 'scoped memory for tpu_custom_call.1']
    #allocation4 [shape = 's32[1]{0}', space=sflag, size = 0x4, scoped, tag = 'scoped memory for tpu_custom_call.1']
    #allocation5 [shape = 'u8[65536]{0}', space=vmem, size = 0x10000, scoped, tag = 'input window, operand 1, single buffered']
    #allocation6 [shape = 's32[1]{0}', space=sflag, size = 0x4, scoped, tag = 'scoped memory for tpu_custom_call.1']
    #allocation7 [shape = 'u8[1024]{0}', space=vmem, size = 0x400, scoped, tag = 'input window, operand 2, single buffered']
    #allocation8 [shape = 'u8[262144]{0}', space=vmem, size = 0x40000, scoped, tag = 'input window, operand 3, single buffered']
    #allocation9 [shape = 's32[1]{0}', space=sflag, size = 0x4, scoped, tag = 'scoped memory for tpu_custom_call.1']
    #allocation10 [shape = 'u8[2048]{0}', space=vmem, size = 0x800, scoped, tag = 'input window, operand 4, single buffered']
    #allocation11 [shape = 'u8[1048576]{0}', space=vmem, size = 0x100000, scoped, tag = 'input window, operand 5, single buffered']
    #allocation12 [shape = 's32[1]{0}', space=sflag, size = 0x4, scoped, tag = 'scoped memory for tpu_custom_call.1']
    #allocation13 [shape = 'u8[4096]{0}', space=vmem, size = 0x1000, scoped, tag = 'input window, operand 6, single buffered']
    #allocation14 [shape = 'u8[1835008]{0}', space=vmem, size = 0x1c0000, scoped, tag = 'input window, operand 7, single buffered']
    #allocation15 [shape = 's32[1]{0}', space=sflag, size = 0x4, scoped, tag = 'scoped memory for tpu_custom_call.1']
    #allocation16 [shape = 'u8[3584]{0}', space=vmem, size = 0x1000, scoped, tag = 'input window, operand 8, single buffered']
    #allocation17 [shape = 'u8[28672]{0}', space=vmem, size = 0x7000, scoped, tag = 'output window, operand 0, single buffered']
    %14 = vsyncpa [#allocation3], 0
    %15 = vsyncpa [#allocation6], 0
    %16 = vsyncpa [#allocation9], 0
    %17 = vsyncpa [#allocation12], 0
    %18 = vsyncpa [#allocation15], 0
    %19 = vsyncpa [#allocation4], 0
    // Predicated region
    $region2: #{tpu_custom_call.1} parent=1 // pred_check
      _
    $region3: #{tpu_custom_call.1} parent=1 // pred_check_branch
      %21 = sbr.rel (0) target = $region5
    $region4: #{tpu_custom_call.1} parent=1 // pred_region
      %23 = vsyncadd [#allocation3], 0
      %s25 = sshll.u32 %s0, 4
      %s26 = int_to_ptr.hbm [resolvable:$true] %s25
      %s27 = sshll.u32 [#allocation2], 4
      %s28 = int_to_ptr.vmem [resolvable:$true] %s27
      %30 = dma.hbm_to_vmem [thread:$0]  %s26, 64, %s28, [#allocation3]
    $region5: #{tpu_custom_call.1} parent=1 // pred_fallthru
      _
    // Predicated region
    $region6: #{tpu_custom_call.1} parent=1 // pred_check
      _
    $region7: #{tpu_custom_call.1} parent=1 // pred_check_branch
      %32 = sbr.rel (0) target = $region9
    $region8: #{tpu_custom_call.1} parent=1 // pred_region
      %34 = vsyncadd [#allocation6], 0
      %s35 = sshll.u32 %s1, 4
      %s36 = int_to_ptr.hbm [resolvable:$true] %s35
      %s37 = sshll.u32 [#allocation5], 4
      %s38 = int_to_ptr.vmem [resolvable:$true] %s37
      %43 = dma.hbm_to_vmem [thread:$0]  %s36, 2048, %s38, [#allocation6], 128, 128, 8
    $region9: #{tpu_custom_call.1} parent=1 // pred_fallthru
      _
    // Predicated region
    $region10: #{tpu_custom_call.1} parent=1 // pred_check
      _
    $region11: #{tpu_custom_call.1} parent=1 // pred_check_branch
      %45 = sbr.rel (0) target = $region13
    $region12: #{tpu_custom_call.1} parent=1 // pred_region
      %47 = vsyncadd [#allocation6], 0
      %s49 = sshll.u32 %s2, 4
      %s50 = int_to_ptr.hbm [resolvable:$true] %s49
      %s51 = sshll.u32 [#allocation7], 4
      %s52 = int_to_ptr.vmem [resolvable:$true] %s51
      %54 = dma.hbm_to_vmem [thread:$0]  %s50, 32, %s52, [#allocation6]
    $region13: #{tpu_custom_call.1} parent=1 // pred_fallthru
      _
    // Predicated region
    $region14: #{tpu_custom_call.1} parent=1 // pred_check
      _
    $region15: #{tpu_custom_call.1} parent=1 // pred_check_branch
      %56 = sbr.rel (0) target = $region17
    $region16: #{tpu_custom_call.1} parent=1 // pred_region
      %58 = vsyncadd [#allocation9], 0
      %s59 = sshll.u32 %s3, 4
      %s60 = int_to_ptr.hbm [resolvable:$true] %s59
      %s61 = sshll.u32 [#allocation8], 4
      %s62 = int_to_ptr.vmem [resolvable:$true] %s61
      %67 = dma.hbm_to_vmem [thread:$0]  %s60, 8192, %s62, [#allocation9], 256, 256, 16
    $region17: #{tpu_custom_call.1} parent=1 // pred_fallthru
      _
    // Predicated region
    $region18: #{tpu_custom_call.1} parent=1 // pred_check
      _
    $region19: #{tpu_custom_call.1} parent=1 // pred_check_branch
      %69 = sbr.rel (0) target = $region21
    $region20: #{tpu_custom_call.1} parent=1 // pred_region
      %71 = vsyncadd [#allocation9], 0
      %s73 = sshll.u32 %s4, 4
      %s74 = int_to_ptr.hbm [resolvable:$true] %s73
      %s75 = sshll.u32 [#allocation10], 4
      %s76 = int_to_ptr.vmem [resolvable:$true] %s75
      %78 = dma.hbm_to_vmem [thread:$0]  %s74, 64, %s76, [#allocation9]
    $region21: #{tpu_custom_call.1} parent=1 // pred_fallthru
      _
    // Predicated region
    $region22: #{tpu_custom_call.1} parent=1 // pred_check
      _
    $region23: #{tpu_custom_call.1} parent=1 // pred_check_branch
      %80 = sbr.rel (0) target = $region25
    $region24: #{tpu_custom_call.1} parent=1 // pred_region
      %82 = vsyncadd [#allocation12], 0
      %s83 = sshll.u32 %s5, 4
      %s84 = int_to_ptr.hbm [resolvable:$true] %s83
      %s85 = sshll.u32 [#allocation11], 4
      %s86 = int_to_ptr.vmem [resolvable:$true] %s85
      %91 = dma.hbm_to_vmem [thread:$0]  %s84, 32768, %s86, [#allocation12], 512, 512, 32
    $region25: #{tpu_custom_call.1} parent=1 // pred_fallthru
      _
    // Predicated region
    $region26: #{tpu_custom_call.1} parent=1 // pred_check
      _
    $region27: #{tpu_custom_call.1} parent=1 // pred_check_branch
      %93 = sbr.rel (0) target = $region29
    $region28: #{tpu_custom_call.1} parent=1 // pred_region
      %95 = vsyncadd [#allocation12], 0
      %s97 = sshll.u32 %s6, 4
      %s98 = int_to_ptr.hbm [resolvable:$true] %s97
      %s99 = sshll.u32 [#allocation13], 4
      %s100 = int_to_ptr.vmem [resolvable:$true] %s99
      %102 = dma.hbm_to_vmem [thread:$0]  %s98, 128, %s100, [#allocation12]
    $region29: #{tpu_custom_call.1} parent=1 // pred_fallthru
      _
    // Predicated region
    $region30: #{tpu_custom_call.1} parent=1 // pred_check
      _
    $region31: #{tpu_custom_call.1} parent=1 // pred_check_branch
      %104 = sbr.rel (0) target = $region33
    $region32: #{tpu_custom_call.1} parent=1 // pred_region
      %106 = vsyncadd [#allocation15], 0
      %s107 = sshll.u32 %s7, 4
      %s108 = int_to_ptr.hbm [resolvable:$true] %s107
      %s109 = sshll.u32 [#allocation14], 4
      %s110 = int_to_ptr.vmem [resolvable:$true] %s109
      %115 = dma.hbm_to_vmem [thread:$0]  %s108, 57344, %s110, [#allocation15], 448, 448, 28
    $region33: #{tpu_custom_call.1} parent=1 // pred_fallthru
      _
    // Predicated region
    $region34: #{tpu_custom_call.1} parent=1 // pred_check
      _
    $region35: #{tpu_custom_call.1} parent=1 // pred_check_branch
      %117 = sbr.rel (0) target = $region37
    $region36: #{tpu_custom_call.1} parent=1 // pred_region
      %119 = vsyncadd [#allocation15], 0
      %s121 = sshll.u32 %s8, 4
      %s122 = int_to_ptr.hbm [resolvable:$true] %s121
      %s123 = sshll.u32 [#allocation16], 4
      %s124 = int_to_ptr.vmem [resolvable:$true] %s123
      %126 = dma.hbm_to_vmem [thread:$0]  %s122, 112, %s124, [#allocation15]
    $region37: #{tpu_custom_call.1} parent=1 // pred_fallthru
      _
    // Predicated region
    $region38: #{tpu_custom_call.1} parent=1 // pred_check
      _
    $region39: #{tpu_custom_call.1} parent=1 // pred_check_branch
      %128 = sbr.rel (0) target = $region41
    $region40: #{tpu_custom_call.1} parent=1 // pred_region
      %130 = dma.done [#allocation3], 64
    $region41: #{tpu_custom_call.1} parent=1 // pred_fallthru
      _
    // Predicated region
    $region42: #{tpu_custom_call.1} parent=1 // pred_check
      _
    $region43: #{tpu_custom_call.1} parent=1 // pred_check_branch
      %132 = sbr.rel (0) target = $region45
    $region44: #{tpu_custom_call.1} parent=1 // pred_region
      %134 = dma.done [#allocation6], 2048
    $region45: #{tpu_custom_call.1} parent=1 // pred_fallthru
      _
    // Predicated region
    $region46: #{tpu_custom_call.1} parent=1 // pred_check
      _
    $region47: #{tpu_custom_call.1} parent=1 // pred_check_branch
      %136 = sbr.rel (0) target = $region49
    $region48: #{tpu_custom_call.1} parent=1 // pred_region
      %138 = dma.done [#allocation6], 32
    $region49: #{tpu_custom_call.1} parent=1 // pred_fallthru
      _
    // Predicated region
    $region50: #{tpu_custom_call.1} parent=1 // pred_check
      _
    $region51: #{tpu_custom_call.1} parent=1 // pred_check_branch
      %140 = sbr.rel (0) target = $region53
    $region52: #{tpu_custom_call.1} parent=1 // pred_region
      %142 = dma.done [#allocation9], 8192
    $region53: #{tpu_custom_call.1} parent=1 // pred_fallthru
      _
    // Predicated region
    $region54: #{tpu_custom_call.1} parent=1 // pred_check
      _
    $region55: #{tpu_custom_call.1} parent=1 // pred_check_branch
      %144 = sbr.rel (0) target = $region57
    $region56: #{tpu_custom_call.1} parent=1 // pred_region
      %146 = dma.done [#allocation9], 64
    $region57: #{tpu_custom_call.1} parent=1 // pred_fallthru
      _
    // Predicated region
    $region58: #{tpu_custom_call.1} parent=1 // pred_check
      _
    $region59: #{tpu_custom_call.1} parent=1 // pred_check_branch
      %148 = sbr.rel (0) target = $region61
    $region60: #{tpu_custom_call.1} parent=1 // pred_region
      %150 = dma.done [#allocation12], 32768
    $region61: #{tpu_custom_call.1} parent=1 // pred_fallthru
      _
    // Predicated region
    $region62: #{tpu_custom_call.1} parent=1 // pred_check
      _
    $region63: #{tpu_custom_call.1} parent=1 // pred_check_branch
      %152 = sbr.rel (0) target = $region65
    $region64: #{tpu_custom_call.1} parent=1 // pred_region
      %154 = dma.done [#allocation12], 128
    $region65: #{tpu_custom_call.1} parent=1 // pred_fallthru
      _
    // Predicated region
    $region66: #{tpu_custom_call.1} parent=1 // pred_check
      _
    $region67: #{tpu_custom_call.1} parent=1 // pred_check_branch
      %156 = sbr.rel (0) target = $region69
    $region68: #{tpu_custom_call.1} parent=1 // pred_region
      %158 = dma.done [#allocation15], 57344
    $region69: #{tpu_custom_call.1} parent=1 // pred_fallthru
      _
    // Predicated region
    $region70: #{tpu_custom_call.1} parent=1 // pred_check
      _
    $region71: #{tpu_custom_call.1} parent=1 // pred_check_branch
      %160 = sbr.rel (0) target = $region73
    $region72: #{tpu_custom_call.1} parent=1 // pred_region
      %162 = dma.done [#allocation15], 112
    $region73: #{tpu_custom_call.1} parent=1 // pred_fallthru
      _
    %v163 = vld [vmem:[#allocation2] sm:$0xf]
    %v164 = vld [vmem:[#allocation5] sm:$0xff]
    %v165 = vld [vmem:[#allocation5 + $0x8] sm:$0xff]
    %v166 = vld [vmem:[#allocation5 + $0x10] sm:$0xff]
    %v167 = vld [vmem:[#allocation5 + $0x18] sm:$0xff]
    %v168 = vld [vmem:[#allocation5 + $0x20] sm:$0xff]
    %v169 = vld [vmem:[#allocation5 + $0x28] sm:$0xff]
    %v170 = vld [vmem:[#allocation5 + $0x30] sm:$0xff]
    %v171 = vld [vmem:[#allocation5 + $0x38] sm:$0xff]
    %v172 = vld [vmem:[#allocation5 + $0x40] sm:$0xff]
    %v173 = vld [vmem:[#allocation5 + $0x48] sm:$0xff]
    %v174 = vld [vmem:[#allocation5 + $0x50] sm:$0xff]
    %v175 = vld [vmem:[#allocation5 + $0x58] sm:$0xff]
    %v176 = vld [vmem:[#allocation5 + $0x60] sm:$0xff]
    %v177 = vld [vmem:[#allocation5 + $0x68] sm:$0xff]
    %v178 = vld [vmem:[#allocation5 + $0x70] sm:$0xff]
    %v179 = vld [vmem:[#allocation5 + $0x78] sm:$0xff]
    %v180 = vld [vmem:[#allocation7] sm:$0x3]
    %v182 = vperm.slane %v180, 0
    %v183 = vperm.slane %v180, 1
    %v202 = vunpack.c.l.b16 %v164
    %v203 = vunpack.c.h.b16 %v164
    %v204 = vunpack.c.l.b16 %v165
    %v205 = vunpack.c.h.b16 %v165
    %v206 = vunpack.c.l.b16 %v166
    %v207 = vunpack.c.h.b16 %v166
    %v208 = vunpack.c.l.b16 %v167
    %v209 = vunpack.c.h.b16 %v167
    %v210 = vunpack.c.l.b16 %v168
    %v211 = vunpack.c.h.b16 %v168
    %v212 = vunpack.c.l.b16 %v169
    %v213 = vunpack.c.h.b16 %v169
    %v214 = vunpack.c.l.b16 %v170
    %v215 = vunpack.c.h.b16 %v170
    %v216 = vunpack.c.l.b16 %v171
    %v217 = vunpack.c.h.b16 %v171
    %v218 = vunpack.c.l.b16 %v172
    %v219 = vunpack.c.h.b16 %v172
    %v220 = vunpack.c.l.b16 %v173
    %v221 = vunpack.c.h.b16 %v173
    %v222 = vunpack.c.l.b16 %v174
    %v223 = vunpack.c.h.b16 %v174
    %v224 = vunpack.c.l.b16 %v175
    %v225 = vunpack.c.h.b16 %v175
    %v226 = vunpack.c.l.b16 %v176
    %v227 = vunpack.c.h.b16 %v176
    %v228 = vunpack.c.l.b16 %v177
    %v229 = vunpack.c.h.b16 %v177
    %v230 = vunpack.c.l.b16 %v178
    %v231 = vunpack.c.h.b16 %v178
    %v232 = vunpack.c.l.b16 %v179
    %v233 = vunpack.c.h.b16 %v179
    %v234 = vpack.c.b16 %v204, %v202
    %v235 = vpack.c.b16 %v205, %v203
    %v236 = vpack.c.b16 %v208, %v206
    %v237 = vpack.c.b16 %v209, %v207
    %v238 = vpack.c.b16 %v212, %v210
    %v239 = vpack.c.b16 %v213, %v211
    %v240 = vpack.c.b16 %v216, %v214
    %v241 = vpack.c.b16 %v217, %v215
    %v242 = vpack.c.b16 %v220, %v218
    %v243 = vpack.c.b16 %v221, %v219
    %v244 = vpack.c.b16 %v224, %v222
    %v245 = vpack.c.b16 %v225, %v223
    %v246 = vpack.c.b16 %v228, %v226
    %v247 = vpack.c.b16 %v229, %v227
    %v248 = vpack.c.b16 %v232, %v230
    %v249 = vpack.c.b16 %v233, %v231
    %266 = vmatpush.bf16.msra.mxu0 %v248
    %267 = vmatpush.bf16.msra.mxu0 %v246
    %268 = vmatpush.bf16.msra.mxu0 %v244
    %269 = vmatpush.bf16.msra.mxu0 %v242
    %270 = vmatpush.bf16.msra.mxu0 %v240
    %271 = vmatpush.bf16.msra.mxu0 %v238
    %272 = vmatpush.bf16.msra.mxu0 %v236
    %273 = vmatpush.bf16.msra.mxu0 %v234
    %274 = vmatmul.bf16.gmra.mxu0 %v163
    %v275 = vpop.f32.mrf.mxu0
    %v276 = vadd.f32 %v182, %v275
    %v277 = vpop.f32.mrf.mxu0
    %278 = vdwg.mxu0
    %279 = vmatpush.bf16.msra.mxu0 %v249
    %280 = vmatpush.bf16.msra.mxu0 %v247
    %281 = vmatpush.bf16.msra.mxu0 %v245
    %282 = vmatpush.bf16.msra.mxu0 %v243
    %283 = vmatpush.bf16.msra.mxu0 %v241
    %284 = vmatpush.bf16.msra.mxu0 %v239
    %285 = vmatpush.bf16.msra.mxu0 %v237
    %286 = vmatpush.bf16.msra.mxu0 %v235
    %287 = vmatmul.bf16.gmra.mxu0 %v163
    %v288 = vpop.f32.mrf.mxu0
    %v289 = vadd.f32 %v183, %v288
    %v290 = vpop.f32.mrf.mxu0
    %291 = vdwg.mxu0
    %v292 = vmax.f32 %v276, 0.0
    %v293 = vmax.f32 %v289, 0.0
    %v294 = vpack.c.bf16 %v292, %v292
    %v295 = vpack.c.bf16 %v293, %v293
    %v296 = vld [vmem:[#allocation8] sm:$0xff]
    %v297 = vld [vmem:[#allocation8 + $0x8] sm:$0xff]
    %v298 = vld [vmem:[#allocation8 + $0x10] sm:$0xff]
    %v299 = vld [vmem:[#allocation8 + $0x18] sm:$0xff]
    %v300 = vld [vmem:[#allocation8 + $0x20] sm:$0xff]
    %v301 = vld [vmem:[#allocation8 + $0x28] sm:$0xff]
    %v302 = vld [vmem:[#allocation8 + $0x30] sm:$0xff]
    %v303 = vld [vmem:[#allocation8 + $0x38] sm:$0xff]
    %v304 = vld [vmem:[#allocation8 + $0x40] sm:$0xff]
    %v305 = vld [vmem:[#allocation8 + $0x48] sm:$0xff]
    %v306 = vld [vmem:[#allocation8 + $0x50] sm:$0xff]
    %v307 = vld [vmem:[#allocation8 + $0x58] sm:$0xff]
    %v308 = vld [vmem:[#allocation8 + $0x60] sm:$0xff]
    %v309 = vld [vmem:[#allocation8 + $0x68] sm:$0xff]
    %v310 = vld [vmem:[#allocation8 + $0x70] sm:$0xff]
    %v311 = vld [vmem:[#allocation8 + $0x78] sm:$0xff]
    %v312 = vld [vmem:[#allocation8 + $0x80] sm:$0xff]
    %v313 = vld [vmem:[#allocation8 + $0x88] sm:$0xff]
    %v314 = vld [vmem:[#allocation8 + $0x90] sm:$0xff]
    %v315 = vld [vmem:[#allocation8 + $0x98] sm:$0xff]
    %v316 = vld [vmem:[#allocation8 + $0xa0] sm:$0xff]
    %v317 = vld [vmem:[#allocation8 + $0xa8] sm:$0xff]
    %v318 = vld [vmem:[#allocation8 + $0xb0] sm:$0xff]
    %v319 = vld [vmem:[#allocation8 + $0xb8] sm:$0xff]
    %v320 = vld [vmem:[#allocation8 + $0xc0] sm:$0xff]
    %v321 = vld [vmem:[#allocation8 + $0xc8] sm:$0xff]
    %v322 = vld [vmem:[#allocation8 + $0xd0] sm:$0xff]
    %v323 = vld [vmem:[#allocation8 + $0xd8] sm:$0xff]
    %v324 = vld [vmem:[#allocation8 + $0xe0] sm:$0xff]
    %v325 = vld [vmem:[#allocation8 + $0xe8] sm:$0xff]
    %v326 = vld [vmem:[#allocation8 + $0xf0] sm:$0xff]
    %v327 = vld [vmem:[#allocation8 + $0xf8] sm:$0xff]
    %v328 = vld [vmem:[#allocation8 + $0x100] sm:$0xff]
    %v329 = vld [vmem:[#allocation8 + $0x108] sm:$0xff]
    %v330 = vld [vmem:[#allocation8 + $0x110] sm:$0xff]
    %v331 = vld [vmem:[#allocation8 + $0x118] sm:$0xff]
    %v332 = vld [vmem:[#allocation8 + $0x120] sm:$0xff]
    %v333 = vld [vmem:[#allocation8 + $0x128] sm:$0xff]
    %v334 = vld [vmem:[#allocation8 + $0x130] sm:$0xff]
    %v335 = vld [vmem:[#allocation8 + $0x138] sm:$0xff]
    %v336 = vld [vmem:[#allocation8 + $0x140] sm:$0xff]
    %v337 = vld [vmem:[#allocation8 + $0x148] sm:$0xff]
    %v338 = vld [vmem:[#allocation8 + $0x150] sm:$0xff]
    %v339 = vld [vmem:[#allocation8 + $0x158] sm:$0xff]
    %v340 = vld [vmem:[#allocation8 + $0x160] sm:$0xff]
    %v341 = vld [vmem:[#allocation8 + $0x168] sm:$0xff]
    %v342 = vld [vmem:[#allocation8 + $0x170] sm:$0xff]
    %v343 = vld [vmem:[#allocation8 + $0x178] sm:$0xff]
    %v344 = vld [vmem:[#allocation8 + $0x180] sm:$0xff]
    %v345 = vld [vmem:[#allocation8 + $0x188] sm:$0xff]
    %v346 = vld [vmem:[#allocation8 + $0x190] sm:$0xff]
    %v347 = vld [vmem:[#allocation8 + $0x198] sm:$0xff]
    %v348 = vld [vmem:[#allocation8 + $0x1a0] sm:$0xff]
    %v349 = vld [vmem:[#allocation8 + $0x1a8] sm:$0xff]
    %v350 = vld [vmem:[#allocation8 + $0x1b0] sm:$0xff]
    %v351 = vld [vmem:[#allocation8 + $0x1b8] sm:$0xff]
    %v352 = vld [vmem:[#allocation8 + $0x1c0] sm:$0xff]
    %v353 = vld [vmem:[#allocation8 + $0x1c8] sm:$0xff]
    %v354 = vld [vmem:[#allocation8 + $0x1d0] sm:$0xff]
    %v355 = vld [vmem:[#allocation8 + $0x1d8] sm:$0xff]
    %v356 = vld [vmem:[#allocation8 + $0x1e0] sm:$0xff]
    %v357 = vld [vmem:[#allocation8 + $0x1e8] sm:$0xff]
    %v358 = vld [vmem:[#allocation8 + $0x1f0] sm:$0xff]
    %v359 = vld [vmem:[#allocation8 + $0x1f8] sm:$0xff]
    %v360 = vld [vmem:[#allocation10] sm:$0xf]
    %v362 = vperm.slane %v360, 0
    %v363 = vperm.slane %v360, 1
    %v364 = vperm.slane %v360, 2
    %v365 = vperm.slane %v360, 3
    %v434 = vunpack.c.l.b16 %v296
    %v435 = vunpack.c.h.b16 %v296
    %v436 = vunpack.c.l.b16 %v297
    %v437 = vunpack.c.h.b16 %v297
    %v438 = vunpack.c.l.b16 %v298
    %v439 = vunpack.c.h.b16 %v298
    %v440 = vunpack.c.l.b16 %v299
    %v441 = vunpack.c.h.b16 %v299
    %v442 = vunpack.c.l.b16 %v300
    %v443 = vunpack.c.h.b16 %v300
    %v444 = vunpack.c.l.b16 %v301
    %v445 = vunpack.c.h.b16 %v301
    %v446 = vunpack.c.l.b16 %v302
    %v447 = vunpack.c.h.b16 %v302
    %v448 = vunpack.c.l.b16 %v303
    %v449 = vunpack.c.h.b16 %v303
    %v450 = vunpack.c.l.b16 %v304
    %v451 = vunpack.c.h.b16 %v304
    %v452 = vunpack.c.l.b16 %v305
    %v453 = vunpack.c.h.b16 %v305
    %v454 = vunpack.c.l.b16 %v306
    %v455 = vunpack.c.h.b16 %v306
    %v456 = vunpack.c.l.b16 %v307
    %v457 = vunpack.c.h.b16 %v307
    %v458 = vunpack.c.l.b16 %v308
    %v459 = vunpack.c.h.b16 %v308
    %v460 = vunpack.c.l.b16 %v309
    %v461 = vunpack.c.h.b16 %v309
    %v462 = vunpack.c.l.b16 %v310
    %v463 = vunpack.c.h.b16 %v310
    %v464 = vunpack.c.l.b16 %v311
    %v465 = vunpack.c.h.b16 %v311
    %v466 = vunpack.c.l.b16 %v312
    %v467 = vunpack.c.h.b16 %v312
    %v468 = vunpack.c.l.b16 %v313
    %v469 = vunpack.c.h.b16 %v313
    %v470 = vunpack.c.l.b16 %v314
    %v471 = vunpack.c.h.b16 %v314
    %v472 = vunpack.c.l.b16 %v315
    %v473 = vunpack.c.h.b16 %v315
    %v474 = vunpack.c.l.b16 %v316
    %v475 = vunpack.c.h.b16 %v316
    %v476 = vunpack.c.l.b16 %v317
    %v477 = vunpack.c.h.b16 %v317
    %v478 = vunpack.c.l.b16 %v318
    %v479 = vunpack.c.h.b16 %v318
    %v480 = vunpack.c.l.b16 %v319
    %v481 = vunpack.c.h.b16 %v319
    %v482 = vunpack.c.l.b16 %v320
    %v483 = vunpack.c.h.b16 %v320
    %v484 = vunpack.c.l.b16 %v321
    %v485 = vunpack.c.h.b16 %v321
    %v486 = vunpack.c.l.b16 %v322
    %v487 = vunpack.c.h.b16 %v322
    %v488 = vunpack.c.l.b16 %v323
    %v489 = vunpack.c.h.b16 %v323
    %v490 = vunpack.c.l.b16 %v324
    %v491 = vunpack.c.h.b16 %v324
    %v492 = vunpack.c.l.b16 %v325
    %v493 = vunpack.c.h.b16 %v325
    %v494 = vunpack.c.l.b16 %v326
    %v495 = vunpack.c.h.b16 %v326
    %v496 = vunpack.c.l.b16 %v327
    %v497 = vunpack.c.h.b16 %v327
    %v498 = vunpack.c.l.b16 %v328
    %v499 = vunpack.c.h.b16 %v328
    %v500 = vunpack.c.l.b16 %v329
    %v501 = vunpack.c.h.b16 %v329
    %v502 = vunpack.c.l.b16 %v330
    %v503 = vunpack.c.h.b16 %v330
    %v504 = vunpack.c.l.b16 %v331
    %v505 = vunpack.c.h.b16 %v331
    %v506 = vunpack.c.l.b16 %v332
    %v507 = vunpack.c.h.b16 %v332
    %v508 = vunpack.c.l.b16 %v333
    %v509 = vunpack.c.h.b16 %v333
    %v510 = vunpack.c.l.b16 %v334
    %v511 = vunpack.c.h.b16 %v334
    %v512 = vunpack.c.l.b16 %v335
    %v513 = vunpack.c.h.b16 %v335
    %v514 = vunpack.c.l.b16 %v336
    %v515 = vunpack.c.h.b16 %v336
    %v516 = vunpack.c.l.b16 %v337
    %v517 = vunpack.c.h.b16 %v337
    %v518 = vunpack.c.l.b16 %v338
    %v519 = vunpack.c.h.b16 %v338
    %v520 = vunpack.c.l.b16 %v339
    %v521 = vunpack.c.h.b16 %v339
    %v522 = vunpack.c.l.b16 %v340
    %v523 = vunpack.c.h.b16 %v340
    %v524 = vunpack.c.l.b16 %v341
    %v525 = vunpack.c.h.b16 %v341
    %v526 = vunpack.c.l.b16 %v342
    %v527 = vunpack.c.h.b16 %v342
    %v528 = vunpack.c.l.b16 %v343
    %v529 = vunpack.c.h.b16 %v343
    %v530 = vunpack.c.l.b16 %v344
    %v531 = vunpack.c.h.b16 %v344
    %v532 = vunpack.c.l.b16 %v345
    %v533 = vunpack.c.h.b16 %v345
    %v534 = vunpack.c.l.b16 %v346
    %v535 = vunpack.c.h.b16 %v346
    %v536 = vunpack.c.l.b16 %v347
    %v537 = vunpack.c.h.b16 %v347
    %v538 = vunpack.c.l.b16 %v348
    %v539 = vunpack.c.h.b16 %v348
    %v540 = vunpack.c.l.b16 %v349
    %v541 = vunpack.c.h.b16 %v349
    %v542 = vunpack.c.l.b16 %v350
    %v543 = vunpack.c.h.b16 %v350
    %v544 = vunpack.c.l.b16 %v351
    %v545 = vunpack.c.h.b16 %v351
    %v546 = vunpack.c.l.b16 %v352
    %v547 = vunpack.c.h.b16 %v352
    %v548 = vunpack.c.l.b16 %v353
    %v549 = vunpack.c.h.b16 %v353
    %v550 = vunpack.c.l.b16 %v354
    %v551 = vunpack.c.h.b16 %v354
    %v552 = vunpack.c.l.b16 %v355
    %v553 = vunpack.c.h.b16 %v355
    %v554 = vunpack.c.l.b16 %v356
    %v555 = vunpack.c.h.b16 %v356
    %v556 = vunpack.c.l.b16 %v357
    %v557 = vunpack.c.h.b16 %v357
    %v558 = vunpack.c.l.b16 %v358
    %v559 = vunpack.c.h.b16 %v358
    %v560 = vunpack.c.l.b16 %v359
    %v561 = vunpack.c.h.b16 %v359
    %v562 = vpack.c.b16 %v438, %v434
    %v563 = vpack.c.b16 %v439, %v435
    %v564 = vpack.c.b16 %v440, %v436
    %v565 = vpack.c.b16 %v441, %v437
    %v566 = vpack.c.b16 %v446, %v442
    %v567 = vpack.c.b16 %v447, %v443
    %v568 = vpack.c.b16 %v448, %v444
    %v569 = vpack.c.b16 %v449, %v445
    %v570 = vpack.c.b16 %v454, %v450
    %v571 = vpack.c.b16 %v455, %v451
    %v572 = vpack.c.b16 %v456, %v452
    %v573 = vpack.c.b16 %v457, %v453
    %v574 = vpack.c.b16 %v462, %v458
    %v575 = vpack.c.b16 %v463, %v459
    %v576 = vpack.c.b16 %v464, %v460
    %v577 = vpack.c.b16 %v465, %v461
    %v578 = vpack.c.b16 %v470, %v466
    %v579 = vpack.c.b16 %v471, %v467
    %v580 = vpack.c.b16 %v472, %v468
    %v581 = vpack.c.b16 %v473, %v469
    %v582 = vpack.c.b16 %v478, %v474
    %v583 = vpack.c.b16 %v479, %v475
    %v584 = vpack.c.b16 %v480, %v476
    %v585 = vpack.c.b16 %v481, %v477
    %v586 = vpack.c.b16 %v486, %v482
    %v587 = vpack.c.b16 %v487, %v483
    %v588 = vpack.c.b16 %v488, %v484
    %v589 = vpack.c.b16 %v489, %v485
    %v590 = vpack.c.b16 %v494, %v490
    %v591 = vpack.c.b16 %v495, %v491
    %v592 = vpack.c.b16 %v496, %v492
    %v593 = vpack.c.b16 %v497, %v493
    %v594 = vpack.c.b16 %v502, %v498
    %v595 = vpack.c.b16 %v503, %v499
    %v596 = vpack.c.b16 %v504, %v500
    %v597 = vpack.c.b16 %v505, %v501
    %v598 = vpack.c.b16 %v510, %v506
    %v599 = vpack.c.b16 %v511, %v507
    %v600 = vpack.c.b16 %v512, %v508
    %v601 = vpack.c.b16 %v513, %v509
    %v602 = vpack.c.b16 %v518, %v514
    %v603 = vpack.c.b16 %v519, %v515
    %v604 = vpack.c.b16 %v520, %v516
    %v605 = vpack.c.b16 %v521, %v517
    %v606 = vpack.c.b16 %v526, %v522
    %v607 = vpack.c.b16 %v527, %v523
    %v608 = vpack.c.b16 %v528, %v524
    %v609 = vpack.c.b16 %v529, %v525
    %v610 = vpack.c.b16 %v534, %v530
    %v611 = vpack.c.b16 %v535, %v531
    %v612 = vpack.c.b16 %v536, %v532
    %v613 = vpack.c.b16 %v537, %v533
    %v614 = vpack.c.b16 %v542, %v538
    %v615 = vpack.c.b16 %v543, %v539
    %v616 = vpack.c.b16 %v544, %v540
    %v617 = vpack.c.b16 %v545, %v541
    %v618 = vpack.c.b16 %v550, %v546
    %v619 = vpack.c.b16 %v551, %v547
    %v620 = vpack.c.b16 %v552, %v548
    %v621 = vpack.c.b16 %v553, %v549
    %v622 = vpack.c.b16 %v558, %v554
    %v623 = vpack.c.b16 %v559, %v555
    %v624 = vpack.c.b16 %v560, %v556
    %v625 = vpack.c.b16 %v561, %v557
    %690 = vmatpush.bf16.msra.mxu0 %v590
    %691 = vmatpush.bf16.msra.mxu0 %v586
    %692 = vmatpush.bf16.msra.mxu0 %v582
    %693 = vmatpush.bf16.msra.mxu0 %v578
    %694 = vmatpush.bf16.msra.mxu0 %v574
    %695 = vmatpush.bf16.msra.mxu0 %v570
    %696 = vmatpush.bf16.msra.mxu0 %v566
    %697 = vmatpush.bf16.msra.mxu0 %v562
    %698 = vmatmul.bf16.gmra.mxu0 %v294
    %v699 = vpop.f32.mrf.mxu0
    %v700 = vadd.f32 %v362, %v699
    %v701 = vpop.f32.mrf.mxu0
    %702 = vdwg.mxu0
    %703 = vmatpush.bf16.msra.mxu0 %v622
    %704 = vmatpush.bf16.msra.mxu0 %v618
    %705 = vmatpush.bf16.msra.mxu0 %v614
    %706 = vmatpush.bf16.msra.mxu0 %v610
    %707 = vmatpush.bf16.msra.mxu0 %v606
    %708 = vmatpush.bf16.msra.mxu0 %v602
    %709 = vmatpush.bf16.msra.mxu0 %v598
    %710 = vmatpush.bf16.msra.mxu0 %v594
    %711 = vmatmul.bf16.gmra.mxu0 %v295
    %v712 = vpop.f32.mrf.mxu0
    %v713 = vadd.f32 %v700, %v712
    %v714 = vpop.f32.mrf.mxu0
    %715 = vdwg.mxu0
    %716 = vmatpush.bf16.msra.mxu0 %v591
    %717 = vmatpush.bf16.msra.mxu0 %v587
    %718 = vmatpush.bf16.msra.mxu0 %v583
    %719 = vmatpush.bf16.msra.mxu0 %v579
    %720 = vmatpush.bf16.msra.mxu0 %v575
    %721 = vmatpush.bf16.msra.mxu0 %v571
    %722 = vmatpush.bf16.msra.mxu0 %v567
    %723 = vmatpush.bf16.msra.mxu0 %v563
    %724 = vmatmul.bf16.gmra.mxu0 %v294
    %v725 = vpop.f32.mrf.mxu0
    %v726 = vadd.f32 %v363, %v725
    %v727 = vpop.f32.mrf.mxu0
    %728 = vdwg.mxu0
    %729 = vmatpush.bf16.msra.mxu0 %v623
    %730 = vmatpush.bf16.msra.mxu0 %v619
    %731 = vmatpush.bf16.msra.mxu0 %v615
    %732 = vmatpush.bf16.msra.mxu0 %v611
    %733 = vmatpush.bf16.msra.mxu0 %v607
    %734 = vmatpush.bf16.msra.mxu0 %v603
    %735 = vmatpush.bf16.msra.mxu0 %v599
    %736 = vmatpush.bf16.msra.mxu0 %v595
    %737 = vmatmul.bf16.gmra.mxu0 %v295
    %v738 = vpop.f32.mrf.mxu0
    %v739 = vadd.f32 %v726, %v738
    %v740 = vpop.f32.mrf.mxu0
    %741 = vdwg.mxu0
    %742 = vmatpush.bf16.msra.mxu0 %v592
    %743 = vmatpush.bf16.msra.mxu0 %v588
    %744 = vmatpush.bf16.msra.mxu0 %v584
    %745 = vmatpush.bf16.msra.mxu0 %v580
    %746 = vmatpush.bf16.msra.mxu0 %v576
    %747 = vmatpush.bf16.msra.mxu0 %v572
    %748 = vmatpush.bf16.msra.mxu0 %v568
    %749 = vmatpush.bf16.msra.mxu0 %v564
    %750 = vmatmul.bf16.gmra.mxu0 %v294
    %v751 = vpop.f32.mrf.mxu0
    %v752 = vadd.f32 %v364, %v751
    %v753 = vpop.f32.mrf.mxu0
    %754 = vdwg.mxu0
    %755 = vmatpush.bf16.msra.mxu0 %v624
    %756 = vmatpush.bf16.msra.mxu0 %v620
    %757 = vmatpush.bf16.msra.mxu0 %v616
    %758 = vmatpush.bf16.msra.mxu0 %v612
    %759 = vmatpush.bf16.msra.mxu0 %v608
    %760 = vmatpush.bf16.msra.mxu0 %v604
    %761 = vmatpush.bf16.msra.mxu0 %v600
    %762 = vmatpush.bf16.msra.mxu0 %v596
    %763 = vmatmul.bf16.gmra.mxu0 %v295
    %v764 = vpop.f32.mrf.mxu0
    %v765 = vadd.f32 %v752, %v764
    %v766 = vpop.f32.mrf.mxu0
    %767 = vdwg.mxu0
    %768 = vmatpush.bf16.msra.mxu0 %v593
    %769 = vmatpush.bf16.msra.mxu0 %v589
    %770 = vmatpush.bf16.msra.mxu0 %v585
    %771 = vmatpush.bf16.msra.mxu0 %v581
    %772 = vmatpush.bf16.msra.mxu0 %v577
    %773 = vmatpush.bf16.msra.mxu0 %v573
    %774 = vmatpush.bf16.msra.mxu0 %v569
    %775 = vmatpush.bf16.msra.mxu0 %v565
    %776 = vmatmul.bf16.gmra.mxu0 %v294
    %v777 = vpop.f32.mrf.mxu0
    %v778 = vadd.f32 %v365, %v777
    %v779 = vpop.f32.mrf.mxu0
    %780 = vdwg.mxu0
    %781 = vmatpush.bf16.msra.mxu0 %v625
    %782 = vmatpush.bf16.msra.mxu0 %v621
    %783 = vmatpush.bf16.msra.mxu0 %v617
    %784 = vmatpush.bf16.msra.mxu0 %v613
    %785 = vmatpush.bf16.msra.mxu0 %v609
    %786 = vmatpush.bf16.msra.mxu0 %v605
    %787 = vmatpush.bf16.msra.mxu0 %v601
    %788 = vmatpush.bf16.msra.mxu0 %v597
    %789 = vmatmul.bf16.gmra.mxu0 %v295
    %v790 = vpop.f32.mrf.mxu0
    %v791 = vadd.f32 %v778, %v790
    %v792 = vpop.f32.mrf.mxu0
    %793 = vdwg.mxu0
    %v794 = vmax.f32 %v713, 0.0
    %v795 = vmax.f32 %v739, 0.0
    %v796 = vmax.f32 %v765, 0.0
    %v797 = vmax.f32 %v791, 0.0
    %v798 = vpack.c.bf16 %v794, %v794
    %v799 = vpack.c.bf16 %v795, %v795
    %v800 = vpack.c.bf16 %v796, %v796
    %v801 = vpack.c.bf16 %v797, %v797
    %v802 = vld [vmem:[#allocation11] sm:$0xff]
    %v803 = vld [vmem:[#allocation11 + $0x8] sm:$0xff]
    %v804 = vld [vmem:[#allocation11 + $0x10] sm:$0xff]
    %v805 = vld [vmem:[#allocation11 + $0x18] sm:$0xff]
    %v806 = vld [vmem:[#allocation11 + $0x20] sm:$0xff]
    %v807 = vld [vmem:[#allocation11 + $0x28] sm:$0xff]
    %v808 = vld [vmem:[#allocation11 + $0x30] sm:$0xff]
    %v809 = vld [vmem:[#allocation11 + $0x38] sm:$0xff]
    %v810 = vld [vmem:[#allocation11 + $0x40] sm:$0xff]
    %v811 = vld [vmem:[#allocation11 + $0x48] sm:$0xff]
    %v812 = vld [vmem:[#allocation11 + $0x50] sm:$0xff]
    %v813 = vld [vmem:[#allocation11 + $0x58] sm:$0xff]
    %v814 = vld [vmem:[#allocation11 + $0x60] sm:$0xff]
    %v815 = vld [vmem:[#allocation11 + $0x68] sm:$0xff]
    %v816 = vld [vmem:[#allocation11 + $0x70] sm:$0xff]
    %v817 = vld [vmem:[#allocation11 + $0x78] sm:$0xff]
    %v818 = vld [vmem:[#allocation11 + $0x80] sm:$0xff]
    %v819 = vld [vmem:[#allocation11 + $0x88] sm:$0xff]
    %v820 = vld [vmem:[#allocation11 + $0x90] sm:$0xff]
    %v821 = vld [vmem:[#allocation11 + $0x98] sm:$0xff]
    %v822 = vld [vmem:[#allocation11 + $0xa0] sm:$0xff]
    %v823 = vld [vmem:[#allocation11 + $0xa8] sm:$0xff]
    %v824 = vld [vmem:[#allocation11 + $0xb0] sm:$0xff]
    %v825 = vld [vmem:[#allocation11 + $0xb8] sm:$0xff]
    %v826 = vld [vmem:[#allocation11 + $0xc0] sm:$0xff]
    %v827 = vld [vmem:[#allocation11 + $0xc8] sm:$0xff]
    %v828 = vld [vmem:[#allocation11 + $0xd0] sm:$0xff]
    %v829 = vld [vmem:[#allocation11 + $0xd8] sm:$0xff]
    %v830 = vld [vmem:[#allocation11 + $0xe0] sm:$0xff]
    %v831 = vld [vmem:[#allocation11 + $0xe8] sm:$0xff]
    %v832 = vld [vmem:[#allocation11 + $0xf0] sm:$0xff]
    %v833 = vld [vmem:[#allocation11 + $0xf8] sm:$0xff]
    %v834 = vld [vmem:[#allocation11 + $0x100] sm:$0xff]
    %v835 = vld [vmem:[#allocation11 + $0x108] sm:$0xff]
    %v836 = vld [vmem:[#allocation11 + $0x110] sm:$0xff]
    %v837 = vld [vmem:[#allocation11 + $0x118] sm:$0xff]
    %v838 = vld [vmem:[#allocation11 + $0x120] sm:$0xff]
    %v839 = vld [vmem:[#allocation11 + $0x128] sm:$0xff]
    %v840 = vld [vmem:[#allocation11 + $0x130] sm:$0xff]
    %v841 = vld [vmem:[#allocation11 + $0x138] sm:$0xff]
    %v842 = vld [vmem:[#allocation11 + $0x140] sm:$0xff]
    %v843 = vld [vmem:[#allocation11 + $0x148] sm:$0xff]
    %v844 = vld [vmem:[#allocation11 + $0x150] sm:$0xff]
    %v845 = vld [vmem:[#allocation11 + $0x158] sm:$0xff]
    %v846 = vld [vmem:[#allocation11 + $0x160] sm:$0xff]
    %v847 = vld [vmem:[#allocation11 + $0x168] sm:$0xff]
    %v848 = vld [vmem:[#allocation11 + $0x170] sm:$0xff]
    %v849 = vld [vmem:[#allocation11 + $0x178] sm:$0xff]
    %v850 = vld [vmem:[#allocation11 + $0x180] sm:$0xff]
    %v851 = vld [vmem:[#allocation11 + $0x188] sm:$0xff]
    %v852 = vld [vmem:[#allocation11 + $0x190] sm:$0xff]
    %v853 = vld [vmem:[#allocation11 + $0x198] sm:$0xff]
    %v854 = vld [vmem:[#allocation11 + $0x1a0] sm:$0xff]
    %v855 = vld [vmem:[#allocation11 + $0x1a8] sm:$0xff]
    %v856 = vld [vmem:[#allocation11 + $0x1b0] sm:$0xff]
    %v857 = vld [vmem:[#allocation11 + $0x1b8] sm:$0xff]
    %v858 = vld [vmem:[#allocation11 + $0x1c0] sm:$0xff]
    %v859 = vld [vmem:[#allocation11 + $0x1c8] sm:$0xff]
    %v860 = vld [vmem:[#allocation11 + $0x1d0] sm:$0xff]
    %v861 = vld [vmem:[#allocation11 + $0x1d8] sm:$0xff]
    %v862 = vld [vmem:[#allocation11 + $0x1e0] sm:$0xff]
    %v863 = vld [vmem:[#allocation11 + $0x1e8] sm:$0xff]
    %v864 = vld [vmem:[#allocation11 + $0x1f0] sm:$0xff]
    %v865 = vld [vmem:[#allocation11 + $0x1f8] sm:$0xff]
    %v866 = vld [vmem:[#allocation11 + $0x200] sm:$0xff]
    %v867 = vld [vmem:[#allocation11 + $0x208] sm:$0xff]
    %v868 = vld [vmem:[#allocation11 + $0x210] sm:$0xff]
    %v869 = vld [vmem:[#allocation11 + $0x218] sm:$0xff]
    %v870 = vld [vmem:[#allocation11 + $0x220] sm:$0xff]
    %v871 = vld [vmem:[#allocation11 + $0x228] sm:$0xff]
    %v872 = vld [vmem:[#allocation11 + $0x230] sm:$0xff]
    %v873 = vld [vmem:[#allocation11 + $0x238] sm:$0xff]
    %v874 = vld [vmem:[#allocation11 + $0x240] sm:$0xff]
    %v875 = vld [vmem:[#allocation11 + $0x248] sm:$0xff]
    %v876 = vld [vmem:[#allocation11 + $0x250] sm:$0xff]
    %v877 = vld [vmem:[#allocation11 + $0x258] sm:$0xff]
    %v878 = vld [vmem:[#allocation11 + $0x260] sm:$0xff]
    %v879 = vld [vmem:[#allocation11 + $0x268] sm:$0xff]
    %v880 = vld [vmem:[#allocation11 + $0x270] sm:$0xff]
    %v881 = vld [vmem:[#allocation11 + $0x278] sm:$0xff]
    %v882 = vld [vmem:[#allocation11 + $0x280] sm:$0xff]
    %v883 = vld [vmem:[#allocation11 + $0x288] sm:$0xff]
    %v884 = vld [vmem:[#allocation11 + $0x290] sm:$0xff]
    %v885 = vld [vmem:[#allocation11 + $0x298] sm:$0xff]
    %v886 = vld [vmem:[#allocation11 + $0x2a0] sm:$0xff]
    %v887 = vld [vmem:[#allocation11 + $0x2a8] sm:$0xff]
    %v888 = vld [vmem:[#allocation11 + $0x2b0] sm:$0xff]
    %v889 = vld [vmem:[#allocation11 + $0x2b8] sm:$0xff]
    %v890 = vld [vmem:[#allocation11 + $0x2c0] sm:$0xff]
    %v891 = vld [vmem:[#allocation11 + $0x2c8] sm:$0xff]
    %v892 = vld [vmem:[#allocation11 + $0x2d0] sm:$0xff]
    %v893 = vld [vmem:[#allocation11 + $0x2d8] sm:$0xff]
    %v894 = vld [vmem:[#allocation11 + $0x2e0] sm:$0xff]
    %v895 = vld [vmem:[#allocation11 + $0x2e8] sm:$0xff]
    %v896 = vld [vmem:[#allocation11 + $0x2f0] sm:$0xff]
    %v897 = vld [vmem:[#allocation11 + $0x2f8] sm:$0xff]
    %v898 = vld [vmem:[#allocation11 + $0x300] sm:$0xff]
    %v899 = vld [vmem:[#allocation11 + $0x308] sm:$0xff]
    %v900 = vld [vmem:[#allocation11 + $0x310] sm:$0xff]
    %v901 = vld [vmem:[#allocation11 + $0x318] sm:$0xff]
    %v902 = vld [vmem:[#allocation11 + $0x320] sm:$0xff]
    %v903 = vld [vmem:[#allocation11 + $0x328] sm:$0xff]
    %v904 = vld [vmem:[#allocation11 + $0x330] sm:$0xff]
    %v905 = vld [vmem:[#allocation11 + $0x338] sm:$0xff]
    %v906 = vld [vmem:[#allocation11 + $0x340] sm:$0xff]
    %v907 = vld [vmem:[#allocation11 + $0x348] sm:$0xff]
    %v908 = vld [vmem:[#allocation11 + $0x350] sm:$0xff]
    %v909 = vld [vmem:[#allocation11 + $0x358] sm:$0xff]
    %v910 = vld [vmem:[#allocation11 + $0x360] sm:$0xff]
    %v911 = vld [vmem:[#allocation11 + $0x368] sm:$0xff]
    %v912 = vld [vmem:[#allocation11 + $0x370] sm:$0xff]
    %v913 = vld [vmem:[#allocation11 + $0x378] sm:$0xff]
    %v914 = vld [vmem:[#allocation11 + $0x380] sm:$0xff]
    %v915 = vld [vmem:[#allocation11 + $0x388] sm:$0xff]
    %v916 = vld [vmem:[#allocation11 + $0x390] sm:$0xff]
    %v917 = vld [vmem:[#allocation11 + $0x398] sm:$0xff]
    %v918 = vld [vmem:[#allocation11 + $0x3a0] sm:$0xff]
    %v919 = vld [vmem:[#allocation11 + $0x3a8] sm:$0xff]
    %v920 = vld [vmem:[#allocation11 + $0x3b0] sm:$0xff]
    %v921 = vld [vmem:[#allocation11 + $0x3b8] sm:$0xff]
    %v922 = vld [vmem:[#allocation11 + $0x3c0] sm:$0xff]
    %v923 = vld [vmem:[#allocation11 + $0x3c8] sm:$0xff]
    %v924 = vld [vmem:[#allocation11 + $0x3d0] sm:$0xff]
    %v925 = vld [vmem:[#allocation11 + $0x3d8] sm:$0xff]
    %v926 = vld [vmem:[#allocation11 + $0x3e0] sm:$0xff]
    %v927 = vld [vmem:[#allocation11 + $0x3e8] sm:$0xff]
    %v928 = vld [vmem:[#allocation11 + $0x3f0] sm:$0xff]
    %v929 = vld [vmem:[#allocation11 + $0x3f8] sm:$0xff]
    %v930 = vld [vmem:[#allocation11 + $0x400] sm:$0xff]
    %v931 = vld [vmem:[#allocation11 + $0x408] sm:$0xff]
    %v932 = vld [vmem:[#allocation11 + $0x410] sm:$0xff]
    %v933 = vld [vmem:[#allocation11 + $0x418] sm:$0xff]
    %v934 = vld [vmem:[#allocation11 + $0x420] sm:$0xff]
    %v935 = vld [vmem:[#allocation11 + $0x428] sm:$0xff]
    %v936 = vld [vmem:[#allocation11 + $0x430] sm:$0xff]
    %v937 = vld [vmem:[#allocation11 + $0x438] sm:$0xff]
    %v938 = vld [vmem:[#allocation11 + $0x440] sm:$0xff]
    %v939 = vld [vmem:[#allocation11 + $0x448] sm:$0xff]
    %v940 = vld [vmem:[#allocation11 + $0x450] sm:$0xff]
    %v941 = vld [vmem:[#allocation11 + $0x458] sm:$0xff]
    %v942 = vld [vmem:[#allocation11 + $0x460] sm:$0xff]
    %v943 = vld [vmem:[#allocation11 + $0x468] sm:$0xff]
    %v944 = vld [vmem:[#allocation11 + $0x470] sm:$0xff]
    %v945 = vld [vmem:[#allocation11 + $0x478] sm:$0xff]
    %v946 = vld [vmem:[#allocation11 + $0x480] sm:$0xff]
    %v947 = vld [vmem:[#allocation11 + $0x488] sm:$0xff]
    %v948 = vld [vmem:[#allocation11 + $0x490] sm:$0xff]
    %v949 = vld [vmem:[#allocation11 + $0x498] sm:$0xff]
    %v950 = vld [vmem:[#allocation11 + $0x4a0] sm:$0xff]
    %v951 = vld [vmem:[#allocation11 + $0x4a8] sm:$0xff]
    %v952 = vld [vmem:[#allocation11 + $0x4b0] sm:$0xff]
    %v953 = vld [vmem:[#allocation11 + $0x4b8] sm:$0xff]
    %v954 = vld [vmem:[#allocation11 + $0x4c0] sm:$0xff]
    %v955 = vld [vmem:[#allocation11 + $0x4c8] sm:$0xff]
    %v956 = vld [vmem:[#allocation11 + $0x4d0] sm:$0xff]
    %v957 = vld [vmem:[#allocation11 + $0x4d8] sm:$0xff]
    %v958 = vld [vmem:[#allocation11 + $0x4e0] sm:$0xff]
    %v959 = vld [vmem:[#allocation11 + $0x4e8] sm:$0xff]
    %v960 = vld [vmem:[#allocation11 + $0x4f0] sm:$0xff]
    %v961 = vld [vmem:[#allocation11 + $0x4f8] sm:$0xff]
    %v962 = vld [vmem:[#allocation11 + $0x500] sm:$0xff]
    %v963 = vld [vmem:[#allocation11 + $0x508] sm:$0xff]
    %v964 = vld [vmem:[#allocation11 + $0x510] sm:$0xff]
    %v965 = vld [vmem:[#allocation11 + $0x518] sm:$0xff]
    %v966 = vld [vmem:[#allocation11 + $0x520] sm:$0xff]
    %v967 = vld [vmem:[#allocation11 + $0x528] sm:$0xff]
    %v968 = vld [vmem:[#allocation11 + $0x530] sm:$0xff]
    %v969 = vld [vmem:[#allocation11 + $0x538] sm:$0xff]
    %v970 = vld [vmem:[#allocation11 + $0x540] sm:$0xff]
    %v971 = vld [vmem:[#allocation11 + $0x548] sm:$0xff]
    %v972 = vld [vmem:[#allocation11 + $0x550] sm:$0xff]
    %v973 = vld [vmem:[#allocation11 + $0x558] sm:$0xff]
    %v974 = vld [vmem:[#allocation11 + $0x560] sm:$0xff]
    %v975 = vld [vmem:[#allocation11 + $0x568] sm:$0xff]
    %v976 = vld [vmem:[#allocation11 + $0x570] sm:$0xff]
    %v977 = vld [vmem:[#allocation11 + $0x578] sm:$0xff]
    %v978 = vld [vmem:[#allocation11 + $0x580] sm:$0xff]
    %v979 = vld [vmem:[#allocation11 + $0x588] sm:$0xff]
    %v980 = vld [vmem:[#allocation11 + $0x590] sm:$0xff]
    %v981 = vld [vmem:[#allocation11 + $0x598] sm:$0xff]
    %v982 = vld [vmem:[#allocation11 + $0x5a0] sm:$0xff]
    %v983 = vld [vmem:[#allocation11 + $0x5a8] sm:$0xff]
    %v984 = vld [vmem:[#allocation11 + $0x5b0] sm:$0xff]
    %v985 = vld [vmem:[#allocation11 + $0x5b8] sm:$0xff]
    %v986 = vld [vmem:[#allocation11 + $0x5c0] sm:$0xff]
    %v987 = vld [vmem:[#allocation11 + $0x5c8] sm:$0xff]
    %v988 = vld [vmem:[#allocation11 + $0x5d0] sm:$0xff]
    %v989 = vld [vmem:[#allocation11 + $0x5d8] sm:$0xff]
    %v990 = vld [vmem:[#allocation11 + $0x5e0] sm:$0xff]
    %v991 = vld [vmem:[#allocation11 + $0x5e8] sm:$0xff]
    %v992 = vld [vmem:[#allocation11 + $0x5f0] sm:$0xff]
    %v993 = vld [vmem:[#allocation11 + $0x5f8] sm:$0xff]
    %v994 = vld [vmem:[#allocation11 + $0x600] sm:$0xff]
    %v995 = vld [vmem:[#allocation11 + $0x608] sm:$0xff]
    %v996 = vld [vmem:[#allocation11 + $0x610] sm:$0xff]
    %v997 = vld [vmem:[#allocation11 + $0x618] sm:$0xff]
    %v998 = vld [vmem:[#allocation11 + $0x620] sm:$0xff]
    %v999 = vld [vmem:[#allocation11 + $0x628] sm:$0xff]
    %v1000 = vld [vmem:[#allocation11 + $0x630] sm:$0xff]
    %v1001 = vld [vmem:[#allocation11 + $0x638] sm:$0xff]
    %v1002 = vld [vmem:[#allocation11 + $0x640] sm:$0xff]
    %v1003 = vld [vmem:[#allocation11 + $0x648] sm:$0xff]
    %v1004 = vld [vmem:[#allocation11 + $0x650] sm:$0xff]
    %v1005 = vld [vmem:[#allocation11 + $0x658] sm:$0xff]
    %v1006 = vld [vmem:[#allocation11 + $0x660] sm:$0xff]
    %v1007 = vld [vmem:[#allocation11 + $0x668] sm:$0xff]
    %v1008 = vld [vmem:[#allocation11 + $0x670] sm:$0xff]
    %v1009 = vld [vmem:[#allocation11 + $0x678] sm:$0xff]
    %v1010 = vld [vmem:[#allocation11 + $0x680] sm:$0xff]
    %v1011 = vld [vmem:[#allocation11 + $0x688] sm:$0xff]
    %v1012 = vld [vmem:[#allocation11 + $0x690] sm:$0xff]
    %v1013 = vld [vmem:[#allocation11 + $0x698] sm:$0xff]
    %v1014 = vld [vmem:[#allocation11 + $0x6a0] sm:$0xff]
    %v1015 = vld [vmem:[#allocation11 + $0x6a8] sm:$0xff]
    %v1016 = vld [vmem:[#allocation11 + $0x6b0] sm:$0xff]
    %v1017 = vld [vmem:[#allocation11 + $0x6b8] sm:$0xff]
    %v1018 = vld [vmem:[#allocation11 + $0x6c0] sm:$0xff]
    %v1019 = vld [vmem:[#allocation11 + $0x6c8] sm:$0xff]
    %v1020 = vld [vmem:[#allocation11 + $0x6d0] sm:$0xff]
    %v1021 = vld [vmem:[#allocation11 + $0x6d8] sm:$0xff]
    %v1022 = vld [vmem:[#allocation11 + $0x6e0] sm:$0xff]
    %v1023 = vld [vmem:[#allocation11 + $0x6e8] sm:$0xff]
    %v1024 = vld [vmem:[#allocation11 + $0x6f0] sm:$0xff]
    %v1025 = vld [vmem:[#allocation11 + $0x6f8] sm:$0xff]
    %v1026 = vld [vmem:[#allocation11 + $0x700] sm:$0xff]
    %v1027 = vld [vmem:[#allocation11 + $0x708] sm:$0xff]
    %v1028 = vld [vmem:[#allocation11 + $0x710] sm:$0xff]
    %v1029 = vld [vmem:[#allocation11 + $0x718] sm:$0xff]
    %v1030 = vld [vmem:[#allocation11 + $0x720] sm:$0xff]
    %v1031 = vld [vmem:[#allocation11 + $0x728] sm:$0xff]
    %v1032 = vld [vmem:[#allocation11 + $0x730] sm:$0xff]
    %v1033 = vld [vmem:[#allocation11 + $0x738] sm:$0xff]
    %v1034 = vld [vmem:[#allocation11 + $0x740] sm:$0xff]
    %v1035 = vld [vmem:[#allocation11 + $0x748] sm:$0xff]
    %v1036 = vld [vmem:[#allocation11 + $0x750] sm:$0xff]
    %v1037 = vld [vmem:[#allocation11 + $0x758] sm:$0xff]
    %v1038 = vld [vmem:[#allocation11 + $0x760] sm:$0xff]
    %v1039 = vld [vmem:[#allocation11 + $0x768] sm:$0xff]
    %v1040 = vld [vmem:[#allocation11 + $0x770] sm:$0xff]
    %v1041 = vld [vmem:[#allocation11 + $0x778] sm:$0xff]
    %v1042 = vld [vmem:[#allocation11 + $0x780] sm:$0xff]
    %v1043 = vld [vmem:[#allocation11 + $0x788] sm:$0xff]
    %v1044 = vld [vmem:[#allocation11 + $0x790] sm:$0xff]
    %v1045 = vld [vmem:[#allocation11 + $0x798] sm:$0xff]
    %v1046 = vld [vmem:[#allocation11 + $0x7a0] sm:$0xff]
    %v1047 = vld [vmem:[#allocation11 + $0x7a8] sm:$0xff]
    %v1048 = vld [vmem:[#allocation11 + $0x7b0] sm:$0xff]
    %v1049 = vld [vmem:[#allocation11 + $0x7b8] sm:$0xff]
    %v1050 = vld [vmem:[#allocation11 + $0x7c0] sm:$0xff]
    %v1051 = vld [vmem:[#allocation11 + $0x7c8] sm:$0xff]
    %v1052 = vld [vmem:[#allocation11 + $0x7d0] sm:$0xff]
    %v1053 = vld [vmem:[#allocation11 + $0x7d8] sm:$0xff]
    %v1054 = vld [vmem:[#allocation11 + $0x7e0] sm:$0xff]
    %v1055 = vld [vmem:[#allocation11 + $0x7e8] sm:$0xff]
    %v1056 = vld [vmem:[#allocation11 + $0x7f0] sm:$0xff]
    %v1057 = vld [vmem:[#allocation11 + $0x7f8] sm:$0xff]
    %v1058 = vld [vmem:[#allocation13] sm:$0xff]
    %v1060 = vperm.slane %v1058, 0
    %v1061 = vperm.slane %v1058, 1
    %v1062 = vperm.slane %v1058, 2
    %v1063 = vperm.slane %v1058, 3
    %v1064 = vperm.slane %v1058, 4
    %v1065 = vperm.slane %v1058, 5
    %v1066 = vperm.slane %v1058, 6
    %v1067 = vperm.slane %v1058, 7
    %v1332 = vunpack.c.l.b16 %v802
    %v1333 = vunpack.c.h.b16 %v802
    %v1334 = vunpack.c.l.b16 %v803
    %v1335 = vunpack.c.h.b16 %v803
    %v1336 = vunpack.c.l.b16 %v804
    %v1337 = vunpack.c.h.b16 %v804
    %v1338 = vunpack.c.l.b16 %v805
    %v1339 = vunpack.c.h.b16 %v805
    %v1340 = vunpack.c.l.b16 %v806
    %v1341 = vunpack.c.h.b16 %v806
    %v1342 = vunpack.c.l.b16 %v807
    %v1343 = vunpack.c.h.b16 %v807
    %v1344 = vunpack.c.l.b16 %v808
    %v1345 = vunpack.c.h.b16 %v808
    %v1346 = vunpack.c.l.b16 %v809
    %v1347 = vunpack.c.h.b16 %v809
    %v1348 = vunpack.c.l.b16 %v810
    %v1349 = vunpack.c.h.b16 %v810
    %v1350 = vunpack.c.l.b16 %v811
    %v1351 = vunpack.c.h.b16 %v811
    %v1352 = vunpack.c.l.b16 %v812
    %v1353 = vunpack.c.h.b16 %v812
    %v1354 = vunpack.c.l.b16 %v813
    %v1355 = vunpack.c.h.b16 %v813
    %v1356 = vunpack.c.l.b16 %v814
    %v1357 = vunpack.c.h.b16 %v814
    %v1358 = vunpack.c.l.b16 %v815
    %v1359 = vunpack.c.h.b16 %v815
    %v1360 = vunpack.c.l.b16 %v816
    %v1361 = vunpack.c.h.b16 %v816
    %v1362 = vunpack.c.l.b16 %v817
    %v1363 = vunpack.c.h.b16 %v817
    %v1364 = vunpack.c.l.b16 %v818
    %v1365 = vunpack.c.h.b16 %v818
    %v1366 = vunpack.c.l.b16 %v819
    %v1367 = vunpack.c.h.b16 %v819
    %v1368 = vunpack.c.l.b16 %v820
    %v1369 = vunpack.c.h.b16 %v820
    %v1370 = vunpack.c.l.b16 %v821
    %v1371 = vunpack.c.h.b16 %v821
    %v1372 = vunpack.c.l.b16 %v822
    %v1373 = vunpack.c.h.b16 %v822
    %v1374 = vunpack.c.l.b16 %v823
    %v1375 = vunpack.c.h.b16 %v823
    %v1376 = vunpack.c.l.b16 %v824
    %v1377 = vunpack.c.h.b16 %v824
    %v1378 = vunpack.c.l.b16 %v825
    %v1379 = vunpack.c.h.b16 %v825
    %v1380 = vunpack.c.l.b16 %v826
    %v1381 = vunpack.c.h.b16 %v826
    %v1382 = vunpack.c.l.b16 %v827
    %v1383 = vunpack.c.h.b16 %v827
    %v1384 = vunpack.c.l.b16 %v828
    %v1385 = vunpack.c.h.b16 %v828
    %v1386 = vunpack.c.l.b16 %v829
    %v1387 = vunpack.c.h.b16 %v829
    %v1388 = vunpack.c.l.b16 %v830
    %v1389 = vunpack.c.h.b16 %v830
    %v1390 = vunpack.c.l.b16 %v831
    %v1391 = vunpack.c.h.b16 %v831
    %v1392 = vunpack.c.l.b16 %v832
    %v1393 = vunpack.c.h.b16 %v832
    %v1394 = vunpack.c.l.b16 %v833
    %v1395 = vunpack.c.h.b16 %v833
    %v1396 = vunpack.c.l.b16 %v834
    %v1397 = vunpack.c.h.b16 %v834
    %v1398 = vunpack.c.l.b16 %v835
    %v1399 = vunpack.c.h.b16 %v835
    %v1400 = vunpack.c.l.b16 %v836
    %v1401 = vunpack.c.h.b16 %v836
    %v1402 = vunpack.c.l.b16 %v837
    %v1403 = vunpack.c.h.b16 %v837
    %v1404 = vunpack.c.l.b16 %v838
    %v1405 = vunpack.c.h.b16 %v838
    %v1406 = vunpack.c.l.b16 %v839
    %v1407 = vunpack.c.h.b16 %v839
    %v1408 = vunpack.c.l.b16 %v840
    %v1409 = vunpack.c.h.b16 %v840
    %v1410 = vunpack.c.l.b16 %v841
    %v1411 = vunpack.c.h.b16 %v841
    %v1412 = vunpack.c.l.b16 %v842
    %v1413 = vunpack.c.h.b16 %v842
    %v1414 = vunpack.c.l.b16 %v843
    %v1415 = vunpack.c.h.b16 %v843
    %v1416 = vunpack.c.l.b16 %v844
    %v1417 = vunpack.c.h.b16 %v844
    %v1418 = vunpack.c.l.b16 %v845
    %v1419 = vunpack.c.h.b16 %v845
    %v1420 = vunpack.c.l.b16 %v846
    %v1421 = vunpack.c.h.b16 %v846
    %v1422 = vunpack.c.l.b16 %v847
    %v1423 = vunpack.c.h.b16 %v847
    %v1424 = vunpack.c.l.b16 %v848
    %v1425 = vunpack.c.h.b16 %v848
    %v1426 = vunpack.c.l.b16 %v849
    %v1427 = vunpack.c.h.b16 %v849
    %v1428 = vunpack.c.l.b16 %v850
    %v1429 = vunpack.c.h.b16 %v850
    %v1430 = vunpack.c.l.b16 %v851
    %v1431 = vunpack.c.h.b16 %v851
    %v1432 = vunpack.c.l.b16 %v852
    %v1433 = vunpack.c.h.b16 %v852
    %v1434 = vunpack.c.l.b16 %v853
    %v1435 = vunpack.c.h.b16 %v853
    %v1436 = vunpack.c.l.b16 %v854
    %v1437 = vunpack.c.h.b16 %v854
    %v1438 = vunpack.c.l.b16 %v855
    %v1439 = vunpack.c.h.b16 %v855
    %v1440 = vunpack.c.l.b16 %v856
    %v1441 = vunpack.c.h.b16 %v856
    %v1442 = vunpack.c.l.b16 %v857
    %v1443 = vunpack.c.h.b16 %v857
    %v1444 = vunpack.c.l.b16 %v858
    %v1445 = vunpack.c.h.b16 %v858
    %v1446 = vunpack.c.l.b16 %v859
    %v1447 = vunpack.c.h.b16 %v859
    %v1448 = vunpack.c.l.b16 %v860
    %v1449 = vunpack.c.h.b16 %v860
    %v1450 = vunpack.c.l.b16 %v861
    %v1451 = vunpack.c.h.b16 %v861
    %v1452 = vunpack.c.l.b16 %v862
    %v1453 = vunpack.c.h.b16 %v862
    %v1454 = vunpack.c.l.b16 %v863
    %v1455 = vunpack.c.h.b16 %v863
    %v1456 = vunpack.c.l.b16 %v864
    %v1457 = vunpack.c.h.b16 %v864
    %v1458 = vunpack.c.l.b16 %v865
    %v1459 = vunpack.c.h.b16 %v865
    %v1460 = vunpack.c.l.b16 %v866
    %v1461 = vunpack.c.h.b16 %v866
    %v1462 = vunpack.c.l.b16 %v867
    %v1463 = vunpack.c.h.b16 %v867
    %v1464 = vunpack.c.l.b16 %v868
    %v1465 = vunpack.c.h.b16 %v868
    %v1466 = vunpack.c.l.b16 %v869
    %v1467 = vunpack.c.h.b16 %v869
    %v1468 = vunpack.c.l.b16 %v870
    %v1469 = vunpack.c.h.b16 %v870
    %v1470 = vunpack.c.l.b16 %v871
    %v1471 = vunpack.c.h.b16 %v871
    %v1472 = vunpack.c.l.b16 %v872
    %v1473 = vunpack.c.h.b16 %v872
    %v1474 = vunpack.c.l.b16 %v873
    %v1475 = vunpack.c.h.b16 %v873
    %v1476 = vunpack.c.l.b16 %v874
    %v1477 = vunpack.c.h.b16 %v874
    %v1478 = vunpack.c.l.b16 %v875
    %v1479 = vunpack.c.h.b16 %v875
    %v1480 = vunpack.c.l.b16 %v876
    %v1481 = vunpack.c.h.b16 %v876
    %v1482 = vunpack.c.l.b16 %v877
    %v1483 = vunpack.c.h.b16 %v877
    %v1484 = vunpack.c.l.b16 %v878
    %v1485 = vunpack.c.h.b16 %v878
    %v1486 = vunpack.c.l.b16 %v879
    %v1487 = vunpack.c.h.b16 %v879
    %v1488 = vunpack.c.l.b16 %v880
    %v1489 = vunpack.c.h.b16 %v880
    %v1490 = vunpack.c.l.b16 %v881
    %v1491 = vunpack.c.h.b16 %v881
    %v1492 = vunpack.c.l.b16 %v882
    %v1493 = vunpack.c.h.b16 %v882
    %v1494 = vunpack.c.l.b16 %v883
    %v1495 = vunpack.c.h.b16 %v883
    %v1496 = vunpack.c.l.b16 %v884
    %v1497 = vunpack.c.h.b16 %v884
    %v1498 = vunpack.c.l.b16 %v885
    %v1499 = vunpack.c.h.b16 %v885
    %v1500 = vunpack.c.l.b16 %v886
    %v1501 = vunpack.c.h.b16 %v886
    %v1502 = vunpack.c.l.b16 %v887
    %v1503 = vunpack.c.h.b16 %v887
    %v1504 = vunpack.c.l.b16 %v888
    %v1505 = vunpack.c.h.b16 %v888
    %v1506 = vunpack.c.l.b16 %v889
    %v1507 = vunpack.c.h.b16 %v889
    %v1508 = vunpack.c.l.b16 %v890
    %v1509 = vunpack.c.h.b16 %v890
    %v1510 = vunpack.c.l.b16 %v891
    %v1511 = vunpack.c.h.b16 %v891
    %v1512 = vunpack.c.l.b16 %v892
    %v1513 = vunpack.c.h.b16 %v892
    %v1514 = vunpack.c.l.b16 %v893
    %v1515 = vunpack.c.h.b16 %v893
    %v1516 = vunpack.c.l.b16 %v894
    %v1517 = vunpack.c.h.b16 %v894
    %v1518 = vunpack.c.l.b16 %v895
    %v1519 = vunpack.c.h.b16 %v895
    %v1520 = vunpack.c.l.b16 %v896
    %v1521 = vunpack.c.h.b16 %v896
    %v1522 = vunpack.c.l.b16 %v897
    %v1523 = vunpack.c.h.b16 %v897
    %v1524 = vunpack.c.l.b16 %v898
    %v1525 = vunpack.c.h.b16 %v898
    %v1526 = vunpack.c.l.b16 %v899
    %v1527 = vunpack.c.h.b16 %v899
    %v1528 = vunpack.c.l.b16 %v900
    %v1529 = vunpack.c.h.b16 %v900
    %v1530 = vunpack.c.l.b16 %v901
    %v1531 = vunpack.c.h.b16 %v901
    %v1532 = vunpack.c.l.b16 %v902
    %v1533 = vunpack.c.h.b16 %v902
    %v1534 = vunpack.c.l.b16 %v903
    %v1535 = vunpack.c.h.b16 %v903
    %v1536 = vunpack.c.l.b16 %v904
    %v1537 = vunpack.c.h.b16 %v904
    %v1538 = vunpack.c.l.b16 %v905
    %v1539 = vunpack.c.h.b16 %v905
    %v1540 = vunpack.c.l.b16 %v906
    %v1541 = vunpack.c.h.b16 %v906
    %v1542 = vunpack.c.l.b16 %v907
    %v1543 = vunpack.c.h.b16 %v907
    %v1544 = vunpack.c.l.b16 %v908
    %v1545 = vunpack.c.h.b16 %v908
    %v1546 = vunpack.c.l.b16 %v909
    %v1547 = vunpack.c.h.b16 %v909
    %v1548 = vunpack.c.l.b16 %v910
    %v1549 = vunpack.c.h.b16 %v910
    %v1550 = vunpack.c.l.b16 %v911
    %v1551 = vunpack.c.h.b16 %v911
    %v1552 = vunpack.c.l.b16 %v912
    %v1553 = vunpack.c.h.b16 %v912
    %v1554 = vunpack.c.l.b16 %v913
    %v1555 = vunpack.c.h.b16 %v913
    %v1556 = vunpack.c.l.b16 %v914
    %v1557 = vunpack.c.h.b16 %v914
    %v1558 = vunpack.c.l.b16 %v915
    %v1559 = vunpack.c.h.b16 %v915
    %v1560 = vunpack.c.l.b16 %v916
    %v1561 = vunpack.c.h.b16 %v916
    %v1562 = vunpack.c.l.b16 %v917
    %v1563 = vunpack.c.h.b16 %v917
    %v1564 = vunpack.c.l.b16 %v918
    %v1565 = vunpack.c.h.b16 %v918
    %v1566 = vunpack.c.l.b16 %v919
    %v1567 = vunpack.c.h.b16 %v919
    %v1568 = vunpack.c.l.b16 %v920
    %v1569 = vunpack.c.h.b16 %v920
    %v1570 = vunpack.c.l.b16 %v921
    %v1571 = vunpack.c.h.b16 %v921
    %v1572 = vunpack.c.l.b16 %v922
    %v1573 = vunpack.c.h.b16 %v922
    %v1574 = vunpack.c.l.b16 %v923
    %v1575 = vunpack.c.h.b16 %v923
    %v1576 = vunpack.c.l.b16 %v924
    %v1577 = vunpack.c.h.b16 %v924
    %v1578 = vunpack.c.l.b16 %v925
    %v1579 = vunpack.c.h.b16 %v925
    %v1580 = vunpack.c.l.b16 %v926
    %v1581 = vunpack.c.h.b16 %v926
    %v1582 = vunpack.c.l.b16 %v927
    %v1583 = vunpack.c.h.b16 %v927
    %v1584 = vunpack.c.l.b16 %v928
    %v1585 = vunpack.c.h.b16 %v928
    %v1586 = vunpack.c.l.b16 %v929
    %v1587 = vunpack.c.h.b16 %v929
    %v1588 = vunpack.c.l.b16 %v930
    %v1589 = vunpack.c.h.b16 %v930
    %v1590 = vunpack.c.l.b16 %v931
    %v1591 = vunpack.c.h.b16 %v931
    %v1592 = vunpack.c.l.b16 %v932
    %v1593 = vunpack.c.h.b16 %v932
    %v1594 = vunpack.c.l.b16 %v933
    %v1595 = vunpack.c.h.b16 %v933
    %v1596 = vunpack.c.l.b16 %v934
    %v1597 = vunpack.c.h.b16 %v934
    %v1598 = vunpack.c.l.b16 %v935
    %v1599 = vunpack.c.h.b16 %v935
    %v1600 = vunpack.c.l.b16 %v936
    %v1601 = vunpack.c.h.b16 %v936
    %v1602 = vunpack.c.l.b16 %v937
    %v1603 = vunpack.c.h.b16 %v937
    %v1604 = vunpack.c.l.b16 %v938
    %v1605 = vunpack.c.h.b16 %v938
    %v1606 = vunpack.c.l.b16 %v939
    %v1607 = vunpack.c.h.b16 %v939
    %v1608 = vunpack.c.l.b16 %v940
    %v1609 = vunpack.c.h.b16 %v940
    %v1610 = vunpack.c.l.b16 %v941
    %v1611 = vunpack.c.h.b16 %v941
    %v1612 = vunpack.c.l.b16 %v942
    %v1613 = vunpack.c.h.b16 %v942
    %v1614 = vunpack.c.l.b16 %v943
    %v1615 = vunpack.c.h.b16 %v943
    %v1616 = vunpack.c.l.b16 %v944
    %v1617 = vunpack.c.h.b16 %v944
    %v1618 = vunpack.c.l.b16 %v945
    %v1619 = vunpack.c.h.b16 %v945
    %v1620 = vunpack.c.l.b16 %v946
    %v1621 = vunpack.c.h.b16 %v946
    %v1622 = vunpack.c.l.b16 %v947
    %v1623 = vunpack.c.h.b16 %v947
    %v1624 = vunpack.c.l.b16 %v948
    %v1625 = vunpack.c.h.b16 %v948
    %v1626 = vunpack.c.l.b16 %v949
    %v1627 = vunpack.c.h.b16 %v949
    %v1628 = vunpack.c.l.b16 %v950
    %v1629 = vunpack.c.h.b16 %v950
    %v1630 = vunpack.c.l.b16 %v951
    %v1631 = vunpack.c.h.b16 %v951
    %v1632 = vunpack.c.l.b16 %v952
    %v1633 = vunpack.c.h.b16 %v952
    %v1634 = vunpack.c.l.b16 %v953
    %v1635 = vunpack.c.h.b16 %v953
    %v1636 = vunpack.c.l.b16 %v954
    %v1637 = vunpack.c.h.b16 %v954
    %v1638 = vunpack.c.l.b16 %v955
    %v1639 = vunpack.c.h.b16 %v955
    %v1640 = vunpack.c.l.b16 %v956
    %v1641 = vunpack.c.h.b16 %v956
    %v1642 = vunpack.c.l.b16 %v957
    %v1643 = vunpack.c.h.b16 %v957
    %v1644 = vunpack.c.l.b16 %v958
    %v1645 = vunpack.c.h.b16 %v958
    %v1646 = vunpack.c.l.b16 %v959
    %v1647 = vunpack.c.h.b16 %v959
    %v1648 = vunpack.c.l.b16 %v960
    %v1649 = vunpack.c.h.b16 %v960
    %v1650 = vunpack.c.l.b16 %v961
    %v1651 = vunpack.c.h.b16 %v961
    %v1652 = vunpack.c.l.b16 %v962
    %v1653 = vunpack.c.h.b16 %v962
    %v1654 = vunpack.c.l.b16 %v963
    %v1655 = vunpack.c.h.b16 %v963
    %v1656 = vunpack.c.l.b16 %v964
    %v1657 = vunpack.c.h.b16 %v964
    %v1658 = vunpack.c.l.b16 %v965
    %v1659 = vunpack.c.h.b16 %v965
    %v1660 = vunpack.c.l.b16 %v966
    %v1661 = vunpack.c.h.b16 %v966
    %v1662 = vunpack.c.l.b16 %v967
    %v1663 = vunpack.c.h.b16 %v967
    %v1664 = vunpack.c.l.b16 %v968
    %v1665 = vunpack.c.h.b16 %v968
    %v1666 = vunpack.c.l.b16 %v969
    %v1667 = vunpack.c.h.b16 %v969
    %v1668 = vunpack.c.l.b16 %v970
    %v1669 = vunpack.c.h.b16 %v970
    %v1670 = vunpack.c.l.b16 %v971
    %v1671 = vunpack.c.h.b16 %v971
    %v1672 = vunpack.c.l.b16 %v972
    %v1673 = vunpack.c.h.b16 %v972
    %v1674 = vunpack.c.l.b16 %v973
    %v1675 = vunpack.c.h.b16 %v973
    %v1676 = vunpack.c.l.b16 %v974
    %v1677 = vunpack.c.h.b16 %v974
    %v1678 = vunpack.c.l.b16 %v975
    %v1679 = vunpack.c.h.b16 %v975
    %v1680 = vunpack.c.l.b16 %v976
    %v1681 = vunpack.c.h.b16 %v976
    %v1682 = vunpack.c.l.b16 %v977
    %v1683 = vunpack.c.h.b16 %v977
    %v1684 = vunpack.c.l.b16 %v978
    %v1685 = vunpack.c.h.b16 %v978
    %v1686 = vunpack.c.l.b16 %v979
    %v1687 = vunpack.c.h.b16 %v979
    %v1688 = vunpack.c.l.b16 %v980
    %v1689 = vunpack.c.h.b16 %v980
    %v1690 = vunpack.c.l.b16 %v981
    %v1691 = vunpack.c.h.b16 %v981
    %v1692 = vunpack.c.l.b16 %v982
    %v1693 = vunpack.c.h.b16 %v982
    %v1694 = vunpack.c.l.b16 %v983
    %v1695 = vunpack.c.h.b16 %v983
    %v1696 = vunpack.c.l.b16 %v984
    %v1697 = vunpack.c.h.b16 %v984
    %v1698 = vunpack.c.l.b16 %v985
    %v1699 = vunpack.c.h.b16 %v985
    %v1700 = vunpack.c.l.b16 %v986
    %v1701 = vunpack.c.h.b16 %v986
    %v1702 = vunpack.c.l.b16 %v987
    %v1703 = vunpack.c.h.b16 %v987
    %v1704 = vunpack.c.l.b16 %v988
    %v1705 = vunpack.c.h.b16 %v988
    %v1706 = vunpack.c.l.b16 %v989
    %v1707 = vunpack.c.h.b16 %v989
    %v1708 = vunpack.c.l.b16 %v990
    %v1709 = vunpack.c.h.b16 %v990
    %v1710 = vunpack.c.l.b16 %v991
    %v1711 = vunpack.c.h.b16 %v991
    %v1712 = vunpack.c.l.b16 %v992
    %v1713 = vunpack.c.h.b16 %v992
    %v1714 = vunpack.c.l.b16 %v993
    %v1715 = vunpack.c.h.b16 %v993
    %v1716 = vunpack.c.l.b16 %v994
    %v1717 = vunpack.c.h.b16 %v994
    %v1718 = vunpack.c.l.b16 %v995
    %v1719 = vunpack.c.h.b16 %v995
    %v1720 = vunpack.c.l.b16 %v996
    %v1721 = vunpack.c.h.b16 %v996
    %v1722 = vunpack.c.l.b16 %v997
    %v1723 = vunpack.c.h.b16 %v997
    %v1724 = vunpack.c.l.b16 %v998
    %v1725 = vunpack.c.h.b16 %v998
    %v1726 = vunpack.c.l.b16 %v999
    %v1727 = vunpack.c.h.b16 %v999
    %v1728 = vunpack.c.l.b16 %v1000
    %v1729 = vunpack.c.h.b16 %v1000
    %v1730 = vunpack.c.l.b16 %v1001
    %v1731 = vunpack.c.h.b16 %v1001
    %v1732 = vunpack.c.l.b16 %v1002
    %v1733 = vunpack.c.h.b16 %v1002
    %v1734 = vunpack.c.l.b16 %v1003
    %v1735 = vunpack.c.h.b16 %v1003
    %v1736 = vunpack.c.l.b16 %v1004
    %v1737 = vunpack.c.h.b16 %v1004
    %v1738 = vunpack.c.l.b16 %v1005
    %v1739 = vunpack.c.h.b16 %v1005
    %v1740 = vunpack.c.l.b16 %v1006
    %v1741 = vunpack.c.h.b16 %v1006
    %v1742 = vunpack.c.l.b16 %v1007
    %v1743 = vunpack.c.h.b16 %v1007
    %v1744 = vunpack.c.l.b16 %v1008
    %v1745 = vunpack.c.h.b16 %v1008
    %v1746 = vunpack.c.l.b16 %v1009
    %v1747 = vunpack.c.h.b16 %v1009
    %v1748 = vunpack.c.l.b16 %v1010
    %v1749 = vunpack.c.h.b16 %v1010
    %v1750 = vunpack.c.l.b16 %v1011
    %v1751 = vunpack.c.h.b16 %v1011
    %v1752 = vunpack.c.l.b16 %v1012
    %v1753 = vunpack.c.h.b16 %v1012
    %v1754 = vunpack.c.l.b16 %v1013
    %v1755 = vunpack.c.h.b16 %v1013
    %v1756 = vunpack.c.l.b16 %v1014
    %v1757 = vunpack.c.h.b16 %v1014
    %v1758 = vunpack.c.l.b16 %v1015
    %v1759 = vunpack.c.h.b16 %v1015
    %v1760 = vunpack.c.l.b16 %v1016
    %v1761 = vunpack.c.h.b16 %v1016
    %v1762 = vunpack.c.l.b16 %v1017
    %v1763 = vunpack.c.h.b16 %v1017
    %v1764 = vunpack.c.l.b16 %v1018
    %v1765 = vunpack.c.h.b16 %v1018
    %v1766 = vunpack.c.l.b16 %v1019
    %v1767 = vunpack.c.h.b16 %v1019
    %v1768 = vunpack.c.l.b16 %v1020
    %v1769 = vunpack.c.h.b16 %v1020
    %v1770 = vunpack.c.l.b16 %v1021
    %v1771 = vunpack.c.h.b16 %v1021
    %v1772 = vunpack.c.l.b16 %v1022
    %v1773 = vunpack.c.h.b16 %v1022
    %v1774 = vunpack.c.l.b16 %v1023
    %v1775 = vunpack.c.h.b16 %v1023
    %v1776 = vunpack.c.l.b16 %v1024
    %v1777 = vunpack.c.h.b16 %v1024
    %v1778 = vunpack.c.l.b16 %v1025
    %v1779 = vunpack.c.h.b16 %v1025
    %v1780 = vunpack.c.l.b16 %v1026
    %v1781 = vunpack.c.h.b16 %v1026
    %v1782 = vunpack.c.l.b16 %v1027
    %v1783 = vunpack.c.h.b16 %v1027
    %v1784 = vunpack.c.l.b16 %v1028
    %v1785 = vunpack.c.h.b16 %v1028
    %v1786 = vunpack.c.l.b16 %v1029
    %v1787 = vunpack.c.h.b16 %v1029
    %v1788 = vunpack.c.l.b16 %v1030
    %v1789 = vunpack.c.h.b16 %v1030
    %v1790 = vunpack.c.l.b16 %v1031
    %v1791 = vunpack.c.h.b16 %v1031
    %v1792 = vunpack.c.l.b16 %v1032
    %v1793 = vunpack.c.h.b16 %v1032
    %v1794 = vunpack.c.l.b16 %v1033
    %v1795 = vunpack.c.h.b16 %v1033
    %v1796 = vunpack.c.l.b16 %v1034
    %v1797 = vunpack.c.h.b16 %v1034
    %v1798 = vunpack.c.l.b16 %v1035
    %v1799 = vunpack.c.h.b16 %v1035
    %v1800 = vunpack.c.l.b16 %v1036
    %v1801 = vunpack.c.h.b16 %v1036
    %v1802 = vunpack.c.l.b16 %v1037
    %v1803 = vunpack.c.h.b16 %v1037
    %v1804 = vunpack.c.l.b16 %v1038
    %v1805 = vunpack.c.h.b16 %v1038
    %v1806 = vunpack.c.l.b16 %v1039
    %v1807 = vunpack.c.h.b16 %v1039
    %v1808 = vunpack.c.l.b16 %v1040
    %v1809 = vunpack.c.h.b16 %v1040
    %v1810 = vunpack.c.l.b16 %v1041
    %v1811 = vunpack.c.h.b16 %v1041
    %v1812 = vunpack.c.l.b16 %v1042
    %v1813 = vunpack.c.h.b16 %v1042
    %v1814 = vunpack.c.l.b16 %v1043
    %v1815 = vunpack.c.h.b16 %v1043
    %v1816 = vunpack.c.l.b16 %v1044
    %v1817 = vunpack.c.h.b16 %v1044
    %v1818 = vunpack.c.l.b16 %v1045
    %v1819 = vunpack.c.h.b16 %v1045
    %v1820 = vunpack.c.l.b16 %v1046
    %v1821 = vunpack.c.h.b16 %v1046
    %v1822 = vunpack.c.l.b16 %v1047
    %v1823 = vunpack.c.h.b16 %v1047
    %v1824 = vunpack.c.l.b16 %v1048
    %v1825 = vunpack.c.h.b16 %v1048
    %v1826 = vunpack.c.l.b16 %v1049
    %v1827 = vunpack.c.h.b16 %v1049
    %v1828 = vunpack.c.l.b16 %v1050
    %v1829 = vunpack.c.h.b16 %v1050
    %v1830 = vunpack.c.l.b16 %v1051
    %v1831 = vunpack.c.h.b16 %v1051
    %v1832 = vunpack.c.l.b16 %v1052
    %v1833 = vunpack.c.h.b16 %v1052
    %v1834 = vunpack.c.l.b16 %v1053
    %v1835 = vunpack.c.h.b16 %v1053
    %v1836 = vunpack.c.l.b16 %v1054
    %v1837 = vunpack.c.h.b16 %v1054
    %v1838 = vunpack.c.l.b16 %v1055
    %v1839 = vunpack.c.h.b16 %v1055
    %v1840 = vunpack.c.l.b16 %v1056
    %v1841 = vunpack.c.h.b16 %v1056
    %v1842 = vunpack.c.l.b16 %v1057
    %v1843 = vunpack.c.h.b16 %v1057
    %v1844 = vpack.c.b16 %v1340, %v1332
    %v1845 = vpack.c.b16 %v1341, %v1333
    %v1846 = vpack.c.b16 %v1342, %v1334
    %v1847 = vpack.c.b16 %v1343, %v1335
    %v1848 = vpack.c.b16 %v1344, %v1336
    %v1849 = vpack.c.b16 %v1345, %v1337
    %v1850 = vpack.c.b16 %v1346, %v1338
    %v1851 = vpack.c.b16 %v1347, %v1339
    %v1852 = vpack.c.b16 %v1356, %v1348
    %v1853 = vpack.c.b16 %v1357, %v1349
    %v1854 = vpack.c.b16 %v1358, %v1350
    %v1855 = vpack.c.b16 %v1359, %v1351
    %v1856 = vpack.c.b16 %v1360, %v1352
    %v1857 = vpack.c.b16 %v1361, %v1353
    %v1858 = vpack.c.b16 %v1362, %v1354
    %v1859 = vpack.c.b16 %v1363, %v1355
    %v1860 = vpack.c.b16 %v1372, %v1364
    %v1861 = vpack.c.b16 %v1373, %v1365
    %v1862 = vpack.c.b16 %v1374, %v1366
    %v1863 = vpack.c.b16 %v1375, %v1367
    %v1864 = vpack.c.b16 %v1376, %v1368
    %v1865 = vpack.c.b16 %v1377, %v1369
    %v1866 = vpack.c.b16 %v1378, %v1370
    %v1867 = vpack.c.b16 %v1379, %v1371
    %v1868 = vpack.c.b16 %v1388, %v1380
    %v1869 = vpack.c.b16 %v1389, %v1381
    %v1870 = vpack.c.b16 %v1390, %v1382
    %v1871 = vpack.c.b16 %v1391, %v1383
    %v1872 = vpack.c.b16 %v1392, %v1384
    %v1873 = vpack.c.b16 %v1393, %v1385
    %v1874 = vpack.c.b16 %v1394, %v1386
    %v1875 = vpack.c.b16 %v1395, %v1387
    %v1876 = vpack.c.b16 %v1404, %v1396
    %v1877 = vpack.c.b16 %v1405, %v1397
    %v1878 = vpack.c.b16 %v1406, %v1398
    %v1879 = vpack.c.b16 %v1407, %v1399
    %v1880 = vpack.c.b16 %v1408, %v1400
    %v1881 = vpack.c.b16 %v1409, %v1401
    %v1882 = vpack.c.b16 %v1410, %v1402
    %v1883 = vpack.c.b16 %v1411, %v1403
    %v1884 = vpack.c.b16 %v1420, %v1412
    %v1885 = vpack.c.b16 %v1421, %v1413
    %v1886 = vpack.c.b16 %v1422, %v1414
    %v1887 = vpack.c.b16 %v1423, %v1415
    %v1888 = vpack.c.b16 %v1424, %v1416
    %v1889 = vpack.c.b16 %v1425, %v1417
    %v1890 = vpack.c.b16 %v1426, %v1418
    %v1891 = vpack.c.b16 %v1427, %v1419
    %v1892 = vpack.c.b16 %v1436, %v1428
    %v1893 = vpack.c.b16 %v1437, %v1429
    %v1894 = vpack.c.b16 %v1438, %v1430
    %v1895 = vpack.c.b16 %v1439, %v1431
    %v1896 = vpack.c.b16 %v1440, %v1432
    %v1897 = vpack.c.b16 %v1441, %v1433
    %v1898 = vpack.c.b16 %v1442, %v1434
    %v1899 = vpack.c.b16 %v1443, %v1435
    %v1900 = vpack.c.b16 %v1452, %v1444
    %v1901 = vpack.c.b16 %v1453, %v1445
    %v1902 = vpack.c.b16 %v1454, %v1446
    %v1903 = vpack.c.b16 %v1455, %v1447
    %v1904 = vpack.c.b16 %v1456, %v1448
    %v1905 = vpack.c.b16 %v1457, %v1449
    %v1906 = vpack.c.b16 %v1458, %v1450
    %v1907 = vpack.c.b16 %v1459, %v1451
    %v1908 = vpack.c.b16 %v1468, %v1460
    %v1909 = vpack.c.b16 %v1469, %v1461
    %v1910 = vpack.c.b16 %v1470, %v1462
    %v1911 = vpack.c.b16 %v1471, %v1463
    %v1912 = vpack.c.b16 %v1472, %v1464
    %v1913 = vpack.c.b16 %v1473, %v1465
    %v1914 = vpack.c.b16 %v1474, %v1466
    %v1915 = vpack.c.b16 %v1475, %v1467
    %v1916 = vpack.c.b16 %v1484, %v1476
    %v1917 = vpack.c.b16 %v1485, %v1477
    %v1918 = vpack.c.b16 %v1486, %v1478
    %v1919 = vpack.c.b16 %v1487, %v1479
    %v1920 = vpack.c.b16 %v1488, %v1480
    %v1921 = vpack.c.b16 %v1489, %v1481
    %v1922 = vpack.c.b16 %v1490, %v1482
    %v1923 = vpack.c.b16 %v1491, %v1483
    %v1924 = vpack.c.b16 %v1500, %v1492
    %v1925 = vpack.c.b16 %v1501, %v1493
    %v1926 = vpack.c.b16 %v1502, %v1494
    %v1927 = vpack.c.b16 %v1503, %v1495
    %v1928 = vpack.c.b16 %v1504, %v1496
    %v1929 = vpack.c.b16 %v1505, %v1497
    %v1930 = vpack.c.b16 %v1506, %v1498
    %v1931 = vpack.c.b16 %v1507, %v1499
    %v1932 = vpack.c.b16 %v1516, %v1508
    %v1933 = vpack.c.b16 %v1517, %v1509
    %v1934 = vpack.c.b16 %v1518, %v1510
    %v1935 = vpack.c.b16 %v1519, %v1511
    %v1936 = vpack.c.b16 %v1520, %v1512
    %v1937 = vpack.c.b16 %v1521, %v1513
    %v1938 = vpack.c.b16 %v1522, %v1514
    %v1939 = vpack.c.b16 %v1523, %v1515
    %v1940 = vpack.c.b16 %v1532, %v1524
    %v1941 = vpack.c.b16 %v1533, %v1525
    %v1942 = vpack.c.b16 %v1534, %v1526
    %v1943 = vpack.c.b16 %v1535, %v1527
    %v1944 = vpack.c.b16 %v1536, %v1528
    %v1945 = vpack.c.b16 %v1537, %v1529
    %v1946 = vpack.c.b16 %v1538, %v1530
    %v1947 = vpack.c.b16 %v1539, %v1531
    %v1948 = vpack.c.b16 %v1548, %v1540
    %v1949 = vpack.c.b16 %v1549, %v1541
    %v1950 = vpack.c.b16 %v1550, %v1542
    %v1951 = vpack.c.b16 %v1551, %v1543
    %v1952 = vpack.c.b16 %v1552, %v1544
    %v1953 = vpack.c.b16 %v1553, %v1545
    %v1954 = vpack.c.b16 %v1554, %v1546
    %v1955 = vpack.c.b16 %v1555, %v1547
    %v1956 = vpack.c.b16 %v1564, %v1556
    %v1957 = vpack.c.b16 %v1565, %v1557
    %v1958 = vpack.c.b16 %v1566, %v1558
    %v1959 = vpack.c.b16 %v1567, %v1559
    %v1960 = vpack.c.b16 %v1568, %v1560
    %v1961 = vpack.c.b16 %v1569, %v1561
    %v1962 = vpack.c.b16 %v1570, %v1562
    %v1963 = vpack.c.b16 %v1571, %v1563
    %v1964 = vpack.c.b16 %v1580, %v1572
    %v1965 = vpack.c.b16 %v1581, %v1573
    %v1966 = vpack.c.b16 %v1582, %v1574
    %v1967 = vpack.c.b16 %v1583, %v1575
    %v1968 = vpack.c.b16 %v1584, %v1576
    %v1969 = vpack.c.b16 %v1585, %v1577
    %v1970 = vpack.c.b16 %v1586, %v1578
    %v1971 = vpack.c.b16 %v1587, %v1579
    %v1972 = vpack.c.b16 %v1596, %v1588
    %v1973 = vpack.c.b16 %v1597, %v1589
    %v1974 = vpack.c.b16 %v1598, %v1590
    %v1975 = vpack.c.b16 %v1599, %v1591
    %v1976 = vpack.c.b16 %v1600, %v1592
    %v1977 = vpack.c.b16 %v1601, %v1593
    %v1978 = vpack.c.b16 %v1602, %v1594
    %v1979 = vpack.c.b16 %v1603, %v1595
    %v1980 = vpack.c.b16 %v1612, %v1604
    %v1981 = vpack.c.b16 %v1613, %v1605
    %v1982 = vpack.c.b16 %v1614, %v1606
    %v1983 = vpack.c.b16 %v1615, %v1607
    %v1984 = vpack.c.b16 %v1616, %v1608
    %v1985 = vpack.c.b16 %v1617, %v1609
    %v1986 = vpack.c.b16 %v1618, %v1610
    %v1987 = vpack.c.b16 %v1619, %v1611
    %v1988 = vpack.c.b16 %v1628, %v1620
    %v1989 = vpack.c.b16 %v1629, %v1621
    %v1990 = vpack.c.b16 %v1630, %v1622
    %v1991 = vpack.c.b16 %v1631, %v1623
    %v1992 = vpack.c.b16 %v1632, %v1624
    %v1993 = vpack.c.b16 %v1633, %v1625
    %v1994 = vpack.c.b16 %v1634, %v1626
    %v1995 = vpack.c.b16 %v1635, %v1627
    %v1996 = vpack.c.b16 %v1644, %v1636
    %v1997 = vpack.c.b16 %v1645, %v1637
    %v1998 = vpack.c.b16 %v1646, %v1638
    %v1999 = vpack.c.b16 %v1647, %v1639
    %v2000 = vpack.c.b16 %v1648, %v1640
    %v2001 = vpack.c.b16 %v1649, %v1641
    %v2002 = vpack.c.b16 %v1650, %v1642
    %v2003 = vpack.c.b16 %v1651, %v1643
    %v2004 = vpack.c.b16 %v1660, %v1652
    %v2005 = vpack.c.b16 %v1661, %v1653
    %v2006 = vpack.c.b16 %v1662, %v1654
    %v2007 = vpack.c.b16 %v1663, %v1655
    %v2008 = vpack.c.b16 %v1664, %v1656
    %v2009 = vpack.c.b16 %v1665, %v1657
    %v2010 = vpack.c.b16 %v1666, %v1658
    %v2011 = vpack.c.b16 %v1667, %v1659
    %v2012 = vpack.c.b16 %v1676, %v1668
    %v2013 = vpack.c.b16 %v1677, %v1669
    %v2014 = vpack.c.b16 %v1678, %v1670
    %v2015 = vpack.c.b16 %v1679, %v1671
    %v2016 = vpack.c.b16 %v1680, %v1672
    %v2017 = vpack.c.b16 %v1681, %v1673
    %v2018 = vpack.c.b16 %v1682, %v1674
    %v2019 = vpack.c.b16 %v1683, %v1675
    %v2020 = vpack.c.b16 %v1692, %v1684
    %v2021 = vpack.c.b16 %v1693, %v1685
    %v2022 = vpack.c.b16 %v1694, %v1686
    %v2023 = vpack.c.b16 %v1695, %v1687
    %v2024 = vpack.c.b16 %v1696, %v1688
    %v2025 = vpack.c.b16 %v1697, %v1689
    %v2026 = vpack.c.b16 %v1698, %v1690
    %v2027 = vpack.c.b16 %v1699, %v1691
    %v2028 = vpack.c.b16 %v1708, %v1700
    %v2029 = vpack.c.b16 %v1709, %v1701
    %v2030 = vpack.c.b16 %v1710, %v1702
    %v2031 = vpack.c.b16 %v1711, %v1703
    %v2032 = vpack.c.b16 %v1712, %v1704
    %v2033 = vpack.c.b16 %v1713, %v1705
    %v2034 = vpack.c.b16 %v1714, %v1706
    %v2035 = vpack.c.b16 %v1715, %v1707
    %v2036 = vpack.c.b16 %v1724, %v1716
    %v2037 = vpack.c.b16 %v1725, %v1717
    %v2038 = vpack.c.b16 %v1726, %v1718
    %v2039 = vpack.c.b16 %v1727, %v1719
    %v2040 = vpack.c.b16 %v1728, %v1720
    %v2041 = vpack.c.b16 %v1729, %v1721
    %v2042 = vpack.c.b16 %v1730, %v1722
    %v2043 = vpack.c.b16 %v1731, %v1723
    %v2044 = vpack.c.b16 %v1740, %v1732
    %v2045 = vpack.c.b16 %v1741, %v1733
    %v2046 = vpack.c.b16 %v1742, %v1734
    %v2047 = vpack.c.b16 %v1743, %v1735
    %v2048 = vpack.c.b16 %v1744, %v1736
    %v2049 = vpack.c.b16 %v1745, %v1737
    %v2050 = vpack.c.b16 %v1746, %v1738
    %v2051 = vpack.c.b16 %v1747, %v1739
    %v2052 = vpack.c.b16 %v1756, %v1748
    %v2053 = vpack.c.b16 %v1757, %v1749
    %v2054 = vpack.c.b16 %v1758, %v1750
    %v2055 = vpack.c.b16 %v1759, %v1751
    %v2056 = vpack.c.b16 %v1760, %v1752
    %v2057 = vpack.c.b16 %v1761, %v1753
    %v2058 = vpack.c.b16 %v1762, %v1754
    %v2059 = vpack.c.b16 %v1763, %v1755
    %v2060 = vpack.c.b16 %v1772, %v1764
    %v2061 = vpack.c.b16 %v1773, %v1765
    %v2062 = vpack.c.b16 %v1774, %v1766
    %v2063 = vpack.c.b16 %v1775, %v1767
    %v2064 = vpack.c.b16 %v1776, %v1768
    %v2065 = vpack.c.b16 %v1777, %v1769
    %v2066 = vpack.c.b16 %v1778, %v1770
    %v2067 = vpack.c.b16 %v1779, %v1771
    %v2068 = vpack.c.b16 %v1788, %v1780
    %v2069 = vpack.c.b16 %v1789, %v1781
    %v2070 = vpack.c.b16 %v1790, %v1782
    %v2071 = vpack.c.b16 %v1791, %v1783
    %v2072 = vpack.c.b16 %v1792, %v1784
    %v2073 = vpack.c.b16 %v1793, %v1785
    %v2074 = vpack.c.b16 %v1794, %v1786
    %v2075 = vpack.c.b16 %v1795, %v1787
    %v2076 = vpack.c.b16 %v1804, %v1796
    %v2077 = vpack.c.b16 %v1805, %v1797
    %v2078 = vpack.c.b16 %v1806, %v1798
    %v2079 = vpack.c.b16 %v1807, %v1799
    %v2080 = vpack.c.b16 %v1808, %v1800
    %v2081 = vpack.c.b16 %v1809, %v1801
    %v2082 = vpack.c.b16 %v1810, %v1802
    %v2083 = vpack.c.b16 %v1811, %v1803
    %v2084 = vpack.c.b16 %v1820, %v1812
    %v2085 = vpack.c.b16 %v1821, %v1813
    %v2086 = vpack.c.b16 %v1822, %v1814
    %v2087 = vpack.c.b16 %v1823, %v1815
    %v2088 = vpack.c.b16 %v1824, %v1816
    %v2089 = vpack.c.b16 %v1825, %v1817
    %v2090 = vpack.c.b16 %v1826, %v1818
    %v2091 = vpack.c.b16 %v1827, %v1819
    %v2092 = vpack.c.b16 %v1836, %v1828
    %v2093 = vpack.c.b16 %v1837, %v1829
    %v2094 = vpack.c.b16 %v1838, %v1830
    %v2095 = vpack.c.b16 %v1839, %v1831
    %v2096 = vpack.c.b16 %v1840, %v1832
    %v2097 = vpack.c.b16 %v1841, %v1833
    %v2098 = vpack.c.b16 %v1842, %v1834
    %v2099 = vpack.c.b16 %v1843, %v1835
    %2356 = vmatpush.bf16.msra.mxu0 %v1900
    %2357 = vmatpush.bf16.msra.mxu0 %v1892
    %2358 = vmatpush.bf16.msra.mxu0 %v1884
    %2359 = vmatpush.bf16.msra.mxu0 %v1876
    %2360 = vmatpush.bf16.msra.mxu0 %v1868
    %2361 = vmatpush.bf16.msra.mxu0 %v1860
    %2362 = vmatpush.bf16.msra.mxu0 %v1852
    %2363 = vmatpush.bf16.msra.mxu0 %v1844
    %2364 = vmatmul.bf16.gmra.mxu0 %v798
    %v2365 = vpop.f32.mrf.mxu0
    %v2366 = vadd.f32 %v1060, %v2365
    %v2367 = vpop.f32.mrf.mxu0
    %2368 = vdwg.mxu0
    %2369 = vmatpush.bf16.msra.mxu0 %v1964
    %2370 = vmatpush.bf16.msra.mxu0 %v1956
    %2371 = vmatpush.bf16.msra.mxu0 %v1948
    %2372 = vmatpush.bf16.msra.mxu0 %v1940
    %2373 = vmatpush.bf16.msra.mxu0 %v1932
    %2374 = vmatpush.bf16.msra.mxu0 %v1924
    %2375 = vmatpush.bf16.msra.mxu0 %v1916
    %2376 = vmatpush.bf16.msra.mxu0 %v1908
    %2377 = vmatmul.bf16.gmra.mxu0 %v799
    %v2378 = vpop.f32.mrf.mxu0
    %v2379 = vadd.f32 %v2366, %v2378
    %v2380 = vpop.f32.mrf.mxu0
    %2381 = vdwg.mxu0
    %2382 = vmatpush.bf16.msra.mxu0 %v2028
    %2383 = vmatpush.bf16.msra.mxu0 %v2020
    %2384 = vmatpush.bf16.msra.mxu0 %v2012
    %2385 = vmatpush.bf16.msra.mxu0 %v2004
    %2386 = vmatpush.bf16.msra.mxu0 %v1996
    %2387 = vmatpush.bf16.msra.mxu0 %v1988
    %2388 = vmatpush.bf16.msra.mxu0 %v1980
    %2389 = vmatpush.bf16.msra.mxu0 %v1972
    %2390 = vmatmul.bf16.gmra.mxu0 %v800
    %v2391 = vpop.f32.mrf.mxu0
    %v2392 = vadd.f32 %v2379, %v2391
    %v2393 = vpop.f32.mrf.mxu0
    %2394 = vdwg.mxu0
    %2395 = vmatpush.bf16.msra.mxu0 %v2092
    %2396 = vmatpush.bf16.msra.mxu0 %v2084
    %2397 = vmatpush.bf16.msra.mxu0 %v2076
    %2398 = vmatpush.bf16.msra.mxu0 %v2068
    %2399 = vmatpush.bf16.msra.mxu0 %v2060
    %2400 = vmatpush.bf16.msra.mxu0 %v2052
    %2401 = vmatpush.bf16.msra.mxu0 %v2044
    %2402 = vmatpush.bf16.msra.mxu0 %v2036
    %2403 = vmatmul.bf16.gmra.mxu0 %v801
    %v2404 = vpop.f32.mrf.mxu0
    %v2405 = vadd.f32 %v2392, %v2404
    %v2406 = vpop.f32.mrf.mxu0
    %2407 = vdwg.mxu0
    %2408 = vmatpush.bf16.msra.mxu0 %v1901
    %2409 = vmatpush.bf16.msra.mxu0 %v1893
    %2410 = vmatpush.bf16.msra.mxu0 %v1885
    %2411 = vmatpush.bf16.msra.mxu0 %v1877
    %2412 = vmatpush.bf16.msra.mxu0 %v1869
    %2413 = vmatpush.bf16.msra.mxu0 %v1861
    %2414 = vmatpush.bf16.msra.mxu0 %v1853
    %2415 = vmatpush.bf16.msra.mxu0 %v1845
    %2416 = vmatmul.bf16.gmra.mxu0 %v798
    %v2417 = vpop.f32.mrf.mxu0
    %v2418 = vadd.f32 %v1061, %v2417
    %v2419 = vpop.f32.mrf.mxu0
    %2420 = vdwg.mxu0
    %2421 = vmatpush.bf16.msra.mxu0 %v1965
    %2422 = vmatpush.bf16.msra.mxu0 %v1957
    %2423 = vmatpush.bf16.msra.mxu0 %v1949
    %2424 = vmatpush.bf16.msra.mxu0 %v1941
    %2425 = vmatpush.bf16.msra.mxu0 %v1933
    %2426 = vmatpush.bf16.msra.mxu0 %v1925
    %2427 = vmatpush.bf16.msra.mxu0 %v1917
    %2428 = vmatpush.bf16.msra.mxu0 %v1909
    %2429 = vmatmul.bf16.gmra.mxu0 %v799
    %v2430 = vpop.f32.mrf.mxu0
    %v2431 = vadd.f32 %v2418, %v2430
    %v2432 = vpop.f32.mrf.mxu0
    %2433 = vdwg.mxu0
    %2434 = vmatpush.bf16.msra.mxu0 %v2029
    %2435 = vmatpush.bf16.msra.mxu0 %v2021
    %2436 = vmatpush.bf16.msra.mxu0 %v2013
    %2437 = vmatpush.bf16.msra.mxu0 %v2005
    %2438 = vmatpush.bf16.msra.mxu0 %v1997
    %2439 = vmatpush.bf16.msra.mxu0 %v1989
    %2440 = vmatpush.bf16.msra.mxu0 %v1981
    %2441 = vmatpush.bf16.msra.mxu0 %v1973
    %2442 = vmatmul.bf16.gmra.mxu0 %v800
    %v2443 = vpop.f32.mrf.mxu0
    %v2444 = vadd.f32 %v2431, %v2443
    %v2445 = vpop.f32.mrf.mxu0
    %2446 = vdwg.mxu0
    %2447 = vmatpush.bf16.msra.mxu0 %v2093
    %2448 = vmatpush.bf16.msra.mxu0 %v2085
    %2449 = vmatpush.bf16.msra.mxu0 %v2077
    %2450 = vmatpush.bf16.msra.mxu0 %v2069
    %2451 = vmatpush.bf16.msra.mxu0 %v2061
    %2452 = vmatpush.bf16.msra.mxu0 %v2053
    %2453 = vmatpush.bf16.msra.mxu0 %v2045
    %2454 = vmatpush.bf16.msra.mxu0 %v2037
    %2455 = vmatmul.bf16.gmra.mxu0 %v801
    %v2456 = vpop.f32.mrf.mxu0
    %v2457 = vadd.f32 %v2444, %v2456
    %v2458 = vpop.f32.mrf.mxu0
    %2459 = vdwg.mxu0
    %2460 = vmatpush.bf16.msra.mxu0 %v1902
    %2461 = vmatpush.bf16.msra.mxu0 %v1894
    %2462 = vmatpush.bf16.msra.mxu0 %v1886
    %2463 = vmatpush.bf16.msra.mxu0 %v1878
    %2464 = vmatpush.bf16.msra.mxu0 %v1870
    %2465 = vmatpush.bf16.msra.mxu0 %v1862
    %2466 = vmatpush.bf16.msra.mxu0 %v1854
    %2467 = vmatpush.bf16.msra.mxu0 %v1846
    %2468 = vmatmul.bf16.gmra.mxu0 %v798
    %v2469 = vpop.f32.mrf.mxu0
    %v2470 = vadd.f32 %v1062, %v2469
    %v2471 = vpop.f32.mrf.mxu0
    %2472 = vdwg.mxu0
    %2473 = vmatpush.bf16.msra.mxu0 %v1966
    %2474 = vmatpush.bf16.msra.mxu0 %v1958
    %2475 = vmatpush.bf16.msra.mxu0 %v1950
    %2476 = vmatpush.bf16.msra.mxu0 %v1942
    %2477 = vmatpush.bf16.msra.mxu0 %v1934
    %2478 = vmatpush.bf16.msra.mxu0 %v1926
    %2479 = vmatpush.bf16.msra.mxu0 %v1918
    %2480 = vmatpush.bf16.msra.mxu0 %v1910
    %2481 = vmatmul.bf16.gmra.mxu0 %v799
    %v2482 = vpop.f32.mrf.mxu0
    %v2483 = vadd.f32 %v2470, %v2482
    %v2484 = vpop.f32.mrf.mxu0
    %2485 = vdwg.mxu0
    %2486 = vmatpush.bf16.msra.mxu0 %v2030
    %2487 = vmatpush.bf16.msra.mxu0 %v2022
    %2488 = vmatpush.bf16.msra.mxu0 %v2014
    %2489 = vmatpush.bf16.msra.mxu0 %v2006
    %2490 = vmatpush.bf16.msra.mxu0 %v1998
    %2491 = vmatpush.bf16.msra.mxu0 %v1990
    %2492 = vmatpush.bf16.msra.mxu0 %v1982
    %2493 = vmatpush.bf16.msra.mxu0 %v1974
    %2494 = vmatmul.bf16.gmra.mxu0 %v800
    %v2495 = vpop.f32.mrf.mxu0
    %v2496 = vadd.f32 %v2483, %v2495
    %v2497 = vpop.f32.mrf.mxu0
    %2498 = vdwg.mxu0
    %2499 = vmatpush.bf16.msra.mxu0 %v2094
    %2500 = vmatpush.bf16.msra.mxu0 %v2086
    %2501 = vmatpush.bf16.msra.mxu0 %v2078
    %2502 = vmatpush.bf16.msra.mxu0 %v2070
    %2503 = vmatpush.bf16.msra.mxu0 %v2062
    %2504 = vmatpush.bf16.msra.mxu0 %v2054
    %2505 = vmatpush.bf16.msra.mxu0 %v2046
    %2506 = vmatpush.bf16.msra.mxu0 %v2038
    %2507 = vmatmul.bf16.gmra.mxu0 %v801
    %v2508 = vpop.f32.mrf.mxu0
    %v2509 = vadd.f32 %v2496, %v2508
    %v2510 = vpop.f32.mrf.mxu0
    %2511 = vdwg.mxu0
    %2512 = vmatpush.bf16.msra.mxu0 %v1903
    %2513 = vmatpush.bf16.msra.mxu0 %v1895
    %2514 = vmatpush.bf16.msra.mxu0 %v1887
    %2515 = vmatpush.bf16.msra.mxu0 %v1879
    %2516 = vmatpush.bf16.msra.mxu0 %v1871
    %2517 = vmatpush.bf16.msra.mxu0 %v1863
    %2518 = vmatpush.bf16.msra.mxu0 %v1855
    %2519 = vmatpush.bf16.msra.mxu0 %v1847
    %2520 = vmatmul.bf16.gmra.mxu0 %v798
    %v2521 = vpop.f32.mrf.mxu0
    %v2522 = vadd.f32 %v1063, %v2521
    %v2523 = vpop.f32.mrf.mxu0
    %2524 = vdwg.mxu0
    %2525 = vmatpush.bf16.msra.mxu0 %v1967
    %2526 = vmatpush.bf16.msra.mxu0 %v1959
    %2527 = vmatpush.bf16.msra.mxu0 %v1951
    %2528 = vmatpush.bf16.msra.mxu0 %v1943
    %2529 = vmatpush.bf16.msra.mxu0 %v1935
    %2530 = vmatpush.bf16.msra.mxu0 %v1927
    %2531 = vmatpush.bf16.msra.mxu0 %v1919
    %2532 = vmatpush.bf16.msra.mxu0 %v1911
    %2533 = vmatmul.bf16.gmra.mxu0 %v799
    %v2534 = vpop.f32.mrf.mxu0
    %v2535 = vadd.f32 %v2522, %v2534
    %v2536 = vpop.f32.mrf.mxu0
    %2537 = vdwg.mxu0
    %2538 = vmatpush.bf16.msra.mxu0 %v2031
    %2539 = vmatpush.bf16.msra.mxu0 %v2023
    %2540 = vmatpush.bf16.msra.mxu0 %v2015
    %2541 = vmatpush.bf16.msra.mxu0 %v2007
    %2542 = vmatpush.bf16.msra.mxu0 %v1999
    %2543 = vmatpush.bf16.msra.mxu0 %v1991
    %2544 = vmatpush.bf16.msra.mxu0 %v1983
    %2545 = vmatpush.bf16.msra.mxu0 %v1975
    %2546 = vmatmul.bf16.gmra.mxu0 %v800
    %v2547 = vpop.f32.mrf.mxu0
    %v2548 = vadd.f32 %v2535, %v2547
    %v2549 = vpop.f32.mrf.mxu0
    %2550 = vdwg.mxu0
    %2551 = vmatpush.bf16.msra.mxu0 %v2095
    %2552 = vmatpush.bf16.msra.mxu0 %v2087
    %2553 = vmatpush.bf16.msra.mxu0 %v2079
    %2554 = vmatpush.bf16.msra.mxu0 %v2071
    %2555 = vmatpush.bf16.msra.mxu0 %v2063
    %2556 = vmatpush.bf16.msra.mxu0 %v2055
    %2557 = vmatpush.bf16.msra.mxu0 %v2047
    %2558 = vmatpush.bf16.msra.mxu0 %v2039
    %2559 = vmatmul.bf16.gmra.mxu0 %v801
    %v2560 = vpop.f32.mrf.mxu0
    %v2561 = vadd.f32 %v2548, %v2560
    %v2562 = vpop.f32.mrf.mxu0
    %2563 = vdwg.mxu0
    %2564 = vmatpush.bf16.msra.mxu0 %v1904
    %2565 = vmatpush.bf16.msra.mxu0 %v1896
    %2566 = vmatpush.bf16.msra.mxu0 %v1888
    %2567 = vmatpush.bf16.msra.mxu0 %v1880
    %2568 = vmatpush.bf16.msra.mxu0 %v1872
    %2569 = vmatpush.bf16.msra.mxu0 %v1864
    %2570 = vmatpush.bf16.msra.mxu0 %v1856
    %2571 = vmatpush.bf16.msra.mxu0 %v1848
    %2572 = vmatmul.bf16.gmra.mxu0 %v798
    %v2573 = vpop.f32.mrf.mxu0
    %v2574 = vadd.f32 %v1064, %v2573
    %v2575 = vpop.f32.mrf.mxu0
    %2576 = vdwg.mxu0
    %2577 = vmatpush.bf16.msra.mxu0 %v1968
    %2578 = vmatpush.bf16.msra.mxu0 %v1960
    %2579 = vmatpush.bf16.msra.mxu0 %v1952
    %2580 = vmatpush.bf16.msra.mxu0 %v1944
    %2581 = vmatpush.bf16.msra.mxu0 %v1936
    %2582 = vmatpush.bf16.msra.mxu0 %v1928
    %2583 = vmatpush.bf16.msra.mxu0 %v1920
    %2584 = vmatpush.bf16.msra.mxu0 %v1912
    %2585 = vmatmul.bf16.gmra.mxu0 %v799
    %v2586 = vpop.f32.mrf.mxu0
    %v2587 = vadd.f32 %v2574, %v2586
    %v2588 = vpop.f32.mrf.mxu0
    %2589 = vdwg.mxu0
    %2590 = vmatpush.bf16.msra.mxu0 %v2032
    %2591 = vmatpush.bf16.msra.mxu0 %v2024
    %2592 = vmatpush.bf16.msra.mxu0 %v2016
    %2593 = vmatpush.bf16.msra.mxu0 %v2008
    %2594 = vmatpush.bf16.msra.mxu0 %v2000
    %2595 = vmatpush.bf16.msra.mxu0 %v1992
    %2596 = vmatpush.bf16.msra.mxu0 %v1984
    %2597 = vmatpush.bf16.msra.mxu0 %v1976
    %2598 = vmatmul.bf16.gmra.mxu0 %v800
    %v2599 = vpop.f32.mrf.mxu0
    %v2600 = vadd.f32 %v2587, %v2599
    %v2601 = vpop.f32.mrf.mxu0
    %2602 = vdwg.mxu0
    %2603 = vmatpush.bf16.msra.mxu0 %v2096
    %2604 = vmatpush.bf16.msra.mxu0 %v2088
    %2605 = vmatpush.bf16.msra.mxu0 %v2080
    %2606 = vmatpush.bf16.msra.mxu0 %v2072
    %2607 = vmatpush.bf16.msra.mxu0 %v2064
    %2608 = vmatpush.bf16.msra.mxu0 %v2056
    %2609 = vmatpush.bf16.msra.mxu0 %v2048
    %2610 = vmatpush.bf16.msra.mxu0 %v2040
    %2611 = vmatmul.bf16.gmra.mxu0 %v801
    %v2612 = vpop.f32.mrf.mxu0
    %v2613 = vadd.f32 %v2600, %v2612
    %v2614 = vpop.f32.mrf.mxu0
    %2615 = vdwg.mxu0
    %2616 = vmatpush.bf16.msra.mxu0 %v1905
    %2617 = vmatpush.bf16.msra.mxu0 %v1897
    %2618 = vmatpush.bf16.msra.mxu0 %v1889
    %2619 = vmatpush.bf16.msra.mxu0 %v1881
    %2620 = vmatpush.bf16.msra.mxu0 %v1873
    %2621 = vmatpush.bf16.msra.mxu0 %v1865
    %2622 = vmatpush.bf16.msra.mxu0 %v1857
    %2623 = vmatpush.bf16.msra.mxu0 %v1849
    %2624 = vmatmul.bf16.gmra.mxu0 %v798
    %v2625 = vpop.f32.mrf.mxu0
    %v2626 = vadd.f32 %v1065, %v2625
    %v2627 = vpop.f32.mrf.mxu0
    %2628 = vdwg.mxu0
    %2629 = vmatpush.bf16.msra.mxu0 %v1969
    %2630 = vmatpush.bf16.msra.mxu0 %v1961
    %2631 = vmatpush.bf16.msra.mxu0 %v1953
    %2632 = vmatpush.bf16.msra.mxu0 %v1945
    %2633 = vmatpush.bf16.msra.mxu0 %v1937
    %2634 = vmatpush.bf16.msra.mxu0 %v1929
    %2635 = vmatpush.bf16.msra.mxu0 %v1921
    %2636 = vmatpush.bf16.msra.mxu0 %v1913
    %2637 = vmatmul.bf16.gmra.mxu0 %v799
    %v2638 = vpop.f32.mrf.mxu0
    %v2639 = vadd.f32 %v2626, %v2638
    %v2640 = vpop.f32.mrf.mxu0
    %2641 = vdwg.mxu0
    %2642 = vmatpush.bf16.msra.mxu0 %v2033
    %2643 = vmatpush.bf16.msra.mxu0 %v2025
    %2644 = vmatpush.bf16.msra.mxu0 %v2017
    %2645 = vmatpush.bf16.msra.mxu0 %v2009
    %2646 = vmatpush.bf16.msra.mxu0 %v2001
    %2647 = vmatpush.bf16.msra.mxu0 %v1993
    %2648 = vmatpush.bf16.msra.mxu0 %v1985
    %2649 = vmatpush.bf16.msra.mxu0 %v1977
    %2650 = vmatmul.bf16.gmra.mxu0 %v800
    %v2651 = vpop.f32.mrf.mxu0
    %v2652 = vadd.f32 %v2639, %v2651
    %v2653 = vpop.f32.mrf.mxu0
    %2654 = vdwg.mxu0
    %2655 = vmatpush.bf16.msra.mxu0 %v2097
    %2656 = vmatpush.bf16.msra.mxu0 %v2089
    %2657 = vmatpush.bf16.msra.mxu0 %v2081
    %2658 = vmatpush.bf16.msra.mxu0 %v2073
    %2659 = vmatpush.bf16.msra.mxu0 %v2065
    %2660 = vmatpush.bf16.msra.mxu0 %v2057
    %2661 = vmatpush.bf16.msra.mxu0 %v2049
    %2662 = vmatpush.bf16.msra.mxu0 %v2041
    %2663 = vmatmul.bf16.gmra.mxu0 %v801
    %v2664 = vpop.f32.mrf.mxu0
    %v2665 = vadd.f32 %v2652, %v2664
    %v2666 = vpop.f32.mrf.mxu0
    %2667 = vdwg.mxu0
    %2668 = vmatpush.bf16.msra.mxu0 %v1906
    %2669 = vmatpush.bf16.msra.mxu0 %v1898
    %2670 = vmatpush.bf16.msra.mxu0 %v1890
    %2671 = vmatpush.bf16.msra.mxu0 %v1882
    %2672 = vmatpush.bf16.msra.mxu0 %v1874
    %2673 = vmatpush.bf16.msra.mxu0 %v1866
    %2674 = vmatpush.bf16.msra.mxu0 %v1858
    %2675 = vmatpush.bf16.msra.mxu0 %v1850
    %2676 = vmatmul.bf16.gmra.mxu0 %v798
    %v2677 = vpop.f32.mrf.mxu0
    %v2678 = vadd.f32 %v1066, %v2677
    %v2679 = vpop.f32.mrf.mxu0
    %2680 = vdwg.mxu0
    %2681 = vmatpush.bf16.msra.mxu0 %v1970
    %2682 = vmatpush.bf16.msra.mxu0 %v1962
    %2683 = vmatpush.bf16.msra.mxu0 %v1954
    %2684 = vmatpush.bf16.msra.mxu0 %v1946
    %2685 = vmatpush.bf16.msra.mxu0 %v1938
    %2686 = vmatpush.bf16.msra.mxu0 %v1930
    %2687 = vmatpush.bf16.msra.mxu0 %v1922
    %2688 = vmatpush.bf16.msra.mxu0 %v1914
    %2689 = vmatmul.bf16.gmra.mxu0 %v799
    %v2690 = vpop.f32.mrf.mxu0
    %v2691 = vadd.f32 %v2678, %v2690
    %v2692 = vpop.f32.mrf.mxu0
    %2693 = vdwg.mxu0
    %2694 = vmatpush.bf16.msra.mxu0 %v2034
    %2695 = vmatpush.bf16.msra.mxu0 %v2026
    %2696 = vmatpush.bf16.msra.mxu0 %v2018
    %2697 = vmatpush.bf16.msra.mxu0 %v2010
    %2698 = vmatpush.bf16.msra.mxu0 %v2002
    %2699 = vmatpush.bf16.msra.mxu0 %v1994
    %2700 = vmatpush.bf16.msra.mxu0 %v1986
    %2701 = vmatpush.bf16.msra.mxu0 %v1978
    %2702 = vmatmul.bf16.gmra.mxu0 %v800
    %v2703 = vpop.f32.mrf.mxu0
    %v2704 = vadd.f32 %v2691, %v2703
    %v2705 = vpop.f32.mrf.mxu0
    %2706 = vdwg.mxu0
    %2707 = vmatpush.bf16.msra.mxu0 %v2098
    %2708 = vmatpush.bf16.msra.mxu0 %v2090
    %2709 = vmatpush.bf16.msra.mxu0 %v2082
    %2710 = vmatpush.bf16.msra.mxu0 %v2074
    %2711 = vmatpush.bf16.msra.mxu0 %v2066
    %2712 = vmatpush.bf16.msra.mxu0 %v2058
    %2713 = vmatpush.bf16.msra.mxu0 %v2050
    %2714 = vmatpush.bf16.msra.mxu0 %v2042
    %2715 = vmatmul.bf16.gmra.mxu0 %v801
    %v2716 = vpop.f32.mrf.mxu0
    %v2717 = vadd.f32 %v2704, %v2716
    %v2718 = vpop.f32.mrf.mxu0
    %2719 = vdwg.mxu0
    %2720 = vmatpush.bf16.msra.mxu0 %v1907
    %2721 = vmatpush.bf16.msra.mxu0 %v1899
    %2722 = vmatpush.bf16.msra.mxu0 %v1891
    %2723 = vmatpush.bf16.msra.mxu0 %v1883
    %2724 = vmatpush.bf16.msra.mxu0 %v1875
    %2725 = vmatpush.bf16.msra.mxu0 %v1867
    %2726 = vmatpush.bf16.msra.mxu0 %v1859
    %2727 = vmatpush.bf16.msra.mxu0 %v1851
    %2728 = vmatmul.bf16.gmra.mxu0 %v798
    %v2729 = vpop.f32.mrf.mxu0
    %v2730 = vadd.f32 %v1067, %v2729
    %v2731 = vpop.f32.mrf.mxu0
    %2732 = vdwg.mxu0
    %2733 = vmatpush.bf16.msra.mxu0 %v1971
    %2734 = vmatpush.bf16.msra.mxu0 %v1963
    %2735 = vmatpush.bf16.msra.mxu0 %v1955
    %2736 = vmatpush.bf16.msra.mxu0 %v1947
    %2737 = vmatpush.bf16.msra.mxu0 %v1939
    %2738 = vmatpush.bf16.msra.mxu0 %v1931
    %2739 = vmatpush.bf16.msra.mxu0 %v1923
    %2740 = vmatpush.bf16.msra.mxu0 %v1915
    %2741 = vmatmul.bf16.gmra.mxu0 %v799
    %v2742 = vpop.f32.mrf.mxu0
    %v2743 = vadd.f32 %v2730, %v2742
    %v2744 = vpop.f32.mrf.mxu0
    %2745 = vdwg.mxu0
    %2746 = vmatpush.bf16.msra.mxu0 %v2035
    %2747 = vmatpush.bf16.msra.mxu0 %v2027
    %2748 = vmatpush.bf16.msra.mxu0 %v2019
    %2749 = vmatpush.bf16.msra.mxu0 %v2011
    %2750 = vmatpush.bf16.msra.mxu0 %v2003
    %2751 = vmatpush.bf16.msra.mxu0 %v1995
    %2752 = vmatpush.bf16.msra.mxu0 %v1987
    %2753 = vmatpush.bf16.msra.mxu0 %v1979
    %2754 = vmatmul.bf16.gmra.mxu0 %v800
    %v2755 = vpop.f32.mrf.mxu0
    %v2756 = vadd.f32 %v2743, %v2755
    %v2757 = vpop.f32.mrf.mxu0
    %2758 = vdwg.mxu0
    %2759 = vmatpush.bf16.msra.mxu0 %v2099
    %2760 = vmatpush.bf16.msra.mxu0 %v2091
    %2761 = vmatpush.bf16.msra.mxu0 %v2083
    %2762 = vmatpush.bf16.msra.mxu0 %v2075
    %2763 = vmatpush.bf16.msra.mxu0 %v2067
    %2764 = vmatpush.bf16.msra.mxu0 %v2059
    %2765 = vmatpush.bf16.msra.mxu0 %v2051
    %2766 = vmatpush.bf16.msra.mxu0 %v2043
    %2767 = vmatmul.bf16.gmra.mxu0 %v801
    %v2768 = vpop.f32.mrf.mxu0
    %v2769 = vadd.f32 %v2756, %v2768
    %v2770 = vpop.f32.mrf.mxu0
    %2771 = vdwg.mxu0
    %v2772 = vmax.f32 %v2405, 0.0
    %v2773 = vmax.f32 %v2457, 0.0
    %v2774 = vmax.f32 %v2509, 0.0
    %v2775 = vmax.f32 %v2561, 0.0
    %v2776 = vmax.f32 %v2613, 0.0
    %v2777 = vmax.f32 %v2665, 0.0
    %v2778 = vmax.f32 %v2717, 0.0
    %v2779 = vmax.f32 %v2769, 0.0
    %v2780 = vpack.c.bf16 %v2772, %v2772
    %v2781 = vpack.c.bf16 %v2773, %v2773
    %v2782 = vpack.c.bf16 %v2774, %v2774
    %v2783 = vpack.c.bf16 %v2775, %v2775
    %v2784 = vpack.c.bf16 %v2776, %v2776
    %v2785 = vpack.c.bf16 %v2777, %v2777
    %v2786 = vpack.c.bf16 %v2778, %v2778
    %v2787 = vpack.c.bf16 %v2779, %v2779
    %v2788 = vld [vmem:[#allocation14] sm:$0xff]
    %v2789 = vld [vmem:[#allocation14 + $0x8] sm:$0xff]
    %v2790 = vld [vmem:[#allocation14 + $0x10] sm:$0xff]
    %v2791 = vld [vmem:[#allocation14 + $0x18] sm:$0xf]
    %v2792 = vld [vmem:[#allocation14 + $0x1c] sm:$0xff]
    %v2793 = vld [vmem:[#allocation14 + $0x24] sm:$0xff]
    %v2794 = vld [vmem:[#allocation14 + $0x2c] sm:$0xff]
    %v2795 = vld [vmem:[#allocation14 + $0x34] sm:$0xf]
    %v2796 = vld [vmem:[#allocation14 + $0x38] sm:$0xff]
    %v2797 = vld [vmem:[#allocation14 + $0x40] sm:$0xff]
    %v2798 = vld [vmem:[#allocation14 + $0x48] sm:$0xff]
    %v2799 = vld [vmem:[#allocation14 + $0x50] sm:$0xf]
    %v2800 = vld [vmem:[#allocation14 + $0x54] sm:$0xff]
    %v2801 = vld [vmem:[#allocation14 + $0x5c] sm:$0xff]
    %v2802 = vld [vmem:[#allocation14 + $0x64] sm:$0xff]
    %v2803 = vld [vmem:[#allocation14 + $0x6c] sm:$0xf]
    %v2804 = vld [vmem:[#allocation14 + $0x70] sm:$0xff]
    %v2805 = vld [vmem:[#allocation14 + $0x78] sm:$0xff]
    %v2806 = vld [vmem:[#allocation14 + $0x80] sm:$0xff]
    %v2807 = vld [vmem:[#allocation14 + $0x88] sm:$0xf]
    %v2808 = vld [vmem:[#allocation14 + $0x8c] sm:$0xff]
    %v2809 = vld [vmem:[#allocation14 + $0x94] sm:$0xff]
    %v2810 = vld [vmem:[#allocation14 + $0x9c] sm:$0xff]
    %v2811 = vld [vmem:[#allocation14 + $0xa4] sm:$0xf]
    %v2812 = vld [vmem:[#allocation14 + $0xa8] sm:$0xff]
    %v2813 = vld [vmem:[#allocation14 + $0xb0] sm:$0xff]
    %v2814 = vld [vmem:[#allocation14 + $0xb8] sm:$0xff]
    %v2815 = vld [vmem:[#allocation14 + $0xc0] sm:$0xf]
    %v2816 = vld [vmem:[#allocation14 + $0xc4] sm:$0xff]
    %v2817 = vld [vmem:[#allocation14 + $0xcc] sm:$0xff]
    %v2818 = vld [vmem:[#allocation14 + $0xd4] sm:$0xff]
    %v2819 = vld [vmem:[#allocation14 + $0xdc] sm:$0xf]
    %v2820 = vld [vmem:[#allocation14 + $0xe0] sm:$0xff]
    %v2821 = vld [vmem:[#allocation14 + $0xe8] sm:$0xff]
    %v2822 = vld [vmem:[#allocation14 + $0xf0] sm:$0xff]
    %v2823 = vld [vmem:[#allocation14 + $0xf8] sm:$0xf]
    %v2824 = vld [vmem:[#allocation14 + $0xfc] sm:$0xff]
    %v2825 = vld [vmem:[#allocation14 + $0x104] sm:$0xff]
    %v2826 = vld [vmem:[#allocation14 + $0x10c] sm:$0xff]
    %v2827 = vld [vmem:[#allocation14 + $0x114] sm:$0xf]
    %v2828 = vld [vmem:[#allocation14 + $0x118] sm:$0xff]
    %v2829 = vld [vmem:[#allocation14 + $0x120] sm:$0xff]
    %v2830 = vld [vmem:[#allocation14 + $0x128] sm:$0xff]
    %v2831 = vld [vmem:[#allocation14 + $0x130] sm:$0xf]
    %v2832 = vld [vmem:[#allocation14 + $0x134] sm:$0xff]
    %v2833 = vld [vmem:[#allocation14 + $0x13c] sm:$0xff]
    %v2834 = vld [vmem:[#allocation14 + $0x144] sm:$0xff]
    %v2835 = vld [vmem:[#allocation14 + $0x14c] sm:$0xf]
    %v2836 = vld [vmem:[#allocation14 + $0x150] sm:$0xff]
    %v2837 = vld [vmem:[#allocation14 + $0x158] sm:$0xff]
    %v2838 = vld [vmem:[#allocation14 + $0x160] sm:$0xff]
    %v2839 = vld [vmem:[#allocation14 + $0x168] sm:$0xf]
    %v2840 = vld [vmem:[#allocation14 + $0x16c] sm:$0xff]
    %v2841 = vld [vmem:[#allocation14 + $0x174] sm:$0xff]
    %v2842 = vld [vmem:[#allocation14 + $0x17c] sm:$0xff]
    %v2843 = vld [vmem:[#allocation14 + $0x184] sm:$0xf]
    %v2844 = vld [vmem:[#allocation14 + $0x188] sm:$0xff]
    %v2845 = vld [vmem:[#allocation14 + $0x190] sm:$0xff]
    %v2846 = vld [vmem:[#allocation14 + $0x198] sm:$0xff]
    %v2847 = vld [vmem:[#allocation14 + $0x1a0] sm:$0xf]
    %v2848 = vld [vmem:[#allocation14 + $0x1a4] sm:$0xff]
    %v2849 = vld [vmem:[#allocation14 + $0x1ac] sm:$0xff]
    %v2850 = vld [vmem:[#allocation14 + $0x1b4] sm:$0xff]
    %v2851 = vld [vmem:[#allocation14 + $0x1bc] sm:$0xf]
    %v2852 = vld [vmem:[#allocation14 + $0x1c0] sm:$0xff]
    %v2853 = vld [vmem:[#allocation14 + $0x1c8] sm:$0xff]
    %v2854 = vld [vmem:[#allocation14 + $0x1d0] sm:$0xff]
    %v2855 = vld [vmem:[#allocation14 + $0x1d8] sm:$0xf]
    %v2856 = vld [vmem:[#allocation14 + $0x1dc] sm:$0xff]
    %v2857 = vld [vmem:[#allocation14 + $0x1e4] sm:$0xff]
    %v2858 = vld [vmem:[#allocation14 + $0x1ec] sm:$0xff]
    %v2859 = vld [vmem:[#allocation14 + $0x1f4] sm:$0xf]
    %v2860 = vld [vmem:[#allocation14 + $0x1f8] sm:$0xff]
    %v2861 = vld [vmem:[#allocation14 + $0x200] sm:$0xff]
    %v2862 = vld [vmem:[#allocation14 + $0x208] sm:$0xff]
    %v2863 = vld [vmem:[#allocation14 + $0x210] sm:$0xf]
    %v2864 = vld [vmem:[#allocation14 + $0x214] sm:$0xff]
    %v2865 = vld [vmem:[#allocation14 + $0x21c] sm:$0xff]
    %v2866 = vld [vmem:[#allocation14 + $0x224] sm:$0xff]
    %v2867 = vld [vmem:[#allocation14 + $0x22c] sm:$0xf]
    %v2868 = vld [vmem:[#allocation14 + $0x230] sm:$0xff]
    %v2869 = vld [vmem:[#allocation14 + $0x238] sm:$0xff]
    %v2870 = vld [vmem:[#allocation14 + $0x240] sm:$0xff]
    %v2871 = vld [vmem:[#allocation14 + $0x248] sm:$0xf]
    %v2872 = vld [vmem:[#allocation14 + $0x24c] sm:$0xff]
    %v2873 = vld [vmem:[#allocation14 + $0x254] sm:$0xff]
    %v2874 = vld [vmem:[#allocation14 + $0x25c] sm:$0xff]
    %v2875 = vld [vmem:[#allocation14 + $0x264] sm:$0xf]
    %v2876 = vld [vmem:[#allocation14 + $0x268] sm:$0xff]
    %v2877 = vld [vmem:[#allocation14 + $0x270] sm:$0xff]
    %v2878 = vld [vmem:[#allocation14 + $0x278] sm:$0xff]
    %v2879 = vld [vmem:[#allocation14 + $0x280] sm:$0xf]
    %v2880 = vld [vmem:[#allocation14 + $0x284] sm:$0xff]
    %v2881 = vld [vmem:[#allocation14 + $0x28c] sm:$0xff]
    %v2882 = vld [vmem:[#allocation14 + $0x294] sm:$0xff]
    %v2883 = vld [vmem:[#allocation14 + $0x29c] sm:$0xf]
    %v2884 = vld [vmem:[#allocation14 + $0x2a0] sm:$0xff]
    %v2885 = vld [vmem:[#allocation14 + $0x2a8] sm:$0xff]
    %v2886 = vld [vmem:[#allocation14 + $0x2b0] sm:$0xff]
    %v2887 = vld [vmem:[#allocation14 + $0x2b8] sm:$0xf]
    %v2888 = vld [vmem:[#allocation14 + $0x2bc] sm:$0xff]
    %v2889 = vld [vmem:[#allocation14 + $0x2c4] sm:$0xff]
    %v2890 = vld [vmem:[#allocation14 + $0x2cc] sm:$0xff]
    %v2891 = vld [vmem:[#allocation14 + $0x2d4] sm:$0xf]
    %v2892 = vld [vmem:[#allocation14 + $0x2d8] sm:$0xff]
    %v2893 = vld [vmem:[#allocation14 + $0x2e0] sm:$0xff]
    %v2894 = vld [vmem:[#allocation14 + $0x2e8] sm:$0xff]
    %v2895 = vld [vmem:[#allocation14 + $0x2f0] sm:$0xf]
    %v2896 = vld [vmem:[#allocation14 + $0x2f4] sm:$0xff]
    %v2897 = vld [vmem:[#allocation14 + $0x2fc] sm:$0xff]
    %v2898 = vld [vmem:[#allocation14 + $0x304] sm:$0xff]
    %v2899 = vld [vmem:[#allocation14 + $0x30c] sm:$0xf]
    %v2900 = vld [vmem:[#allocation14 + $0x310] sm:$0xff]
    %v2901 = vld [vmem:[#allocation14 + $0x318] sm:$0xff]
    %v2902 = vld [vmem:[#allocation14 + $0x320] sm:$0xff]
    %v2903 = vld [vmem:[#allocation14 + $0x328] sm:$0xf]
    %v2904 = vld [vmem:[#allocation14 + $0x32c] sm:$0xff]
    %v2905 = vld [vmem:[#allocation14 + $0x334] sm:$0xff]
    %v2906 = vld [vmem:[#allocation14 + $0x33c] sm:$0xff]
    %v2907 = vld [vmem:[#allocation14 + $0x344] sm:$0xf]
    %v2908 = vld [vmem:[#allocation14 + $0x348] sm:$0xff]
    %v2909 = vld [vmem:[#allocation14 + $0x350] sm:$0xff]
    %v2910 = vld [vmem:[#allocation14 + $0x358] sm:$0xff]
    %v2911 = vld [vmem:[#allocation14 + $0x360] sm:$0xf]
    %v2912 = vld [vmem:[#allocation14 + $0x364] sm:$0xff]
    %v2913 = vld [vmem:[#allocation14 + $0x36c] sm:$0xff]
    %v2914 = vld [vmem:[#allocation14 + $0x374] sm:$0xff]
    %v2915 = vld [vmem:[#allocation14 + $0x37c] sm:$0xf]
    %v2916 = vld [vmem:[#allocation14 + $0x380] sm:$0xff]
    %v2917 = vld [vmem:[#allocation14 + $0x388] sm:$0xff]
    %v2918 = vld [vmem:[#allocation14 + $0x390] sm:$0xff]
    %v2919 = vld [vmem:[#allocation14 + $0x398] sm:$0xf]
    %v2920 = vld [vmem:[#allocation14 + $0x39c] sm:$0xff]
    %v2921 = vld [vmem:[#allocation14 + $0x3a4] sm:$0xff]
    %v2922 = vld [vmem:[#allocation14 + $0x3ac] sm:$0xff]
    %v2923 = vld [vmem:[#allocation14 + $0x3b4] sm:$0xf]
    %v2924 = vld [vmem:[#allocation14 + $0x3b8] sm:$0xff]
    %v2925 = vld [vmem:[#allocation14 + $0x3c0] sm:$0xff]
    %v2926 = vld [vmem:[#allocation14 + $0x3c8] sm:$0xff]
    %v2927 = vld [vmem:[#allocation14 + $0x3d0] sm:$0xf]
    %v2928 = vld [vmem:[#allocation14 + $0x3d4] sm:$0xff]
    %v2929 = vld [vmem:[#allocation14 + $0x3dc] sm:$0xff]
    %v2930 = vld [vmem:[#allocation14 + $0x3e4] sm:$0xff]
    %v2931 = vld [vmem:[#allocation14 + $0x3ec] sm:$0xf]
    %v2932 = vld [vmem:[#allocation14 + $0x3f0] sm:$0xff]
    %v2933 = vld [vmem:[#allocation14 + $0x3f8] sm:$0xff]
    %v2934 = vld [vmem:[#allocation14 + $0x400] sm:$0xff]
    %v2935 = vld [vmem:[#allocation14 + $0x408] sm:$0xf]
    %v2936 = vld [vmem:[#allocation14 + $0x40c] sm:$0xff]
    %v2937 = vld [vmem:[#allocation14 + $0x414] sm:$0xff]
    %v2938 = vld [vmem:[#allocation14 + $0x41c] sm:$0xff]
    %v2939 = vld [vmem:[#allocation14 + $0x424] sm:$0xf]
    %v2940 = vld [vmem:[#allocation14 + $0x428] sm:$0xff]
    %v2941 = vld [vmem:[#allocation14 + $0x430] sm:$0xff]
    %v2942 = vld [vmem:[#allocation14 + $0x438] sm:$0xff]
    %v2943 = vld [vmem:[#allocation14 + $0x440] sm:$0xf]
    %v2944 = vld [vmem:[#allocation14 + $0x444] sm:$0xff]
    %v2945 = vld [vmem:[#allocation14 + $0x44c] sm:$0xff]
    %v2946 = vld [vmem:[#allocation14 + $0x454] sm:$0xff]
    %v2947 = vld [vmem:[#allocation14 + $0x45c] sm:$0xf]
    %v2948 = vld [vmem:[#allocation14 + $0x460] sm:$0xff]
    %v2949 = vld [vmem:[#allocation14 + $0x468] sm:$0xff]
    %v2950 = vld [vmem:[#allocation14 + $0x470] sm:$0xff]
    %v2951 = vld [vmem:[#allocation14 + $0x478] sm:$0xf]
    %v2952 = vld [vmem:[#allocation14 + $0x47c] sm:$0xff]
    %v2953 = vld [vmem:[#allocation14 + $0x484] sm:$0xff]
    %v2954 = vld [vmem:[#allocation14 + $0x48c] sm:$0xff]
    %v2955 = vld [vmem:[#allocation14 + $0x494] sm:$0xf]
    %v2956 = vld [vmem:[#allocation14 + $0x498] sm:$0xff]
    %v2957 = vld [vmem:[#allocation14 + $0x4a0] sm:$0xff]
    %v2958 = vld [vmem:[#allocation14 + $0x4a8] sm:$0xff]
    %v2959 = vld [vmem:[#allocation14 + $0x4b0] sm:$0xf]
    %v2960 = vld [vmem:[#allocation14 + $0x4b4] sm:$0xff]
    %v2961 = vld [vmem:[#allocation14 + $0x4bc] sm:$0xff]
    %v2962 = vld [vmem:[#allocation14 + $0x4c4] sm:$0xff]
    %v2963 = vld [vmem:[#allocation14 + $0x4cc] sm:$0xf]
    %v2964 = vld [vmem:[#allocation14 + $0x4d0] sm:$0xff]
    %v2965 = vld [vmem:[#allocation14 + $0x4d8] sm:$0xff]
    %v2966 = vld [vmem:[#allocation14 + $0x4e0] sm:$0xff]
    %v2967 = vld [vmem:[#allocation14 + $0x4e8] sm:$0xf]
    %v2968 = vld [vmem:[#allocation14 + $0x4ec] sm:$0xff]
    %v2969 = vld [vmem:[#allocation14 + $0x4f4] sm:$0xff]
    %v2970 = vld [vmem:[#allocation14 + $0x4fc] sm:$0xff]
    %v2971 = vld [vmem:[#allocation14 + $0x504] sm:$0xf]
    %v2972 = vld [vmem:[#allocation14 + $0x508] sm:$0xff]
    %v2973 = vld [vmem:[#allocation14 + $0x510] sm:$0xff]
    %v2974 = vld [vmem:[#allocation14 + $0x518] sm:$0xff]
    %v2975 = vld [vmem:[#allocation14 + $0x520] sm:$0xf]
    %v2976 = vld [vmem:[#allocation14 + $0x524] sm:$0xff]
    %v2977 = vld [vmem:[#allocation14 + $0x52c] sm:$0xff]
    %v2978 = vld [vmem:[#allocation14 + $0x534] sm:$0xff]
    %v2979 = vld [vmem:[#allocation14 + $0x53c] sm:$0xf]
    %v2980 = vld [vmem:[#allocation14 + $0x540] sm:$0xff]
    %v2981 = vld [vmem:[#allocation14 + $0x548] sm:$0xff]
    %v2982 = vld [vmem:[#allocation14 + $0x550] sm:$0xff]
    %v2983 = vld [vmem:[#allocation14 + $0x558] sm:$0xf]
    %v2984 = vld [vmem:[#allocation14 + $0x55c] sm:$0xff]
    %v2985 = vld [vmem:[#allocation14 + $0x564] sm:$0xff]
    %v2986 = vld [vmem:[#allocation14 + $0x56c] sm:$0xff]
    %v2987 = vld [vmem:[#allocation14 + $0x574] sm:$0xf]
    %v2988 = vld [vmem:[#allocation14 + $0x578] sm:$0xff]
    %v2989 = vld [vmem:[#allocation14 + $0x580] sm:$0xff]
    %v2990 = vld [vmem:[#allocation14 + $0x588] sm:$0xff]
    %v2991 = vld [vmem:[#allocation14 + $0x590] sm:$0xf]
    %v2992 = vld [vmem:[#allocation14 + $0x594] sm:$0xff]
    %v2993 = vld [vmem:[#allocation14 + $0x59c] sm:$0xff]
    %v2994 = vld [vmem:[#allocation14 + $0x5a4] sm:$0xff]
    %v2995 = vld [vmem:[#allocation14 + $0x5ac] sm:$0xf]
    %v2996 = vld [vmem:[#allocation14 + $0x5b0] sm:$0xff]
    %v2997 = vld [vmem:[#allocation14 + $0x5b8] sm:$0xff]
    %v2998 = vld [vmem:[#allocation14 + $0x5c0] sm:$0xff]
    %v2999 = vld [vmem:[#allocation14 + $0x5c8] sm:$0xf]
    %v3000 = vld [vmem:[#allocation14 + $0x5cc] sm:$0xff]
    %v3001 = vld [vmem:[#allocation14 + $0x5d4] sm:$0xff]
    %v3002 = vld [vmem:[#allocation14 + $0x5dc] sm:$0xff]
    %v3003 = vld [vmem:[#allocation14 + $0x5e4] sm:$0xf]
    %v3004 = vld [vmem:[#allocation14 + $0x5e8] sm:$0xff]
    %v3005 = vld [vmem:[#allocation14 + $0x5f0] sm:$0xff]
    %v3006 = vld [vmem:[#allocation14 + $0x5f8] sm:$0xff]
    %v3007 = vld [vmem:[#allocation14 + $0x600] sm:$0xf]
    %v3008 = vld [vmem:[#allocation14 + $0x604] sm:$0xff]
    %v3009 = vld [vmem:[#allocation14 + $0x60c] sm:$0xff]
    %v3010 = vld [vmem:[#allocation14 + $0x614] sm:$0xff]
    %v3011 = vld [vmem:[#allocation14 + $0x61c] sm:$0xf]
    %v3012 = vld [vmem:[#allocation14 + $0x620] sm:$0xff]
    %v3013 = vld [vmem:[#allocation14 + $0x628] sm:$0xff]
    %v3014 = vld [vmem:[#allocation14 + $0x630] sm:$0xff]
    %v3015 = vld [vmem:[#allocation14 + $0x638] sm:$0xf]
    %v3016 = vld [vmem:[#allocation14 + $0x63c] sm:$0xff]
    %v3017 = vld [vmem:[#allocation14 + $0x644] sm:$0xff]
    %v3018 = vld [vmem:[#allocation14 + $0x64c] sm:$0xff]
    %v3019 = vld [vmem:[#allocation14 + $0x654] sm:$0xf]
    %v3020 = vld [vmem:[#allocation14 + $0x658] sm:$0xff]
    %v3021 = vld [vmem:[#allocation14 + $0x660] sm:$0xff]
    %v3022 = vld [vmem:[#allocation14 + $0x668] sm:$0xff]
    %v3023 = vld [vmem:[#allocation14 + $0x670] sm:$0xf]
    %v3024 = vld [vmem:[#allocation14 + $0x674] sm:$0xff]
    %v3025 = vld [vmem:[#allocation14 + $0x67c] sm:$0xff]
    %v3026 = vld [vmem:[#allocation14 + $0x684] sm:$0xff]
    %v3027 = vld [vmem:[#allocation14 + $0x68c] sm:$0xf]
    %v3028 = vld [vmem:[#allocation14 + $0x690] sm:$0xff]
    %v3029 = vld [vmem:[#allocation14 + $0x698] sm:$0xff]
    %v3030 = vld [vmem:[#allocation14 + $0x6a0] sm:$0xff]
    %v3031 = vld [vmem:[#allocation14 + $0x6a8] sm:$0xf]
    %v3032 = vld [vmem:[#allocation14 + $0x6ac] sm:$0xff]
    %v3033 = vld [vmem:[#allocation14 + $0x6b4] sm:$0xff]
    %v3034 = vld [vmem:[#allocation14 + $0x6bc] sm:$0xff]
    %v3035 = vld [vmem:[#allocation14 + $0x6c4] sm:$0xf]
    %v3036 = vld [vmem:[#allocation14 + $0x6c8] sm:$0xff]
    %v3037 = vld [vmem:[#allocation14 + $0x6d0] sm:$0xff]
    %v3038 = vld [vmem:[#allocation14 + $0x6d8] sm:$0xff]
    %v3039 = vld [vmem:[#allocation14 + $0x6e0] sm:$0xf]
    %v3040 = vld [vmem:[#allocation14 + $0x6e4] sm:$0xff]
    %v3041 = vld [vmem:[#allocation14 + $0x6ec] sm:$0xff]
    %v3042 = vld [vmem:[#allocation14 + $0x6f4] sm:$0xff]
    %v3043 = vld [vmem:[#allocation14 + $0x6fc] sm:$0xf]
    %v3044 = vld [vmem:[#allocation14 + $0x700] sm:$0xff]
    %v3045 = vld [vmem:[#allocation14 + $0x708] sm:$0xff]
    %v3046 = vld [vmem:[#allocation14 + $0x710] sm:$0xff]
    %v3047 = vld [vmem:[#allocation14 + $0x718] sm:$0xf]
    %v3048 = vld [vmem:[#allocation14 + $0x71c] sm:$0xff]
    %v3049 = vld [vmem:[#allocation14 + $0x724] sm:$0xff]
    %v3050 = vld [vmem:[#allocation14 + $0x72c] sm:$0xff]
    %v3051 = vld [vmem:[#allocation14 + $0x734] sm:$0xf]
    %v3052 = vld [vmem:[#allocation14 + $0x738] sm:$0xff]
    %v3053 = vld [vmem:[#allocation14 + $0x740] sm:$0xff]
    %v3054 = vld [vmem:[#allocation14 + $0x748] sm:$0xff]
    %v3055 = vld [vmem:[#allocation14 + $0x750] sm:$0xf]
    %v3056 = vld [vmem:[#allocation14 + $0x754] sm:$0xff]
    %v3057 = vld [vmem:[#allocation14 + $0x75c] sm:$0xff]
    %v3058 = vld [vmem:[#allocation14 + $0x764] sm:$0xff]
    %v3059 = vld [vmem:[#allocation14 + $0x76c] sm:$0xf]
    %v3060 = vld [vmem:[#allocation14 + $0x770] sm:$0xff]
    %v3061 = vld [vmem:[#allocation14 + $0x778] sm:$0xff]
    %v3062 = vld [vmem:[#allocation14 + $0x780] sm:$0xff]
    %v3063 = vld [vmem:[#allocation14 + $0x788] sm:$0xf]
    %v3064 = vld [vmem:[#allocation14 + $0x78c] sm:$0xff]
    %v3065 = vld [vmem:[#allocation14 + $0x794] sm:$0xff]
    %v3066 = vld [vmem:[#allocation14 + $0x79c] sm:$0xff]
    %v3067 = vld [vmem:[#allocation14 + $0x7a4] sm:$0xf]
    %v3068 = vld [vmem:[#allocation14 + $0x7a8] sm:$0xff]
    %v3069 = vld [vmem:[#allocation14 + $0x7b0] sm:$0xff]
    %v3070 = vld [vmem:[#allocation14 + $0x7b8] sm:$0xff]
    %v3071 = vld [vmem:[#allocation14 + $0x7c0] sm:$0xf]
    %v3072 = vld [vmem:[#allocation14 + $0x7c4] sm:$0xff]
    %v3073 = vld [vmem:[#allocation14 + $0x7cc] sm:$0xff]
    %v3074 = vld [vmem:[#allocation14 + $0x7d4] sm:$0xff]
    %v3075 = vld [vmem:[#allocation14 + $0x7dc] sm:$0xf]
    %v3076 = vld [vmem:[#allocation14 + $0x7e0] sm:$0xff]
    %v3077 = vld [vmem:[#allocation14 + $0x7e8] sm:$0xff]
    %v3078 = vld [vmem:[#allocation14 + $0x7f0] sm:$0xff]
    %v3079 = vld [vmem:[#allocation14 + $0x7f8] sm:$0xf]
    %v3080 = vld [vmem:[#allocation14 + $0x7fc] sm:$0xff]
    %v3081 = vld [vmem:[#allocation14 + $0x804] sm:$0xff]
    %v3082 = vld [vmem:[#allocation14 + $0x80c] sm:$0xff]
    %v3083 = vld [vmem:[#allocation14 + $0x814] sm:$0xf]
    %v3084 = vld [vmem:[#allocation14 + $0x818] sm:$0xff]
    %v3085 = vld [vmem:[#allocation14 + $0x820] sm:$0xff]
    %v3086 = vld [vmem:[#allocation14 + $0x828] sm:$0xff]
    %v3087 = vld [vmem:[#allocation14 + $0x830] sm:$0xf]
    %v3088 = vld [vmem:[#allocation14 + $0x834] sm:$0xff]
    %v3089 = vld [vmem:[#allocation14 + $0x83c] sm:$0xff]
    %v3090 = vld [vmem:[#allocation14 + $0x844] sm:$0xff]
    %v3091 = vld [vmem:[#allocation14 + $0x84c] sm:$0xf]
    %v3092 = vld [vmem:[#allocation14 + $0x850] sm:$0xff]
    %v3093 = vld [vmem:[#allocation14 + $0x858] sm:$0xff]
    %v3094 = vld [vmem:[#allocation14 + $0x860] sm:$0xff]
    %v3095 = vld [vmem:[#allocation14 + $0x868] sm:$0xf]
    %v3096 = vld [vmem:[#allocation14 + $0x86c] sm:$0xff]
    %v3097 = vld [vmem:[#allocation14 + $0x874] sm:$0xff]
    %v3098 = vld [vmem:[#allocation14 + $0x87c] sm:$0xff]
    %v3099 = vld [vmem:[#allocation14 + $0x884] sm:$0xf]
    %v3100 = vld [vmem:[#allocation14 + $0x888] sm:$0xff]
    %v3101 = vld [vmem:[#allocation14 + $0x890] sm:$0xff]
    %v3102 = vld [vmem:[#allocation14 + $0x898] sm:$0xff]
    %v3103 = vld [vmem:[#allocation14 + $0x8a0] sm:$0xf]
    %v3104 = vld [vmem:[#allocation14 + $0x8a4] sm:$0xff]
    %v3105 = vld [vmem:[#allocation14 + $0x8ac] sm:$0xff]
    %v3106 = vld [vmem:[#allocation14 + $0x8b4] sm:$0xff]
    %v3107 = vld [vmem:[#allocation14 + $0x8bc] sm:$0xf]
    %v3108 = vld [vmem:[#allocation14 + $0x8c0] sm:$0xff]
    %v3109 = vld [vmem:[#allocation14 + $0x8c8] sm:$0xff]
    %v3110 = vld [vmem:[#allocation14 + $0x8d0] sm:$0xff]
    %v3111 = vld [vmem:[#allocation14 + $0x8d8] sm:$0xf]
    %v3112 = vld [vmem:[#allocation14 + $0x8dc] sm:$0xff]
    %v3113 = vld [vmem:[#allocation14 + $0x8e4] sm:$0xff]
    %v3114 = vld [vmem:[#allocation14 + $0x8ec] sm:$0xff]
    %v3115 = vld [vmem:[#allocation14 + $0x8f4] sm:$0xf]
    %v3116 = vld [vmem:[#allocation14 + $0x8f8] sm:$0xff]
    %v3117 = vld [vmem:[#allocation14 + $0x900] sm:$0xff]
    %v3118 = vld [vmem:[#allocation14 + $0x908] sm:$0xff]
    %v3119 = vld [vmem:[#allocation14 + $0x910] sm:$0xf]
    %v3120 = vld [vmem:[#allocation14 + $0x914] sm:$0xff]
    %v3121 = vld [vmem:[#allocation14 + $0x91c] sm:$0xff]
    %v3122 = vld [vmem:[#allocation14 + $0x924] sm:$0xff]
    %v3123 = vld [vmem:[#allocation14 + $0x92c] sm:$0xf]
    %v3124 = vld [vmem:[#allocation14 + $0x930] sm:$0xff]
    %v3125 = vld [vmem:[#allocation14 + $0x938] sm:$0xff]
    %v3126 = vld [vmem:[#allocation14 + $0x940] sm:$0xff]
    %v3127 = vld [vmem:[#allocation14 + $0x948] sm:$0xf]
    %v3128 = vld [vmem:[#allocation14 + $0x94c] sm:$0xff]
    %v3129 = vld [vmem:[#allocation14 + $0x954] sm:$0xff]
    %v3130 = vld [vmem:[#allocation14 + $0x95c] sm:$0xff]
    %v3131 = vld [vmem:[#allocation14 + $0x964] sm:$0xf]
    %v3132 = vld [vmem:[#allocation14 + $0x968] sm:$0xff]
    %v3133 = vld [vmem:[#allocation14 + $0x970] sm:$0xff]
    %v3134 = vld [vmem:[#allocation14 + $0x978] sm:$0xff]
    %v3135 = vld [vmem:[#allocation14 + $0x980] sm:$0xf]
    %v3136 = vld [vmem:[#allocation14 + $0x984] sm:$0xff]
    %v3137 = vld [vmem:[#allocation14 + $0x98c] sm:$0xff]
    %v3138 = vld [vmem:[#allocation14 + $0x994] sm:$0xff]
    %v3139 = vld [vmem:[#allocation14 + $0x99c] sm:$0xf]
    %v3140 = vld [vmem:[#allocation14 + $0x9a0] sm:$0xff]
    %v3141 = vld [vmem:[#allocation14 + $0x9a8] sm:$0xff]
    %v3142 = vld [vmem:[#allocation14 + $0x9b0] sm:$0xff]
    %v3143 = vld [vmem:[#allocation14 + $0x9b8] sm:$0xf]
    %v3144 = vld [vmem:[#allocation14 + $0x9bc] sm:$0xff]
    %v3145 = vld [vmem:[#allocation14 + $0x9c4] sm:$0xff]
    %v3146 = vld [vmem:[#allocation14 + $0x9cc] sm:$0xff]
    %v3147 = vld [vmem:[#allocation14 + $0x9d4] sm:$0xf]
    %v3148 = vld [vmem:[#allocation14 + $0x9d8] sm:$0xff]
    %v3149 = vld [vmem:[#allocation14 + $0x9e0] sm:$0xff]
    %v3150 = vld [vmem:[#allocation14 + $0x9e8] sm:$0xff]
    %v3151 = vld [vmem:[#allocation14 + $0x9f0] sm:$0xf]
    %v3152 = vld [vmem:[#allocation14 + $0x9f4] sm:$0xff]
    %v3153 = vld [vmem:[#allocation14 + $0x9fc] sm:$0xff]
    %v3154 = vld [vmem:[#allocation14 + $0xa04] sm:$0xff]
    %v3155 = vld [vmem:[#allocation14 + $0xa0c] sm:$0xf]
    %v3156 = vld [vmem:[#allocation14 + $0xa10] sm:$0xff]
    %v3157 = vld [vmem:[#allocation14 + $0xa18] sm:$0xff]
    %v3158 = vld [vmem:[#allocation14 + $0xa20] sm:$0xff]
    %v3159 = vld [vmem:[#allocation14 + $0xa28] sm:$0xf]
    %v3160 = vld [vmem:[#allocation14 + $0xa2c] sm:$0xff]
    %v3161 = vld [vmem:[#allocation14 + $0xa34] sm:$0xff]
    %v3162 = vld [vmem:[#allocation14 + $0xa3c] sm:$0xff]
    %v3163 = vld [vmem:[#allocation14 + $0xa44] sm:$0xf]
    %v3164 = vld [vmem:[#allocation14 + $0xa48] sm:$0xff]
    %v3165 = vld [vmem:[#allocation14 + $0xa50] sm:$0xff]
    %v3166 = vld [vmem:[#allocation14 + $0xa58] sm:$0xff]
    %v3167 = vld [vmem:[#allocation14 + $0xa60] sm:$0xf]
    %v3168 = vld [vmem:[#allocation14 + $0xa64] sm:$0xff]
    %v3169 = vld [vmem:[#allocation14 + $0xa6c] sm:$0xff]
    %v3170 = vld [vmem:[#allocation14 + $0xa74] sm:$0xff]
    %v3171 = vld [vmem:[#allocation14 + $0xa7c] sm:$0xf]
    %v3172 = vld [vmem:[#allocation14 + $0xa80] sm:$0xff]
    %v3173 = vld [vmem:[#allocation14 + $0xa88] sm:$0xff]
    %v3174 = vld [vmem:[#allocation14 + $0xa90] sm:$0xff]
    %v3175 = vld [vmem:[#allocation14 + $0xa98] sm:$0xf]
    %v3176 = vld [vmem:[#allocation14 + $0xa9c] sm:$0xff]
    %v3177 = vld [vmem:[#allocation14 + $0xaa4] sm:$0xff]
    %v3178 = vld [vmem:[#allocation14 + $0xaac] sm:$0xff]
    %v3179 = vld [vmem:[#allocation14 + $0xab4] sm:$0xf]
    %v3180 = vld [vmem:[#allocation14 + $0xab8] sm:$0xff]
    %v3181 = vld [vmem:[#allocation14 + $0xac0] sm:$0xff]
    %v3182 = vld [vmem:[#allocation14 + $0xac8] sm:$0xff]
    %v3183 = vld [vmem:[#allocation14 + $0xad0] sm:$0xf]
    %v3184 = vld [vmem:[#allocation14 + $0xad4] sm:$0xff]
    %v3185 = vld [vmem:[#allocation14 + $0xadc] sm:$0xff]
    %v3186 = vld [vmem:[#allocation14 + $0xae4] sm:$0xff]
    %v3187 = vld [vmem:[#allocation14 + $0xaec] sm:$0xf]
    %v3188 = vld [vmem:[#allocation14 + $0xaf0] sm:$0xff]
    %v3189 = vld [vmem:[#allocation14 + $0xaf8] sm:$0xff]
    %v3190 = vld [vmem:[#allocation14 + $0xb00] sm:$0xff]
    %v3191 = vld [vmem:[#allocation14 + $0xb08] sm:$0xf]
    %v3192 = vld [vmem:[#allocation14 + $0xb0c] sm:$0xff]
    %v3193 = vld [vmem:[#allocation14 + $0xb14] sm:$0xff]
    %v3194 = vld [vmem:[#allocation14 + $0xb1c] sm:$0xff]
    %v3195 = vld [vmem:[#allocation14 + $0xb24] sm:$0xf]
    %v3196 = vld [vmem:[#allocation14 + $0xb28] sm:$0xff]
    %v3197 = vld [vmem:[#allocation14 + $0xb30] sm:$0xff]
    %v3198 = vld [vmem:[#allocation14 + $0xb38] sm:$0xff]
    %v3199 = vld [vmem:[#allocation14 + $0xb40] sm:$0xf]
    %v3200 = vld [vmem:[#allocation14 + $0xb44] sm:$0xff]
    %v3201 = vld [vmem:[#allocation14 + $0xb4c] sm:$0xff]
    %v3202 = vld [vmem:[#allocation14 + $0xb54] sm:$0xff]
    %v3203 = vld [vmem:[#allocation14 + $0xb5c] sm:$0xf]
    %v3204 = vld [vmem:[#allocation14 + $0xb60] sm:$0xff]
    %v3205 = vld [vmem:[#allocation14 + $0xb68] sm:$0xff]
    %v3206 = vld [vmem:[#allocation14 + $0xb70] sm:$0xff]
    %v3207 = vld [vmem:[#allocation14 + $0xb78] sm:$0xf]
    %v3208 = vld [vmem:[#allocation14 + $0xb7c] sm:$0xff]
    %v3209 = vld [vmem:[#allocation14 + $0xb84] sm:$0xff]
    %v3210 = vld [vmem:[#allocation14 + $0xb8c] sm:$0xff]
    %v3211 = vld [vmem:[#allocation14 + $0xb94] sm:$0xf]
    %v3212 = vld [vmem:[#allocation14 + $0xb98] sm:$0xff]
    %v3213 = vld [vmem:[#allocation14 + $0xba0] sm:$0xff]
    %v3214 = vld [vmem:[#allocation14 + $0xba8] sm:$0xff]
    %v3215 = vld [vmem:[#allocation14 + $0xbb0] sm:$0xf]
    %v3216 = vld [vmem:[#allocation14 + $0xbb4] sm:$0xff]
    %v3217 = vld [vmem:[#allocation14 + $0xbbc] sm:$0xff]
    %v3218 = vld [vmem:[#allocation14 + $0xbc4] sm:$0xff]
    %v3219 = vld [vmem:[#allocation14 + $0xbcc] sm:$0xf]
    %v3220 = vld [vmem:[#allocation14 + $0xbd0] sm:$0xff]
    %v3221 = vld [vmem:[#allocation14 + $0xbd8] sm:$0xff]
    %v3222 = vld [vmem:[#allocation14 + $0xbe0] sm:$0xff]
    %v3223 = vld [vmem:[#allocation14 + $0xbe8] sm:$0xf]
    %v3224 = vld [vmem:[#allocation14 + $0xbec] sm:$0xff]
    %v3225 = vld [vmem:[#allocation14 + $0xbf4] sm:$0xff]
    %v3226 = vld [vmem:[#allocation14 + $0xbfc] sm:$0xff]
    %v3227 = vld [vmem:[#allocation14 + $0xc04] sm:$0xf]
    %v3228 = vld [vmem:[#allocation14 + $0xc08] sm:$0xff]
    %v3229 = vld [vmem:[#allocation14 + $0xc10] sm:$0xff]
    %v3230 = vld [vmem:[#allocation14 + $0xc18] sm:$0xff]
    %v3231 = vld [vmem:[#allocation14 + $0xc20] sm:$0xf]
    %v3232 = vld [vmem:[#allocation14 + $0xc24] sm:$0xff]
    %v3233 = vld [vmem:[#allocation14 + $0xc2c] sm:$0xff]
    %v3234 = vld [vmem:[#allocation14 + $0xc34] sm:$0xff]
    %v3235 = vld [vmem:[#allocation14 + $0xc3c] sm:$0xf]
    %v3236 = vld [vmem:[#allocation14 + $0xc40] sm:$0xff]
    %v3237 = vld [vmem:[#allocation14 + $0xc48] sm:$0xff]
    %v3238 = vld [vmem:[#allocation14 + $0xc50] sm:$0xff]
    %v3239 = vld [vmem:[#allocation14 + $0xc58] sm:$0xf]
    %v3240 = vld [vmem:[#allocation14 + $0xc5c] sm:$0xff]
    %v3241 = vld [vmem:[#allocation14 + $0xc64] sm:$0xff]
    %v3242 = vld [vmem:[#allocation14 + $0xc6c] sm:$0xff]
    %v3243 = vld [vmem:[#allocation14 + $0xc74] sm:$0xf]
    %v3244 = vld [vmem:[#allocation14 + $0xc78] sm:$0xff]
    %v3245 = vld [vmem:[#allocation14 + $0xc80] sm:$0xff]
    %v3246 = vld [vmem:[#allocation14 + $0xc88] sm:$0xff]
    %v3247 = vld [vmem:[#allocation14 + $0xc90] sm:$0xf]
    %v3248 = vld [vmem:[#allocation14 + $0xc94] sm:$0xff]
    %v3249 = vld [vmem:[#allocation14 + $0xc9c] sm:$0xff]
    %v3250 = vld [vmem:[#allocation14 + $0xca4] sm:$0xff]
    %v3251 = vld [vmem:[#allocation14 + $0xcac] sm:$0xf]
    %v3252 = vld [vmem:[#allocation14 + $0xcb0] sm:$0xff]
    %v3253 = vld [vmem:[#allocation14 + $0xcb8] sm:$0xff]
    %v3254 = vld [vmem:[#allocation14 + $0xcc0] sm:$0xff]
    %v3255 = vld [vmem:[#allocation14 + $0xcc8] sm:$0xf]
    %v3256 = vld [vmem:[#allocation14 + $0xccc] sm:$0xff]
    %v3257 = vld [vmem:[#allocation14 + $0xcd4] sm:$0xff]
    %v3258 = vld [vmem:[#allocation14 + $0xcdc] sm:$0xff]
    %v3259 = vld [vmem:[#allocation14 + $0xce4] sm:$0xf]
    %v3260 = vld [vmem:[#allocation14 + $0xce8] sm:$0xff]
    %v3261 = vld [vmem:[#allocation14 + $0xcf0] sm:$0xff]
    %v3262 = vld [vmem:[#allocation14 + $0xcf8] sm:$0xff]
    %v3263 = vld [vmem:[#allocation14 + $0xd00] sm:$0xf]
    %v3264 = vld [vmem:[#allocation14 + $0xd04] sm:$0xff]
    %v3265 = vld [vmem:[#allocation14 + $0xd0c] sm:$0xff]
    %v3266 = vld [vmem:[#allocation14 + $0xd14] sm:$0xff]
    %v3267 = vld [vmem:[#allocation14 + $0xd1c] sm:$0xf]
    %v3268 = vld [vmem:[#allocation14 + $0xd20] sm:$0xff]
    %v3269 = vld [vmem:[#allocation14 + $0xd28] sm:$0xff]
    %v3270 = vld [vmem:[#allocation14 + $0xd30] sm:$0xff]
    %v3271 = vld [vmem:[#allocation14 + $0xd38] sm:$0xf]
    %v3272 = vld [vmem:[#allocation14 + $0xd3c] sm:$0xff]
    %v3273 = vld [vmem:[#allocation14 + $0xd44] sm:$0xff]
    %v3274 = vld [vmem:[#allocation14 + $0xd4c] sm:$0xff]
    %v3275 = vld [vmem:[#allocation14 + $0xd54] sm:$0xf]
    %v3276 = vld [vmem:[#allocation14 + $0xd58] sm:$0xff]
    %v3277 = vld [vmem:[#allocation14 + $0xd60] sm:$0xff]
    %v3278 = vld [vmem:[#allocation14 + $0xd68] sm:$0xff]
    %v3279 = vld [vmem:[#allocation14 + $0xd70] sm:$0xf]
    %v3280 = vld [vmem:[#allocation14 + $0xd74] sm:$0xff]
    %v3281 = vld [vmem:[#allocation14 + $0xd7c] sm:$0xff]
    %v3282 = vld [vmem:[#allocation14 + $0xd84] sm:$0xff]
    %v3283 = vld [vmem:[#allocation14 + $0xd8c] sm:$0xf]
    %v3284 = vld [vmem:[#allocation14 + $0xd90] sm:$0xff]
    %v3285 = vld [vmem:[#allocation14 + $0xd98] sm:$0xff]
    %v3286 = vld [vmem:[#allocation14 + $0xda0] sm:$0xff]
    %v3287 = vld [vmem:[#allocation14 + $0xda8] sm:$0xf]
    %v3288 = vld [vmem:[#allocation14 + $0xdac] sm:$0xff]
    %v3289 = vld [vmem:[#allocation14 + $0xdb4] sm:$0xff]
    %v3290 = vld [vmem:[#allocation14 + $0xdbc] sm:$0xff]
    %v3291 = vld [vmem:[#allocation14 + $0xdc4] sm:$0xf]
    %v3292 = vld [vmem:[#allocation14 + $0xdc8] sm:$0xff]
    %v3293 = vld [vmem:[#allocation14 + $0xdd0] sm:$0xff]
    %v3294 = vld [vmem:[#allocation14 + $0xdd8] sm:$0xff]
    %v3295 = vld [vmem:[#allocation14 + $0xde0] sm:$0xf]
    %v3296 = vld [vmem:[#allocation14 + $0xde4] sm:$0xff]
    %v3297 = vld [vmem:[#allocation14 + $0xdec] sm:$0xff]
    %v3298 = vld [vmem:[#allocation14 + $0xdf4] sm:$0xff]
    %v3299 = vld [vmem:[#allocation14 + $0xdfc] sm:$0xf]
    %v3300 = vld [vmem:[#allocation16] sm:$0xff]
    %v3302 = vperm.slane %v3300, 0
    %v3303 = vperm.slane %v3300, 1
    %v3304 = vperm.slane %v3300, 2
    %v3305 = vperm.slane %v3300, 3
    %v3306 = vperm.slane %v3300, 4
    %v3307 = vperm.slane %v3300, 5
    %v3308 = vperm.slane %v3300, 6
    %v3828 = vunpack.c.l.b16 %v2788
    %v3829 = vunpack.c.h.b16 %v2788
    %v3830 = vunpack.c.l.b16 %v2789
    %v3831 = vunpack.c.h.b16 %v2789
    %v3832 = vunpack.c.l.b16 %v2790
    %v3833 = vunpack.c.h.b16 %v2790
    %v3834 = vunpack.c.l.b16 %v2791
    %v3835 = vunpack.c.l.b16 %v2792
    %v3836 = vunpack.c.h.b16 %v2792
    %v3837 = vunpack.c.l.b16 %v2793
    %v3838 = vunpack.c.h.b16 %v2793
    %v3839 = vunpack.c.l.b16 %v2794
    %v3840 = vunpack.c.h.b16 %v2794
    %v3841 = vunpack.c.l.b16 %v2795
    %v3842 = vunpack.c.l.b16 %v2796
    %v3843 = vunpack.c.h.b16 %v2796
    %v3844 = vunpack.c.l.b16 %v2797
    %v3845 = vunpack.c.h.b16 %v2797
    %v3846 = vunpack.c.l.b16 %v2798
    %v3847 = vunpack.c.h.b16 %v2798
    %v3848 = vunpack.c.l.b16 %v2799
    %v3849 = vunpack.c.l.b16 %v2800
    %v3850 = vunpack.c.h.b16 %v2800
    %v3851 = vunpack.c.l.b16 %v2801
    %v3852 = vunpack.c.h.b16 %v2801
    %v3853 = vunpack.c.l.b16 %v2802
    %v3854 = vunpack.c.h.b16 %v2802
    %v3855 = vunpack.c.l.b16 %v2803
    %v3856 = vunpack.c.l.b16 %v2804
    %v3857 = vunpack.c.h.b16 %v2804
    %v3858 = vunpack.c.l.b16 %v2805
    %v3859 = vunpack.c.h.b16 %v2805
    %v3860 = vunpack.c.l.b16 %v2806
    %v3861 = vunpack.c.h.b16 %v2806
    %v3862 = vunpack.c.l.b16 %v2807
    %v3863 = vunpack.c.l.b16 %v2808
    %v3864 = vunpack.c.h.b16 %v2808
    %v3865 = vunpack.c.l.b16 %v2809
    %v3866 = vunpack.c.h.b16 %v2809
    %v3867 = vunpack.c.l.b16 %v2810
    %v3868 = vunpack.c.h.b16 %v2810
    %v3869 = vunpack.c.l.b16 %v2811
    %v3870 = vunpack.c.l.b16 %v2812
    %v3871 = vunpack.c.h.b16 %v2812
    %v3872 = vunpack.c.l.b16 %v2813
    %v3873 = vunpack.c.h.b16 %v2813
    %v3874 = vunpack.c.l.b16 %v2814
    %v3875 = vunpack.c.h.b16 %v2814
    %v3876 = vunpack.c.l.b16 %v2815
    %v3877 = vunpack.c.l.b16 %v2816
    %v3878 = vunpack.c.h.b16 %v2816
    %v3879 = vunpack.c.l.b16 %v2817
    %v3880 = vunpack.c.h.b16 %v2817
    %v3881 = vunpack.c.l.b16 %v2818
    %v3882 = vunpack.c.h.b16 %v2818
    %v3883 = vunpack.c.l.b16 %v2819
    %v3884 = vunpack.c.l.b16 %v2820
    %v3885 = vunpack.c.h.b16 %v2820
    %v3886 = vunpack.c.l.b16 %v2821
    %v3887 = vunpack.c.h.b16 %v2821
    %v3888 = vunpack.c.l.b16 %v2822
    %v3889 = vunpack.c.h.b16 %v2822
    %v3890 = vunpack.c.l.b16 %v2823
    %v3891 = vunpack.c.l.b16 %v2824
    %v3892 = vunpack.c.h.b16 %v2824
    %v3893 = vunpack.c.l.b16 %v2825
    %v3894 = vunpack.c.h.b16 %v2825
    %v3895 = vunpack.c.l.b16 %v2826
    %v3896 = vunpack.c.h.b16 %v2826
    %v3897 = vunpack.c.l.b16 %v2827
    %v3898 = vunpack.c.l.b16 %v2828
    %v3899 = vunpack.c.h.b16 %v2828
    %v3900 = vunpack.c.l.b16 %v2829
    %v3901 = vunpack.c.h.b16 %v2829
    %v3902 = vunpack.c.l.b16 %v2830
    %v3903 = vunpack.c.h.b16 %v2830
    %v3904 = vunpack.c.l.b16 %v2831
    %v3905 = vunpack.c.l.b16 %v2832
    %v3906 = vunpack.c.h.b16 %v2832
    %v3907 = vunpack.c.l.b16 %v2833
    %v3908 = vunpack.c.h.b16 %v2833
    %v3909 = vunpack.c.l.b16 %v2834
    %v3910 = vunpack.c.h.b16 %v2834
    %v3911 = vunpack.c.l.b16 %v2835
    %v3912 = vunpack.c.l.b16 %v2836
    %v3913 = vunpack.c.h.b16 %v2836
    %v3914 = vunpack.c.l.b16 %v2837
    %v3915 = vunpack.c.h.b16 %v2837
    %v3916 = vunpack.c.l.b16 %v2838
    %v3917 = vunpack.c.h.b16 %v2838
    %v3918 = vunpack.c.l.b16 %v2839
    %v3919 = vunpack.c.l.b16 %v2840
    %v3920 = vunpack.c.h.b16 %v2840
    %v3921 = vunpack.c.l.b16 %v2841
    %v3922 = vunpack.c.h.b16 %v2841
    %v3923 = vunpack.c.l.b16 %v2842
    %v3924 = vunpack.c.h.b16 %v2842
    %v3925 = vunpack.c.l.b16 %v2843
    %v3926 = vunpack.c.l.b16 %v2844
    %v3927 = vunpack.c.h.b16 %v2844
    %v3928 = vunpack.c.l.b16 %v2845
    %v3929 = vunpack.c.h.b16 %v2845
    %v3930 = vunpack.c.l.b16 %v2846
    %v3931 = vunpack.c.h.b16 %v2846
    %v3932 = vunpack.c.l.b16 %v2847
    %v3933 = vunpack.c.l.b16 %v2848
    %v3934 = vunpack.c.h.b16 %v2848
    %v3935 = vunpack.c.l.b16 %v2849
    %v3936 = vunpack.c.h.b16 %v2849
    %v3937 = vunpack.c.l.b16 %v2850
    %v3938 = vunpack.c.h.b16 %v2850
    %v3939 = vunpack.c.l.b16 %v2851
    %v3940 = vunpack.c.l.b16 %v2852
    %v3941 = vunpack.c.h.b16 %v2852
    %v3942 = vunpack.c.l.b16 %v2853
    %v3943 = vunpack.c.h.b16 %v2853
    %v3944 = vunpack.c.l.b16 %v2854
    %v3945 = vunpack.c.h.b16 %v2854
    %v3946 = vunpack.c.l.b16 %v2855
    %v3947 = vunpack.c.l.b16 %v2856
    %v3948 = vunpack.c.h.b16 %v2856
    %v3949 = vunpack.c.l.b16 %v2857
    %v3950 = vunpack.c.h.b16 %v2857
    %v3951 = vunpack.c.l.b16 %v2858
    %v3952 = vunpack.c.h.b16 %v2858
    %v3953 = vunpack.c.l.b16 %v2859
    %v3954 = vunpack.c.l.b16 %v2860
    %v3955 = vunpack.c.h.b16 %v2860
    %v3956 = vunpack.c.l.b16 %v2861
    %v3957 = vunpack.c.h.b16 %v2861
    %v3958 = vunpack.c.l.b16 %v2862
    %v3959 = vunpack.c.h.b16 %v2862
    %v3960 = vunpack.c.l.b16 %v2863
    %v3961 = vunpack.c.l.b16 %v2864
    %v3962 = vunpack.c.h.b16 %v2864
    %v3963 = vunpack.c.l.b16 %v2865
    %v3964 = vunpack.c.h.b16 %v2865
    %v3965 = vunpack.c.l.b16 %v2866
    %v3966 = vunpack.c.h.b16 %v2866
    %v3967 = vunpack.c.l.b16 %v2867
    %v3968 = vunpack.c.l.b16 %v2868
    %v3969 = vunpack.c.h.b16 %v2868
    %v3970 = vunpack.c.l.b16 %v2869
    %v3971 = vunpack.c.h.b16 %v2869
    %v3972 = vunpack.c.l.b16 %v2870
    %v3973 = vunpack.c.h.b16 %v2870
    %v3974 = vunpack.c.l.b16 %v2871
    %v3975 = vunpack.c.l.b16 %v2872
    %v3976 = vunpack.c.h.b16 %v2872
    %v3977 = vunpack.c.l.b16 %v2873
    %v3978 = vunpack.c.h.b16 %v2873
    %v3979 = vunpack.c.l.b16 %v2874
    %v3980 = vunpack.c.h.b16 %v2874
    %v3981 = vunpack.c.l.b16 %v2875
    %v3982 = vunpack.c.l.b16 %v2876
    %v3983 = vunpack.c.h.b16 %v2876
    %v3984 = vunpack.c.l.b16 %v2877
    %v3985 = vunpack.c.h.b16 %v2877
    %v3986 = vunpack.c.l.b16 %v2878
    %v3987 = vunpack.c.h.b16 %v2878
    %v3988 = vunpack.c.l.b16 %v2879
    %v3989 = vunpack.c.l.b16 %v2880
    %v3990 = vunpack.c.h.b16 %v2880
    %v3991 = vunpack.c.l.b16 %v2881
    %v3992 = vunpack.c.h.b16 %v2881
    %v3993 = vunpack.c.l.b16 %v2882
    %v3994 = vunpack.c.h.b16 %v2882
    %v3995 = vunpack.c.l.b16 %v2883
    %v3996 = vunpack.c.l.b16 %v2884
    %v3997 = vunpack.c.h.b16 %v2884
    %v3998 = vunpack.c.l.b16 %v2885
    %v3999 = vunpack.c.h.b16 %v2885
    %v4000 = vunpack.c.l.b16 %v2886
    %v4001 = vunpack.c.h.b16 %v2886
    %v4002 = vunpack.c.l.b16 %v2887
    %v4003 = vunpack.c.l.b16 %v2888
    %v4004 = vunpack.c.h.b16 %v2888
    %v4005 = vunpack.c.l.b16 %v2889
    %v4006 = vunpack.c.h.b16 %v2889
    %v4007 = vunpack.c.l.b16 %v2890
    %v4008 = vunpack.c.h.b16 %v2890
    %v4009 = vunpack.c.l.b16 %v2891
    %v4010 = vunpack.c.l.b16 %v2892
    %v4011 = vunpack.c.h.b16 %v2892
    %v4012 = vunpack.c.l.b16 %v2893
    %v4013 = vunpack.c.h.b16 %v2893
    %v4014 = vunpack.c.l.b16 %v2894
    %v4015 = vunpack.c.h.b16 %v2894
    %v4016 = vunpack.c.l.b16 %v2895
    %v4017 = vunpack.c.l.b16 %v2896
    %v4018 = vunpack.c.h.b16 %v2896
    %v4019 = vunpack.c.l.b16 %v2897
    %v4020 = vunpack.c.h.b16 %v2897
    %v4021 = vunpack.c.l.b16 %v2898
    %v4022 = vunpack.c.h.b16 %v2898
    %v4023 = vunpack.c.l.b16 %v2899
    %v4024 = vunpack.c.l.b16 %v2900
    %v4025 = vunpack.c.h.b16 %v2900
    %v4026 = vunpack.c.l.b16 %v2901
    %v4027 = vunpack.c.h.b16 %v2901
    %v4028 = vunpack.c.l.b16 %v2902
    %v4029 = vunpack.c.h.b16 %v2902
    %v4030 = vunpack.c.l.b16 %v2903
    %v4031 = vunpack.c.l.b16 %v2904
    %v4032 = vunpack.c.h.b16 %v2904
    %v4033 = vunpack.c.l.b16 %v2905
    %v4034 = vunpack.c.h.b16 %v2905
    %v4035 = vunpack.c.l.b16 %v2906
    %v4036 = vunpack.c.h.b16 %v2906
    %v4037 = vunpack.c.l.b16 %v2907
    %v4038 = vunpack.c.l.b16 %v2908
    %v4039 = vunpack.c.h.b16 %v2908
    %v4040 = vunpack.c.l.b16 %v2909
    %v4041 = vunpack.c.h.b16 %v2909
    %v4042 = vunpack.c.l.b16 %v2910
    %v4043 = vunpack.c.h.b16 %v2910
    %v4044 = vunpack.c.l.b16 %v2911
    %v4045 = vunpack.c.l.b16 %v2912
    %v4046 = vunpack.c.h.b16 %v2912
    %v4047 = vunpack.c.l.b16 %v2913
    %v4048 = vunpack.c.h.b16 %v2913
    %v4049 = vunpack.c.l.b16 %v2914
    %v4050 = vunpack.c.h.b16 %v2914
    %v4051 = vunpack.c.l.b16 %v2915
    %v4052 = vunpack.c.l.b16 %v2916
    %v4053 = vunpack.c.h.b16 %v2916
    %v4054 = vunpack.c.l.b16 %v2917
    %v4055 = vunpack.c.h.b16 %v2917
    %v4056 = vunpack.c.l.b16 %v2918
    %v4057 = vunpack.c.h.b16 %v2918
    %v4058 = vunpack.c.l.b16 %v2919
    %v4059 = vunpack.c.l.b16 %v2920
    %v4060 = vunpack.c.h.b16 %v2920
    %v4061 = vunpack.c.l.b16 %v2921
    %v4062 = vunpack.c.h.b16 %v2921
    %v4063 = vunpack.c.l.b16 %v2922
    %v4064 = vunpack.c.h.b16 %v2922
    %v4065 = vunpack.c.l.b16 %v2923
    %v4066 = vunpack.c.l.b16 %v2924
    %v4067 = vunpack.c.h.b16 %v2924
    %v4068 = vunpack.c.l.b16 %v2925
    %v4069 = vunpack.c.h.b16 %v2925
    %v4070 = vunpack.c.l.b16 %v2926
    %v4071 = vunpack.c.h.b16 %v2926
    %v4072 = vunpack.c.l.b16 %v2927
    %v4073 = vunpack.c.l.b16 %v2928
    %v4074 = vunpack.c.h.b16 %v2928
    %v4075 = vunpack.c.l.b16 %v2929
    %v4076 = vunpack.c.h.b16 %v2929
    %v4077 = vunpack.c.l.b16 %v2930
    %v4078 = vunpack.c.h.b16 %v2930
    %v4079 = vunpack.c.l.b16 %v2931
    %v4080 = vunpack.c.l.b16 %v2932
    %v4081 = vunpack.c.h.b16 %v2932
    %v4082 = vunpack.c.l.b16 %v2933
    %v4083 = vunpack.c.h.b16 %v2933
    %v4084 = vunpack.c.l.b16 %v2934
    %v4085 = vunpack.c.h.b16 %v2934
    %v4086 = vunpack.c.l.b16 %v2935
    %v4087 = vunpack.c.l.b16 %v2936
    %v4088 = vunpack.c.h.b16 %v2936
    %v4089 = vunpack.c.l.b16 %v2937
    %v4090 = vunpack.c.h.b16 %v2937
    %v4091 = vunpack.c.l.b16 %v2938
    %v4092 = vunpack.c.h.b16 %v2938
    %v4093 = vunpack.c.l.b16 %v2939
    %v4094 = vunpack.c.l.b16 %v2940
    %v4095 = vunpack.c.h.b16 %v2940
    %v4096 = vunpack.c.l.b16 %v2941
    %v4097 = vunpack.c.h.b16 %v2941
    %v4098 = vunpack.c.l.b16 %v2942
    %v4099 = vunpack.c.h.b16 %v2942
    %v4100 = vunpack.c.l.b16 %v2943
    %v4101 = vunpack.c.l.b16 %v2944
    %v4102 = vunpack.c.h.b16 %v2944
    %v4103 = vunpack.c.l.b16 %v2945
    %v4104 = vunpack.c.h.b16 %v2945
    %v4105 = vunpack.c.l.b16 %v2946
    %v4106 = vunpack.c.h.b16 %v2946
    %v4107 = vunpack.c.l.b16 %v2947
    %v4108 = vunpack.c.l.b16 %v2948
    %v4109 = vunpack.c.h.b16 %v2948
    %v4110 = vunpack.c.l.b16 %v2949
    %v4111 = vunpack.c.h.b16 %v2949
    %v4112 = vunpack.c.l.b16 %v2950
    %v4113 = vunpack.c.h.b16 %v2950
    %v4114 = vunpack.c.l.b16 %v2951
    %v4115 = vunpack.c.l.b16 %v2952
    %v4116 = vunpack.c.h.b16 %v2952
    %v4117 = vunpack.c.l.b16 %v2953
    %v4118 = vunpack.c.h.b16 %v2953
    %v4119 = vunpack.c.l.b16 %v2954
    %v4120 = vunpack.c.h.b16 %v2954
    %v4121 = vunpack.c.l.b16 %v2955
    %v4122 = vunpack.c.l.b16 %v2956
    %v4123 = vunpack.c.h.b16 %v2956
    %v4124 = vunpack.c.l.b16 %v2957
    %v4125 = vunpack.c.h.b16 %v2957
    %v4126 = vunpack.c.l.b16 %v2958
    %v4127 = vunpack.c.h.b16 %v2958
    %v4128 = vunpack.c.l.b16 %v2959
    %v4129 = vunpack.c.l.b16 %v2960
    %v4130 = vunpack.c.h.b16 %v2960
    %v4131 = vunpack.c.l.b16 %v2961
    %v4132 = vunpack.c.h.b16 %v2961
    %v4133 = vunpack.c.l.b16 %v2962
    %v4134 = vunpack.c.h.b16 %v2962
    %v4135 = vunpack.c.l.b16 %v2963
    %v4136 = vunpack.c.l.b16 %v2964
    %v4137 = vunpack.c.h.b16 %v2964
    %v4138 = vunpack.c.l.b16 %v2965
    %v4139 = vunpack.c.h.b16 %v2965
    %v4140 = vunpack.c.l.b16 %v2966
    %v4141 = vunpack.c.h.b16 %v2966
    %v4142 = vunpack.c.l.b16 %v2967
    %v4143 = vunpack.c.l.b16 %v2968
    %v4144 = vunpack.c.h.b16 %v2968
    %v4145 = vunpack.c.l.b16 %v2969
    %v4146 = vunpack.c.h.b16 %v2969
    %v4147 = vunpack.c.l.b16 %v2970
    %v4148 = vunpack.c.h.b16 %v2970
    %v4149 = vunpack.c.l.b16 %v2971
    %v4150 = vunpack.c.l.b16 %v2972
    %v4151 = vunpack.c.h.b16 %v2972
    %v4152 = vunpack.c.l.b16 %v2973
    %v4153 = vunpack.c.h.b16 %v2973
    %v4154 = vunpack.c.l.b16 %v2974
    %v4155 = vunpack.c.h.b16 %v2974
    %v4156 = vunpack.c.l.b16 %v2975
    %v4157 = vunpack.c.l.b16 %v2976
    %v4158 = vunpack.c.h.b16 %v2976
    %v4159 = vunpack.c.l.b16 %v2977
    %v4160 = vunpack.c.h.b16 %v2977
    %v4161 = vunpack.c.l.b16 %v2978
    %v4162 = vunpack.c.h.b16 %v2978
    %v4163 = vunpack.c.l.b16 %v2979
    %v4164 = vunpack.c.l.b16 %v2980
    %v4165 = vunpack.c.h.b16 %v2980
    %v4166 = vunpack.c.l.b16 %v2981
    %v4167 = vunpack.c.h.b16 %v2981
    %v4168 = vunpack.c.l.b16 %v2982
    %v4169 = vunpack.c.h.b16 %v2982
    %v4170 = vunpack.c.l.b16 %v2983
    %v4171 = vunpack.c.l.b16 %v2984
    %v4172 = vunpack.c.h.b16 %v2984
    %v4173 = vunpack.c.l.b16 %v2985
    %v4174 = vunpack.c.h.b16 %v2985
    %v4175 = vunpack.c.l.b16 %v2986
    %v4176 = vunpack.c.h.b16 %v2986
    %v4177 = vunpack.c.l.b16 %v2987
    %v4178 = vunpack.c.l.b16 %v2988
    %v4179 = vunpack.c.h.b16 %v2988
    %v4180 = vunpack.c.l.b16 %v2989
    %v4181 = vunpack.c.h.b16 %v2989
    %v4182 = vunpack.c.l.b16 %v2990
    %v4183 = vunpack.c.h.b16 %v2990
    %v4184 = vunpack.c.l.b16 %v2991
    %v4185 = vunpack.c.l.b16 %v2992
    %v4186 = vunpack.c.h.b16 %v2992
    %v4187 = vunpack.c.l.b16 %v2993
    %v4188 = vunpack.c.h.b16 %v2993
    %v4189 = vunpack.c.l.b16 %v2994
    %v4190 = vunpack.c.h.b16 %v2994
    %v4191 = vunpack.c.l.b16 %v2995
    %v4192 = vunpack.c.l.b16 %v2996
    %v4193 = vunpack.c.h.b16 %v2996
    %v4194 = vunpack.c.l.b16 %v2997
    %v4195 = vunpack.c.h.b16 %v2997
    %v4196 = vunpack.c.l.b16 %v2998
    %v4197 = vunpack.c.h.b16 %v2998
    %v4198 = vunpack.c.l.b16 %v2999
    %v4199 = vunpack.c.l.b16 %v3000
    %v4200 = vunpack.c.h.b16 %v3000
    %v4201 = vunpack.c.l.b16 %v3001
    %v4202 = vunpack.c.h.b16 %v3001
    %v4203 = vunpack.c.l.b16 %v3002
    %v4204 = vunpack.c.h.b16 %v3002
    %v4205 = vunpack.c.l.b16 %v3003
    %v4206 = vunpack.c.l.b16 %v3004
    %v4207 = vunpack.c.h.b16 %v3004
    %v4208 = vunpack.c.l.b16 %v3005
    %v4209 = vunpack.c.h.b16 %v3005
    %v4210 = vunpack.c.l.b16 %v3006
    %v4211 = vunpack.c.h.b16 %v3006
    %v4212 = vunpack.c.l.b16 %v3007
    %v4213 = vunpack.c.l.b16 %v3008
    %v4214 = vunpack.c.h.b16 %v3008
    %v4215 = vunpack.c.l.b16 %v3009
    %v4216 = vunpack.c.h.b16 %v3009
    %v4217 = vunpack.c.l.b16 %v3010
    %v4218 = vunpack.c.h.b16 %v3010
    %v4219 = vunpack.c.l.b16 %v3011
    %v4220 = vunpack.c.l.b16 %v3012
    %v4221 = vunpack.c.h.b16 %v3012
    %v4222 = vunpack.c.l.b16 %v3013
    %v4223 = vunpack.c.h.b16 %v3013
    %v4224 = vunpack.c.l.b16 %v3014
    %v4225 = vunpack.c.h.b16 %v3014
    %v4226 = vunpack.c.l.b16 %v3015
    %v4227 = vunpack.c.l.b16 %v3016
    %v4228 = vunpack.c.h.b16 %v3016
    %v4229 = vunpack.c.l.b16 %v3017
    %v4230 = vunpack.c.h.b16 %v3017
    %v4231 = vunpack.c.l.b16 %v3018
    %v4232 = vunpack.c.h.b16 %v3018
    %v4233 = vunpack.c.l.b16 %v3019
    %v4234 = vunpack.c.l.b16 %v3020
    %v4235 = vunpack.c.h.b16 %v3020
    %v4236 = vunpack.c.l.b16 %v3021
    %v4237 = vunpack.c.h.b16 %v3021
    %v4238 = vunpack.c.l.b16 %v3022
    %v4239 = vunpack.c.h.b16 %v3022
    %v4240 = vunpack.c.l.b16 %v3023
    %v4241 = vunpack.c.l.b16 %v3024
    %v4242 = vunpack.c.h.b16 %v3024
    %v4243 = vunpack.c.l.b16 %v3025
    %v4244 = vunpack.c.h.b16 %v3025
    %v4245 = vunpack.c.l.b16 %v3026
    %v4246 = vunpack.c.h.b16 %v3026
    %v4247 = vunpack.c.l.b16 %v3027
    %v4248 = vunpack.c.l.b16 %v3028
    %v4249 = vunpack.c.h.b16 %v3028
    %v4250 = vunpack.c.l.b16 %v3029
    %v4251 = vunpack.c.h.b16 %v3029
    %v4252 = vunpack.c.l.b16 %v3030
    %v4253 = vunpack.c.h.b16 %v3030
    %v4254 = vunpack.c.l.b16 %v3031
    %v4255 = vunpack.c.l.b16 %v3032
    %v4256 = vunpack.c.h.b16 %v3032
    %v4257 = vunpack.c.l.b16 %v3033
    %v4258 = vunpack.c.h.b16 %v3033
    %v4259 = vunpack.c.l.b16 %v3034
    %v4260 = vunpack.c.h.b16 %v3034
    %v4261 = vunpack.c.l.b16 %v3035
    %v4262 = vunpack.c.l.b16 %v3036
    %v4263 = vunpack.c.h.b16 %v3036
    %v4264 = vunpack.c.l.b16 %v3037
    %v4265 = vunpack.c.h.b16 %v3037
    %v4266 = vunpack.c.l.b16 %v3038
    %v4267 = vunpack.c.h.b16 %v3038
    %v4268 = vunpack.c.l.b16 %v3039
    %v4269 = vunpack.c.l.b16 %v3040
    %v4270 = vunpack.c.h.b16 %v3040
    %v4271 = vunpack.c.l.b16 %v3041
    %v4272 = vunpack.c.h.b16 %v3041
    %v4273 = vunpack.c.l.b16 %v3042
    %v4274 = vunpack.c.h.b16 %v3042
    %v4275 = vunpack.c.l.b16 %v3043
    %v4276 = vunpack.c.l.b16 %v3044
    %v4277 = vunpack.c.h.b16 %v3044
    %v4278 = vunpack.c.l.b16 %v3045
    %v4279 = vunpack.c.h.b16 %v3045
    %v4280 = vunpack.c.l.b16 %v3046
    %v4281 = vunpack.c.h.b16 %v3046
    %v4282 = vunpack.c.l.b16 %v3047
    %v4283 = vunpack.c.l.b16 %v3048
    %v4284 = vunpack.c.h.b16 %v3048
    %v4285 = vunpack.c.l.b16 %v3049
    %v4286 = vunpack.c.h.b16 %v3049
    %v4287 = vunpack.c.l.b16 %v3050
    %v4288 = vunpack.c.h.b16 %v3050
    %v4289 = vunpack.c.l.b16 %v3051
    %v4290 = vunpack.c.l.b16 %v3052
    %v4291 = vunpack.c.h.b16 %v3052
    %v4292 = vunpack.c.l.b16 %v3053
    %v4293 = vunpack.c.h.b16 %v3053
    %v4294 = vunpack.c.l.b16 %v3054
    %v4295 = vunpack.c.h.b16 %v3054
    %v4296 = vunpack.c.l.b16 %v3055
    %v4297 = vunpack.c.l.b16 %v3056
    %v4298 = vunpack.c.h.b16 %v3056
    %v4299 = vunpack.c.l.b16 %v3057
    %v4300 = vunpack.c.h.b16 %v3057
    %v4301 = vunpack.c.l.b16 %v3058
    %v4302 = vunpack.c.h.b16 %v3058
    %v4303 = vunpack.c.l.b16 %v3059
    %v4304 = vunpack.c.l.b16 %v3060
    %v4305 = vunpack.c.h.b16 %v3060
    %v4306 = vunpack.c.l.b16 %v3061
    %v4307 = vunpack.c.h.b16 %v3061
    %v4308 = vunpack.c.l.b16 %v3062
    %v4309 = vunpack.c.h.b16 %v3062
    %v4310 = vunpack.c.l.b16 %v3063
    %v4311 = vunpack.c.l.b16 %v3064
    %v4312 = vunpack.c.h.b16 %v3064
    %v4313 = vunpack.c.l.b16 %v3065
    %v4314 = vunpack.c.h.b16 %v3065
    %v4315 = vunpack.c.l.b16 %v3066
    %v4316 = vunpack.c.h.b16 %v3066
    %v4317 = vunpack.c.l.b16 %v3067
    %v4318 = vunpack.c.l.b16 %v3068
    %v4319 = vunpack.c.h.b16 %v3068
    %v4320 = vunpack.c.l.b16 %v3069
    %v4321 = vunpack.c.h.b16 %v3069
    %v4322 = vunpack.c.l.b16 %v3070
    %v4323 = vunpack.c.h.b16 %v3070
    %v4324 = vunpack.c.l.b16 %v3071
    %v4325 = vunpack.c.l.b16 %v3072
    %v4326 = vunpack.c.h.b16 %v3072
    %v4327 = vunpack.c.l.b16 %v3073
    %v4328 = vunpack.c.h.b16 %v3073
    %v4329 = vunpack.c.l.b16 %v3074
    %v4330 = vunpack.c.h.b16 %v3074
    %v4331 = vunpack.c.l.b16 %v3075
    %v4332 = vunpack.c.l.b16 %v3076
    %v4333 = vunpack.c.h.b16 %v3076
    %v4334 = vunpack.c.l.b16 %v3077
    %v4335 = vunpack.c.h.b16 %v3077
    %v4336 = vunpack.c.l.b16 %v3078
    %v4337 = vunpack.c.h.b16 %v3078
    %v4338 = vunpack.c.l.b16 %v3079
    %v4339 = vunpack.c.l.b16 %v3080
    %v4340 = vunpack.c.h.b16 %v3080
    %v4341 = vunpack.c.l.b16 %v3081
    %v4342 = vunpack.c.h.b16 %v3081
    %v4343 = vunpack.c.l.b16 %v3082
    %v4344 = vunpack.c.h.b16 %v3082
    %v4345 = vunpack.c.l.b16 %v3083
    %v4346 = vunpack.c.l.b16 %v3084
    %v4347 = vunpack.c.h.b16 %v3084
    %v4348 = vunpack.c.l.b16 %v3085
    %v4349 = vunpack.c.h.b16 %v3085
    %v4350 = vunpack.c.l.b16 %v3086
    %v4351 = vunpack.c.h.b16 %v3086
    %v4352 = vunpack.c.l.b16 %v3087
    %v4353 = vunpack.c.l.b16 %v3088
    %v4354 = vunpack.c.h.b16 %v3088
    %v4355 = vunpack.c.l.b16 %v3089
    %v4356 = vunpack.c.h.b16 %v3089
    %v4357 = vunpack.c.l.b16 %v3090
    %v4358 = vunpack.c.h.b16 %v3090
    %v4359 = vunpack.c.l.b16 %v3091
    %v4360 = vunpack.c.l.b16 %v3092
    %v4361 = vunpack.c.h.b16 %v3092
    %v4362 = vunpack.c.l.b16 %v3093
    %v4363 = vunpack.c.h.b16 %v3093
    %v4364 = vunpack.c.l.b16 %v3094
    %v4365 = vunpack.c.h.b16 %v3094
    %v4366 = vunpack.c.l.b16 %v3095
    %v4367 = vunpack.c.l.b16 %v3096
    %v4368 = vunpack.c.h.b16 %v3096
    %v4369 = vunpack.c.l.b16 %v3097
    %v4370 = vunpack.c.h.b16 %v3097
    %v4371 = vunpack.c.l.b16 %v3098
    %v4372 = vunpack.c.h.b16 %v3098
    %v4373 = vunpack.c.l.b16 %v3099
    %v4374 = vunpack.c.l.b16 %v3100
    %v4375 = vunpack.c.h.b16 %v3100
    %v4376 = vunpack.c.l.b16 %v3101
    %v4377 = vunpack.c.h.b16 %v3101
    %v4378 = vunpack.c.l.b16 %v3102
    %v4379 = vunpack.c.h.b16 %v3102
    %v4380 = vunpack.c.l.b16 %v3103
    %v4381 = vunpack.c.l.b16 %v3104
    %v4382 = vunpack.c.h.b16 %v3104
    %v4383 = vunpack.c.l.b16 %v3105
    %v4384 = vunpack.c.h.b16 %v3105
    %v4385 = vunpack.c.l.b16 %v3106
    %v4386 = vunpack.c.h.b16 %v3106
    %v4387 = vunpack.c.l.b16 %v3107
    %v4388 = vunpack.c.l.b16 %v3108
    %v4389 = vunpack.c.h.b16 %v3108
    %v4390 = vunpack.c.l.b16 %v3109
    %v4391 = vunpack.c.h.b16 %v3109
    %v4392 = vunpack.c.l.b16 %v3110
    %v4393 = vunpack.c.h.b16 %v3110
    %v4394 = vunpack.c.l.b16 %v3111
    %v4395 = vunpack.c.l.b16 %v3112
    %v4396 = vunpack.c.h.b16 %v3112
    %v4397 = vunpack.c.l.b16 %v3113
    %v4398 = vunpack.c.h.b16 %v3113
    %v4399 = vunpack.c.l.b16 %v3114
    %v4400 = vunpack.c.h.b16 %v3114
    %v4401 = vunpack.c.l.b16 %v3115
    %v4402 = vunpack.c.l.b16 %v3116
    %v4403 = vunpack.c.h.b16 %v3116
    %v4404 = vunpack.c.l.b16 %v3117
    %v4405 = vunpack.c.h.b16 %v3117
    %v4406 = vunpack.c.l.b16 %v3118
    %v4407 = vunpack.c.h.b16 %v3118
    %v4408 = vunpack.c.l.b16 %v3119
    %v4409 = vunpack.c.l.b16 %v3120
    %v4410 = vunpack.c.h.b16 %v3120
    %v4411 = vunpack.c.l.b16 %v3121
    %v4412 = vunpack.c.h.b16 %v3121
    %v4413 = vunpack.c.l.b16 %v3122
    %v4414 = vunpack.c.h.b16 %v3122
    %v4415 = vunpack.c.l.b16 %v3123
    %v4416 = vunpack.c.l.b16 %v3124
    %v4417 = vunpack.c.h.b16 %v3124
    %v4418 = vunpack.c.l.b16 %v3125
    %v4419 = vunpack.c.h.b16 %v3125
    %v4420 = vunpack.c.l.b16 %v3126
    %v4421 = vunpack.c.h.b16 %v3126
    %v4422 = vunpack.c.l.b16 %v3127
    %v4423 = vunpack.c.l.b16 %v3128
    %v4424 = vunpack.c.h.b16 %v3128
    %v4425 = vunpack.c.l.b16 %v3129
    %v4426 = vunpack.c.h.b16 %v3129
    %v4427 = vunpack.c.l.b16 %v3130
    %v4428 = vunpack.c.h.b16 %v3130
    %v4429 = vunpack.c.l.b16 %v3131
    %v4430 = vunpack.c.l.b16 %v3132
    %v4431 = vunpack.c.h.b16 %v3132
    %v4432 = vunpack.c.l.b16 %v3133
    %v4433 = vunpack.c.h.b16 %v3133
    %v4434 = vunpack.c.l.b16 %v3134
    %v4435 = vunpack.c.h.b16 %v3134
    %v4436 = vunpack.c.l.b16 %v3135
    %v4437 = vunpack.c.l.b16 %v3136
    %v4438 = vunpack.c.h.b16 %v3136
    %v4439 = vunpack.c.l.b16 %v3137
    %v4440 = vunpack.c.h.b16 %v3137
    %v4441 = vunpack.c.l.b16 %v3138
    %v4442 = vunpack.c.h.b16 %v3138
    %v4443 = vunpack.c.l.b16 %v3139
    %v4444 = vunpack.c.l.b16 %v3140
    %v4445 = vunpack.c.h.b16 %v3140
    %v4446 = vunpack.c.l.b16 %v3141
    %v4447 = vunpack.c.h.b16 %v3141
    %v4448 = vunpack.c.l.b16 %v3142
    %v4449 = vunpack.c.h.b16 %v3142
    %v4450 = vunpack.c.l.b16 %v3143
    %v4451 = vunpack.c.l.b16 %v3144
    %v4452 = vunpack.c.h.b16 %v3144
    %v4453 = vunpack.c.l.b16 %v3145
    %v4454 = vunpack.c.h.b16 %v3145
    %v4455 = vunpack.c.l.b16 %v3146
    %v4456 = vunpack.c.h.b16 %v3146
    %v4457 = vunpack.c.l.b16 %v3147
    %v4458 = vunpack.c.l.b16 %v3148
    %v4459 = vunpack.c.h.b16 %v3148
    %v4460 = vunpack.c.l.b16 %v3149
    %v4461 = vunpack.c.h.b16 %v3149
    %v4462 = vunpack.c.l.b16 %v3150
    %v4463 = vunpack.c.h.b16 %v3150
    %v4464 = vunpack.c.l.b16 %v3151
    %v4465 = vunpack.c.l.b16 %v3152
    %v4466 = vunpack.c.h.b16 %v3152
    %v4467 = vunpack.c.l.b16 %v3153
    %v4468 = vunpack.c.h.b16 %v3153
    %v4469 = vunpack.c.l.b16 %v3154
    %v4470 = vunpack.c.h.b16 %v3154
    %v4471 = vunpack.c.l.b16 %v3155
    %v4472 = vunpack.c.l.b16 %v3156
    %v4473 = vunpack.c.h.b16 %v3156
    %v4474 = vunpack.c.l.b16 %v3157
    %v4475 = vunpack.c.h.b16 %v3157
    %v4476 = vunpack.c.l.b16 %v3158
    %v4477 = vunpack.c.h.b16 %v3158
    %v4478 = vunpack.c.l.b16 %v3159
    %v4479 = vunpack.c.l.b16 %v3160
    %v4480 = vunpack.c.h.b16 %v3160
    %v4481 = vunpack.c.l.b16 %v3161
    %v4482 = vunpack.c.h.b16 %v3161
    %v4483 = vunpack.c.l.b16 %v3162
    %v4484 = vunpack.c.h.b16 %v3162
    %v4485 = vunpack.c.l.b16 %v3163
    %v4486 = vunpack.c.l.b16 %v3164
    %v4487 = vunpack.c.h.b16 %v3164
    %v4488 = vunpack.c.l.b16 %v3165
    %v4489 = vunpack.c.h.b16 %v3165
    %v4490 = vunpack.c.l.b16 %v3166
    %v4491 = vunpack.c.h.b16 %v3166
    %v4492 = vunpack.c.l.b16 %v3167
    %v4493 = vunpack.c.l.b16 %v3168
    %v4494 = vunpack.c.h.b16 %v3168
    %v4495 = vunpack.c.l.b16 %v3169
    %v4496 = vunpack.c.h.b16 %v3169
    %v4497 = vunpack.c.l.b16 %v3170
    %v4498 = vunpack.c.h.b16 %v3170
    %v4499 = vunpack.c.l.b16 %v3171
    %v4500 = vunpack.c.l.b16 %v3172
    %v4501 = vunpack.c.h.b16 %v3172
    %v4502 = vunpack.c.l.b16 %v3173
    %v4503 = vunpack.c.h.b16 %v3173
    %v4504 = vunpack.c.l.b16 %v3174
    %v4505 = vunpack.c.h.b16 %v3174
    %v4506 = vunpack.c.l.b16 %v3175
    %v4507 = vunpack.c.l.b16 %v3176
    %v4508 = vunpack.c.h.b16 %v3176
    %v4509 = vunpack.c.l.b16 %v3177
    %v4510 = vunpack.c.h.b16 %v3177
    %v4511 = vunpack.c.l.b16 %v3178
    %v4512 = vunpack.c.h.b16 %v3178
    %v4513 = vunpack.c.l.b16 %v3179
    %v4514 = vunpack.c.l.b16 %v3180
    %v4515 = vunpack.c.h.b16 %v3180
    %v4516 = vunpack.c.l.b16 %v3181
    %v4517 = vunpack.c.h.b16 %v3181
    %v4518 = vunpack.c.l.b16 %v3182
    %v4519 = vunpack.c.h.b16 %v3182
    %v4520 = vunpack.c.l.b16 %v3183
    %v4521 = vunpack.c.l.b16 %v3184
    %v4522 = vunpack.c.h.b16 %v3184
    %v4523 = vunpack.c.l.b16 %v3185
    %v4524 = vunpack.c.h.b16 %v3185
    %v4525 = vunpack.c.l.b16 %v3186
    %v4526 = vunpack.c.h.b16 %v3186
    %v4527 = vunpack.c.l.b16 %v3187
    %v4528 = vunpack.c.l.b16 %v3188
    %v4529 = vunpack.c.h.b16 %v3188
    %v4530 = vunpack.c.l.b16 %v3189
    %v4531 = vunpack.c.h.b16 %v3189
    %v4532 = vunpack.c.l.b16 %v3190
    %v4533 = vunpack.c.h.b16 %v3190
    %v4534 = vunpack.c.l.b16 %v3191
    %v4535 = vunpack.c.l.b16 %v3192
    %v4536 = vunpack.c.h.b16 %v3192
    %v4537 = vunpack.c.l.b16 %v3193
    %v4538 = vunpack.c.h.b16 %v3193
    %v4539 = vunpack.c.l.b16 %v3194
    %v4540 = vunpack.c.h.b16 %v3194
    %v4541 = vunpack.c.l.b16 %v3195
    %v4542 = vunpack.c.l.b16 %v3196
    %v4543 = vunpack.c.h.b16 %v3196
    %v4544 = vunpack.c.l.b16 %v3197
    %v4545 = vunpack.c.h.b16 %v3197
    %v4546 = vunpack.c.l.b16 %v3198
    %v4547 = vunpack.c.h.b16 %v3198
    %v4548 = vunpack.c.l.b16 %v3199
    %v4549 = vunpack.c.l.b16 %v3200
    %v4550 = vunpack.c.h.b16 %v3200
    %v4551 = vunpack.c.l.b16 %v3201
    %v4552 = vunpack.c.h.b16 %v3201
    %v4553 = vunpack.c.l.b16 %v3202
    %v4554 = vunpack.c.h.b16 %v3202
    %v4555 = vunpack.c.l.b16 %v3203
    %v4556 = vunpack.c.l.b16 %v3204
    %v4557 = vunpack.c.h.b16 %v3204
    %v4558 = vunpack.c.l.b16 %v3205
    %v4559 = vunpack.c.h.b16 %v3205
    %v4560 = vunpack.c.l.b16 %v3206
    %v4561 = vunpack.c.h.b16 %v3206
    %v4562 = vunpack.c.l.b16 %v3207
    %v4563 = vunpack.c.l.b16 %v3208
    %v4564 = vunpack.c.h.b16 %v3208
    %v4565 = vunpack.c.l.b16 %v3209
    %v4566 = vunpack.c.h.b16 %v3209
    %v4567 = vunpack.c.l.b16 %v3210
    %v4568 = vunpack.c.h.b16 %v3210
    %v4569 = vunpack.c.l.b16 %v3211
    %v4570 = vunpack.c.l.b16 %v3212
    %v4571 = vunpack.c.h.b16 %v3212
    %v4572 = vunpack.c.l.b16 %v3213
    %v4573 = vunpack.c.h.b16 %v3213
    %v4574 = vunpack.c.l.b16 %v3214
    %v4575 = vunpack.c.h.b16 %v3214
    %v4576 = vunpack.c.l.b16 %v3215
    %v4577 = vunpack.c.l.b16 %v3216
    %v4578 = vunpack.c.h.b16 %v3216
    %v4579 = vunpack.c.l.b16 %v3217
    %v4580 = vunpack.c.h.b16 %v3217
    %v4581 = vunpack.c.l.b16 %v3218
    %v4582 = vunpack.c.h.b16 %v3218
    %v4583 = vunpack.c.l.b16 %v3219
    %v4584 = vunpack.c.l.b16 %v3220
    %v4585 = vunpack.c.h.b16 %v3220
    %v4586 = vunpack.c.l.b16 %v3221
    %v4587 = vunpack.c.h.b16 %v3221
    %v4588 = vunpack.c.l.b16 %v3222
    %v4589 = vunpack.c.h.b16 %v3222
    %v4590 = vunpack.c.l.b16 %v3223
    %v4591 = vunpack.c.l.b16 %v3224
    %v4592 = vunpack.c.h.b16 %v3224
    %v4593 = vunpack.c.l.b16 %v3225
    %v4594 = vunpack.c.h.b16 %v3225
    %v4595 = vunpack.c.l.b16 %v3226
    %v4596 = vunpack.c.h.b16 %v3226
    %v4597 = vunpack.c.l.b16 %v3227
    %v4598 = vunpack.c.l.b16 %v3228
    %v4599 = vunpack.c.h.b16 %v3228
    %v4600 = vunpack.c.l.b16 %v3229
    %v4601 = vunpack.c.h.b16 %v3229
    %v4602 = vunpack.c.l.b16 %v3230
    %v4603 = vunpack.c.h.b16 %v3230
    %v4604 = vunpack.c.l.b16 %v3231
    %v4605 = vunpack.c.l.b16 %v3232
    %v4606 = vunpack.c.h.b16 %v3232
    %v4607 = vunpack.c.l.b16 %v3233
    %v4608 = vunpack.c.h.b16 %v3233
    %v4609 = vunpack.c.l.b16 %v3234
    %v4610 = vunpack.c.h.b16 %v3234
    %v4611 = vunpack.c.l.b16 %v3235
    %v4612 = vunpack.c.l.b16 %v3236
    %v4613 = vunpack.c.h.b16 %v3236
    %v4614 = vunpack.c.l.b16 %v3237
    %v4615 = vunpack.c.h.b16 %v3237
    %v4616 = vunpack.c.l.b16 %v3238
    %v4617 = vunpack.c.h.b16 %v3238
    %v4618 = vunpack.c.l.b16 %v3239
    %v4619 = vunpack.c.l.b16 %v3240
    %v4620 = vunpack.c.h.b16 %v3240
    %v4621 = vunpack.c.l.b16 %v3241
    %v4622 = vunpack.c.h.b16 %v3241
    %v4623 = vunpack.c.l.b16 %v3242
    %v4624 = vunpack.c.h.b16 %v3242
    %v4625 = vunpack.c.l.b16 %v3243
    %v4626 = vunpack.c.l.b16 %v3244
    %v4627 = vunpack.c.h.b16 %v3244
    %v4628 = vunpack.c.l.b16 %v3245
    %v4629 = vunpack.c.h.b16 %v3245
    %v4630 = vunpack.c.l.b16 %v3246
    %v4631 = vunpack.c.h.b16 %v3246
    %v4632 = vunpack.c.l.b16 %v3247
    %v4633 = vunpack.c.l.b16 %v3248
    %v4634 = vunpack.c.h.b16 %v3248
    %v4635 = vunpack.c.l.b16 %v3249
    %v4636 = vunpack.c.h.b16 %v3249
    %v4637 = vunpack.c.l.b16 %v3250
    %v4638 = vunpack.c.h.b16 %v3250
    %v4639 = vunpack.c.l.b16 %v3251
    %v4640 = vunpack.c.l.b16 %v3252
    %v4641 = vunpack.c.h.b16 %v3252
    %v4642 = vunpack.c.l.b16 %v3253
    %v4643 = vunpack.c.h.b16 %v3253
    %v4644 = vunpack.c.l.b16 %v3254
    %v4645 = vunpack.c.h.b16 %v3254
    %v4646 = vunpack.c.l.b16 %v3255
    %v4647 = vunpack.c.l.b16 %v3256
    %v4648 = vunpack.c.h.b16 %v3256
    %v4649 = vunpack.c.l.b16 %v3257
    %v4650 = vunpack.c.h.b16 %v3257
    %v4651 = vunpack.c.l.b16 %v3258
    %v4652 = vunpack.c.h.b16 %v3258
    %v4653 = vunpack.c.l.b16 %v3259
    %v4654 = vunpack.c.l.b16 %v3260
    %v4655 = vunpack.c.h.b16 %v3260
    %v4656 = vunpack.c.l.b16 %v3261
    %v4657 = vunpack.c.h.b16 %v3261
    %v4658 = vunpack.c.l.b16 %v3262
    %v4659 = vunpack.c.h.b16 %v3262
    %v4660 = vunpack.c.l.b16 %v3263
    %v4661 = vunpack.c.l.b16 %v3264
    %v4662 = vunpack.c.h.b16 %v3264
    %v4663 = vunpack.c.l.b16 %v3265
    %v4664 = vunpack.c.h.b16 %v3265
    %v4665 = vunpack.c.l.b16 %v3266
    %v4666 = vunpack.c.h.b16 %v3266
    %v4667 = vunpack.c.l.b16 %v3267
    %v4668 = vunpack.c.l.b16 %v3268
    %v4669 = vunpack.c.h.b16 %v3268
    %v4670 = vunpack.c.l.b16 %v3269
    %v4671 = vunpack.c.h.b16 %v3269
    %v4672 = vunpack.c.l.b16 %v3270
    %v4673 = vunpack.c.h.b16 %v3270
    %v4674 = vunpack.c.l.b16 %v3271
    %v4675 = vunpack.c.l.b16 %v3272
    %v4676 = vunpack.c.h.b16 %v3272
    %v4677 = vunpack.c.l.b16 %v3273
    %v4678 = vunpack.c.h.b16 %v3273
    %v4679 = vunpack.c.l.b16 %v3274
    %v4680 = vunpack.c.h.b16 %v3274
    %v4681 = vunpack.c.l.b16 %v3275
    %v4682 = vunpack.c.l.b16 %v3276
    %v4683 = vunpack.c.h.b16 %v3276
    %v4684 = vunpack.c.l.b16 %v3277
    %v4685 = vunpack.c.h.b16 %v3277
    %v4686 = vunpack.c.l.b16 %v3278
    %v4687 = vunpack.c.h.b16 %v3278
    %v4688 = vunpack.c.l.b16 %v3279
    %v4689 = vunpack.c.l.b16 %v3280
    %v4690 = vunpack.c.h.b16 %v3280
    %v4691 = vunpack.c.l.b16 %v3281
    %v4692 = vunpack.c.h.b16 %v3281
    %v4693 = vunpack.c.l.b16 %v3282
    %v4694 = vunpack.c.h.b16 %v3282
    %v4695 = vunpack.c.l.b16 %v3283
    %v4696 = vunpack.c.l.b16 %v3284
    %v4697 = vunpack.c.h.b16 %v3284
    %v4698 = vunpack.c.l.b16 %v3285
    %v4699 = vunpack.c.h.b16 %v3285
    %v4700 = vunpack.c.l.b16 %v3286
    %v4701 = vunpack.c.h.b16 %v3286
    %v4702 = vunpack.c.l.b16 %v3287
    %v4703 = vunpack.c.l.b16 %v3288
    %v4704 = vunpack.c.h.b16 %v3288
    %v4705 = vunpack.c.l.b16 %v3289
    %v4706 = vunpack.c.h.b16 %v3289
    %v4707 = vunpack.c.l.b16 %v3290
    %v4708 = vunpack.c.h.b16 %v3290
    %v4709 = vunpack.c.l.b16 %v3291
    %v4710 = vunpack.c.l.b16 %v3292
    %v4711 = vunpack.c.h.b16 %v3292
    %v4712 = vunpack.c.l.b16 %v3293
    %v4713 = vunpack.c.h.b16 %v3293
    %v4714 = vunpack.c.l.b16 %v3294
    %v4715 = vunpack.c.h.b16 %v3294
    %v4716 = vunpack.c.l.b16 %v3295
    %v4717 = vunpack.c.l.b16 %v3296
    %v4718 = vunpack.c.h.b16 %v3296
    %v4719 = vunpack.c.l.b16 %v3297
    %v4720 = vunpack.c.h.b16 %v3297
    %v4721 = vunpack.c.l.b16 %v3298
    %v4722 = vunpack.c.h.b16 %v3298
    %v4723 = vunpack.c.l.b16 %v3299
    %v4724 = vpack.c.b16 %v3835, %v3828
    %v4725 = vpack.c.b16 %v3836, %v3829
    %v4726 = vpack.c.b16 %v3837, %v3830
    %v4727 = vpack.c.b16 %v3838, %v3831
    %v4728 = vpack.c.b16 %v3839, %v3832
    %v4729 = vpack.c.b16 %v3840, %v3833
    %v4730 = vpack.c.b16 %v3841, %v3834
    %v4731 = vpack.c.b16 %v3849, %v3842
    %v4732 = vpack.c.b16 %v3850, %v3843
    %v4733 = vpack.c.b16 %v3851, %v3844
    %v4734 = vpack.c.b16 %v3852, %v3845
    %v4735 = vpack.c.b16 %v3853, %v3846
    %v4736 = vpack.c.b16 %v3854, %v3847
    %v4737 = vpack.c.b16 %v3855, %v3848
    %v4738 = vpack.c.b16 %v3863, %v3856
    %v4739 = vpack.c.b16 %v3864, %v3857
    %v4740 = vpack.c.b16 %v3865, %v3858
    %v4741 = vpack.c.b16 %v3866, %v3859
    %v4742 = vpack.c.b16 %v3867, %v3860
    %v4743 = vpack.c.b16 %v3868, %v3861
    %v4744 = vpack.c.b16 %v3869, %v3862
    %v4745 = vpack.c.b16 %v3877, %v3870
    %v4746 = vpack.c.b16 %v3878, %v3871
    %v4747 = vpack.c.b16 %v3879, %v3872
    %v4748 = vpack.c.b16 %v3880, %v3873
    %v4749 = vpack.c.b16 %v3881, %v3874
    %v4750 = vpack.c.b16 %v3882, %v3875
    %v4751 = vpack.c.b16 %v3883, %v3876
    %v4752 = vpack.c.b16 %v3891, %v3884
    %v4753 = vpack.c.b16 %v3892, %v3885
    %v4754 = vpack.c.b16 %v3893, %v3886
    %v4755 = vpack.c.b16 %v3894, %v3887
    %v4756 = vpack.c.b16 %v3895, %v3888
    %v4757 = vpack.c.b16 %v3896, %v3889
    %v4758 = vpack.c.b16 %v3897, %v3890
    %v4759 = vpack.c.b16 %v3905, %v3898
    %v4760 = vpack.c.b16 %v3906, %v3899
    %v4761 = vpack.c.b16 %v3907, %v3900
    %v4762 = vpack.c.b16 %v3908, %v3901
    %v4763 = vpack.c.b16 %v3909, %v3902
    %v4764 = vpack.c.b16 %v3910, %v3903
    %v4765 = vpack.c.b16 %v3911, %v3904
    %v4766 = vpack.c.b16 %v3919, %v3912
    %v4767 = vpack.c.b16 %v3920, %v3913
    %v4768 = vpack.c.b16 %v3921, %v3914
    %v4769 = vpack.c.b16 %v3922, %v3915
    %v4770 = vpack.c.b16 %v3923, %v3916
    %v4771 = vpack.c.b16 %v3924, %v3917
    %v4772 = vpack.c.b16 %v3925, %v3918
    %v4773 = vpack.c.b16 %v3933, %v3926
    %v4774 = vpack.c.b16 %v3934, %v3927
    %v4775 = vpack.c.b16 %v3935, %v3928
    %v4776 = vpack.c.b16 %v3936, %v3929
    %v4777 = vpack.c.b16 %v3937, %v3930
    %v4778 = vpack.c.b16 %v3938, %v3931
    %v4779 = vpack.c.b16 %v3939, %v3932
    %v4780 = vpack.c.b16 %v3947, %v3940
    %v4781 = vpack.c.b16 %v3948, %v3941
    %v4782 = vpack.c.b16 %v3949, %v3942
    %v4783 = vpack.c.b16 %v3950, %v3943
    %v4784 = vpack.c.b16 %v3951, %v3944
    %v4785 = vpack.c.b16 %v3952, %v3945
    %v4786 = vpack.c.b16 %v3953, %v3946
    %v4787 = vpack.c.b16 %v3961, %v3954
    %v4788 = vpack.c.b16 %v3962, %v3955
    %v4789 = vpack.c.b16 %v3963, %v3956
    %v4790 = vpack.c.b16 %v3964, %v3957
    %v4791 = vpack.c.b16 %v3965, %v3958
    %v4792 = vpack.c.b16 %v3966, %v3959
    %v4793 = vpack.c.b16 %v3967, %v3960
    %v4794 = vpack.c.b16 %v3975, %v3968
    %v4795 = vpack.c.b16 %v3976, %v3969
    %v4796 = vpack.c.b16 %v3977, %v3970
    %v4797 = vpack.c.b16 %v3978, %v3971
    %v4798 = vpack.c.b16 %v3979, %v3972
    %v4799 = vpack.c.b16 %v3980, %v3973
    %v4800 = vpack.c.b16 %v3981, %v3974
    %v4801 = vpack.c.b16 %v3989, %v3982
    %v4802 = vpack.c.b16 %v3990, %v3983
    %v4803 = vpack.c.b16 %v3991, %v3984
    %v4804 = vpack.c.b16 %v3992, %v3985
    %v4805 = vpack.c.b16 %v3993, %v3986
    %v4806 = vpack.c.b16 %v3994, %v3987
    %v4807 = vpack.c.b16 %v3995, %v3988
    %v4808 = vpack.c.b16 %v4003, %v3996
    %v4809 = vpack.c.b16 %v4004, %v3997
    %v4810 = vpack.c.b16 %v4005, %v3998
    %v4811 = vpack.c.b16 %v4006, %v3999
    %v4812 = vpack.c.b16 %v4007, %v4000
    %v4813 = vpack.c.b16 %v4008, %v4001
    %v4814 = vpack.c.b16 %v4009, %v4002
    %v4815 = vpack.c.b16 %v4017, %v4010
    %v4816 = vpack.c.b16 %v4018, %v4011
    %v4817 = vpack.c.b16 %v4019, %v4012
    %v4818 = vpack.c.b16 %v4020, %v4013
    %v4819 = vpack.c.b16 %v4021, %v4014
    %v4820 = vpack.c.b16 %v4022, %v4015
    %v4821 = vpack.c.b16 %v4023, %v4016
    %v4822 = vpack.c.b16 %v4031, %v4024
    %v4823 = vpack.c.b16 %v4032, %v4025
    %v4824 = vpack.c.b16 %v4033, %v4026
    %v4825 = vpack.c.b16 %v4034, %v4027
    %v4826 = vpack.c.b16 %v4035, %v4028
    %v4827 = vpack.c.b16 %v4036, %v4029
    %v4828 = vpack.c.b16 %v4037, %v4030
    %v4829 = vpack.c.b16 %v4045, %v4038
    %v4830 = vpack.c.b16 %v4046, %v4039
    %v4831 = vpack.c.b16 %v4047, %v4040
    %v4832 = vpack.c.b16 %v4048, %v4041
    %v4833 = vpack.c.b16 %v4049, %v4042
    %v4834 = vpack.c.b16 %v4050, %v4043
    %v4835 = vpack.c.b16 %v4051, %v4044
    %v4836 = vpack.c.b16 %v4059, %v4052
    %v4837 = vpack.c.b16 %v4060, %v4053
    %v4838 = vpack.c.b16 %v4061, %v4054
    %v4839 = vpack.c.b16 %v4062, %v4055
    %v4840 = vpack.c.b16 %v4063, %v4056
    %v4841 = vpack.c.b16 %v4064, %v4057
    %v4842 = vpack.c.b16 %v4065, %v4058
    %v4843 = vpack.c.b16 %v4073, %v4066
    %v4844 = vpack.c.b16 %v4074, %v4067
    %v4845 = vpack.c.b16 %v4075, %v4068
    %v4846 = vpack.c.b16 %v4076, %v4069
    %v4847 = vpack.c.b16 %v4077, %v4070
    %v4848 = vpack.c.b16 %v4078, %v4071
    %v4849 = vpack.c.b16 %v4079, %v4072
    %v4850 = vpack.c.b16 %v4087, %v4080
    %v4851 = vpack.c.b16 %v4088, %v4081
    %v4852 = vpack.c.b16 %v4089, %v4082
    %v4853 = vpack.c.b16 %v4090, %v4083
    %v4854 = vpack.c.b16 %v4091, %v4084
    %v4855 = vpack.c.b16 %v4092, %v4085
    %v4856 = vpack.c.b16 %v4093, %v4086
    %v4857 = vpack.c.b16 %v4101, %v4094
    %v4858 = vpack.c.b16 %v4102, %v4095
    %v4859 = vpack.c.b16 %v4103, %v4096
    %v4860 = vpack.c.b16 %v4104, %v4097
    %v4861 = vpack.c.b16 %v4105, %v4098
    %v4862 = vpack.c.b16 %v4106, %v4099
    %v4863 = vpack.c.b16 %v4107, %v4100
    %v4864 = vpack.c.b16 %v4115, %v4108
    %v4865 = vpack.c.b16 %v4116, %v4109
    %v4866 = vpack.c.b16 %v4117, %v4110
    %v4867 = vpack.c.b16 %v4118, %v4111
    %v4868 = vpack.c.b16 %v4119, %v4112
    %v4869 = vpack.c.b16 %v4120, %v4113
    %v4870 = vpack.c.b16 %v4121, %v4114
    %v4871 = vpack.c.b16 %v4129, %v4122
    %v4872 = vpack.c.b16 %v4130, %v4123
    %v4873 = vpack.c.b16 %v4131, %v4124
    %v4874 = vpack.c.b16 %v4132, %v4125
    %v4875 = vpack.c.b16 %v4133, %v4126
    %v4876 = vpack.c.b16 %v4134, %v4127
    %v4877 = vpack.c.b16 %v4135, %v4128
    %v4878 = vpack.c.b16 %v4143, %v4136
    %v4879 = vpack.c.b16 %v4144, %v4137
    %v4880 = vpack.c.b16 %v4145, %v4138
    %v4881 = vpack.c.b16 %v4146, %v4139
    %v4882 = vpack.c.b16 %v4147, %v4140
    %v4883 = vpack.c.b16 %v4148, %v4141
    %v4884 = vpack.c.b16 %v4149, %v4142
    %v4885 = vpack.c.b16 %v4157, %v4150
    %v4886 = vpack.c.b16 %v4158, %v4151
    %v4887 = vpack.c.b16 %v4159, %v4152
    %v4888 = vpack.c.b16 %v4160, %v4153
    %v4889 = vpack.c.b16 %v4161, %v4154
    %v4890 = vpack.c.b16 %v4162, %v4155
    %v4891 = vpack.c.b16 %v4163, %v4156
    %v4892 = vpack.c.b16 %v4171, %v4164
    %v4893 = vpack.c.b16 %v4172, %v4165
    %v4894 = vpack.c.b16 %v4173, %v4166
    %v4895 = vpack.c.b16 %v4174, %v4167
    %v4896 = vpack.c.b16 %v4175, %v4168
    %v4897 = vpack.c.b16 %v4176, %v4169
    %v4898 = vpack.c.b16 %v4177, %v4170
    %v4899 = vpack.c.b16 %v4185, %v4178
    %v4900 = vpack.c.b16 %v4186, %v4179
    %v4901 = vpack.c.b16 %v4187, %v4180
    %v4902 = vpack.c.b16 %v4188, %v4181
    %v4903 = vpack.c.b16 %v4189, %v4182
    %v4904 = vpack.c.b16 %v4190, %v4183
    %v4905 = vpack.c.b16 %v4191, %v4184
    %v4906 = vpack.c.b16 %v4199, %v4192
    %v4907 = vpack.c.b16 %v4200, %v4193
    %v4908 = vpack.c.b16 %v4201, %v4194
    %v4909 = vpack.c.b16 %v4202, %v4195
    %v4910 = vpack.c.b16 %v4203, %v4196
    %v4911 = vpack.c.b16 %v4204, %v4197
    %v4912 = vpack.c.b16 %v4205, %v4198
    %v4913 = vpack.c.b16 %v4213, %v4206
    %v4914 = vpack.c.b16 %v4214, %v4207
    %v4915 = vpack.c.b16 %v4215, %v4208
    %v4916 = vpack.c.b16 %v4216, %v4209
    %v4917 = vpack.c.b16 %v4217, %v4210
    %v4918 = vpack.c.b16 %v4218, %v4211
    %v4919 = vpack.c.b16 %v4219, %v4212
    %v4920 = vpack.c.b16 %v4227, %v4220
    %v4921 = vpack.c.b16 %v4228, %v4221
    %v4922 = vpack.c.b16 %v4229, %v4222
    %v4923 = vpack.c.b16 %v4230, %v4223
    %v4924 = vpack.c.b16 %v4231, %v4224
    %v4925 = vpack.c.b16 %v4232, %v4225
    %v4926 = vpack.c.b16 %v4233, %v4226
    %v4927 = vpack.c.b16 %v4241, %v4234
    %v4928 = vpack.c.b16 %v4242, %v4235
    %v4929 = vpack.c.b16 %v4243, %v4236
    %v4930 = vpack.c.b16 %v4244, %v4237
    %v4931 = vpack.c.b16 %v4245, %v4238
    %v4932 = vpack.c.b16 %v4246, %v4239
    %v4933 = vpack.c.b16 %v4247, %v4240
    %v4934 = vpack.c.b16 %v4255, %v4248
    %v4935 = vpack.c.b16 %v4256, %v4249
    %v4936 = vpack.c.b16 %v4257, %v4250
    %v4937 = vpack.c.b16 %v4258, %v4251
    %v4938 = vpack.c.b16 %v4259, %v4252
    %v4939 = vpack.c.b16 %v4260, %v4253
    %v4940 = vpack.c.b16 %v4261, %v4254
    %v4941 = vpack.c.b16 %v4269, %v4262
    %v4942 = vpack.c.b16 %v4270, %v4263
    %v4943 = vpack.c.b16 %v4271, %v4264
    %v4944 = vpack.c.b16 %v4272, %v4265
    %v4945 = vpack.c.b16 %v4273, %v4266
    %v4946 = vpack.c.b16 %v4274, %v4267
    %v4947 = vpack.c.b16 %v4275, %v4268
    %v4948 = vpack.c.b16 %v4283, %v4276
    %v4949 = vpack.c.b16 %v4284, %v4277
    %v4950 = vpack.c.b16 %v4285, %v4278
    %v4951 = vpack.c.b16 %v4286, %v4279
    %v4952 = vpack.c.b16 %v4287, %v4280
    %v4953 = vpack.c.b16 %v4288, %v4281
    %v4954 = vpack.c.b16 %v4289, %v4282
    %v4955 = vpack.c.b16 %v4297, %v4290
    %v4956 = vpack.c.b16 %v4298, %v4291
    %v4957 = vpack.c.b16 %v4299, %v4292
    %v4958 = vpack.c.b16 %v4300, %v4293
    %v4959 = vpack.c.b16 %v4301, %v4294
    %v4960 = vpack.c.b16 %v4302, %v4295
    %v4961 = vpack.c.b16 %v4303, %v4296
    %v4962 = vpack.c.b16 %v4311, %v4304
    %v4963 = vpack.c.b16 %v4312, %v4305
    %v4964 = vpack.c.b16 %v4313, %v4306
    %v4965 = vpack.c.b16 %v4314, %v4307
    %v4966 = vpack.c.b16 %v4315, %v4308
    %v4967 = vpack.c.b16 %v4316, %v4309
    %v4968 = vpack.c.b16 %v4317, %v4310
    %v4969 = vpack.c.b16 %v4325, %v4318
    %v4970 = vpack.c.b16 %v4326, %v4319
    %v4971 = vpack.c.b16 %v4327, %v4320
    %v4972 = vpack.c.b16 %v4328, %v4321
    %v4973 = vpack.c.b16 %v4329, %v4322
    %v4974 = vpack.c.b16 %v4330, %v4323
    %v4975 = vpack.c.b16 %v4331, %v4324
    %v4976 = vpack.c.b16 %v4339, %v4332
    %v4977 = vpack.c.b16 %v4340, %v4333
    %v4978 = vpack.c.b16 %v4341, %v4334
    %v4979 = vpack.c.b16 %v4342, %v4335
    %v4980 = vpack.c.b16 %v4343, %v4336
    %v4981 = vpack.c.b16 %v4344, %v4337
    %v4982 = vpack.c.b16 %v4345, %v4338
    %v4983 = vpack.c.b16 %v4353, %v4346
    %v4984 = vpack.c.b16 %v4354, %v4347
    %v4985 = vpack.c.b16 %v4355, %v4348
    %v4986 = vpack.c.b16 %v4356, %v4349
    %v4987 = vpack.c.b16 %v4357, %v4350
    %v4988 = vpack.c.b16 %v4358, %v4351
    %v4989 = vpack.c.b16 %v4359, %v4352
    %v4990 = vpack.c.b16 %v4367, %v4360
    %v4991 = vpack.c.b16 %v4368, %v4361
    %v4992 = vpack.c.b16 %v4369, %v4362
    %v4993 = vpack.c.b16 %v4370, %v4363
    %v4994 = vpack.c.b16 %v4371, %v4364
    %v4995 = vpack.c.b16 %v4372, %v4365
    %v4996 = vpack.c.b16 %v4373, %v4366
    %v4997 = vpack.c.b16 %v4381, %v4374
    %v4998 = vpack.c.b16 %v4382, %v4375
    %v4999 = vpack.c.b16 %v4383, %v4376
    %v5000 = vpack.c.b16 %v4384, %v4377
    %v5001 = vpack.c.b16 %v4385, %v4378
    %v5002 = vpack.c.b16 %v4386, %v4379
    %v5003 = vpack.c.b16 %v4387, %v4380
    %v5004 = vpack.c.b16 %v4395, %v4388
    %v5005 = vpack.c.b16 %v4396, %v4389
    %v5006 = vpack.c.b16 %v4397, %v4390
    %v5007 = vpack.c.b16 %v4398, %v4391
    %v5008 = vpack.c.b16 %v4399, %v4392
    %v5009 = vpack.c.b16 %v4400, %v4393
    %v5010 = vpack.c.b16 %v4401, %v4394
    %v5011 = vpack.c.b16 %v4409, %v4402
    %v5012 = vpack.c.b16 %v4410, %v4403
    %v5013 = vpack.c.b16 %v4411, %v4404
    %v5014 = vpack.c.b16 %v4412, %v4405
    %v5015 = vpack.c.b16 %v4413, %v4406
    %v5016 = vpack.c.b16 %v4414, %v4407
    %v5017 = vpack.c.b16 %v4415, %v4408
    %v5018 = vpack.c.b16 %v4423, %v4416
    %v5019 = vpack.c.b16 %v4424, %v4417
    %v5020 = vpack.c.b16 %v4425, %v4418
    %v5021 = vpack.c.b16 %v4426, %v4419
    %v5022 = vpack.c.b16 %v4427, %v4420
    %v5023 = vpack.c.b16 %v4428, %v4421
    %v5024 = vpack.c.b16 %v4429, %v4422
    %v5025 = vpack.c.b16 %v4437, %v4430
    %v5026 = vpack.c.b16 %v4438, %v4431
    %v5027 = vpack.c.b16 %v4439, %v4432
    %v5028 = vpack.c.b16 %v4440, %v4433
    %v5029 = vpack.c.b16 %v4441, %v4434
    %v5030 = vpack.c.b16 %v4442, %v4435
    %v5031 = vpack.c.b16 %v4443, %v4436
    %v5032 = vpack.c.b16 %v4451, %v4444
    %v5033 = vpack.c.b16 %v4452, %v4445
    %v5034 = vpack.c.b16 %v4453, %v4446
    %v5035 = vpack.c.b16 %v4454, %v4447
    %v5036 = vpack.c.b16 %v4455, %v4448
    %v5037 = vpack.c.b16 %v4456, %v4449
    %v5038 = vpack.c.b16 %v4457, %v4450
    %v5039 = vpack.c.b16 %v4465, %v4458
    %v5040 = vpack.c.b16 %v4466, %v4459
    %v5041 = vpack.c.b16 %v4467, %v4460
    %v5042 = vpack.c.b16 %v4468, %v4461
    %v5043 = vpack.c.b16 %v4469, %v4462
    %v5044 = vpack.c.b16 %v4470, %v4463
    %v5045 = vpack.c.b16 %v4471, %v4464
    %v5046 = vpack.c.b16 %v4479, %v4472
    %v5047 = vpack.c.b16 %v4480, %v4473
    %v5048 = vpack.c.b16 %v4481, %v4474
    %v5049 = vpack.c.b16 %v4482, %v4475
    %v5050 = vpack.c.b16 %v4483, %v4476
    %v5051 = vpack.c.b16 %v4484, %v4477
    %v5052 = vpack.c.b16 %v4485, %v4478
    %v5053 = vpack.c.b16 %v4493, %v4486
    %v5054 = vpack.c.b16 %v4494, %v4487
    %v5055 = vpack.c.b16 %v4495, %v4488
    %v5056 = vpack.c.b16 %v4496, %v4489
    %v5057 = vpack.c.b16 %v4497, %v4490
    %v5058 = vpack.c.b16 %v4498, %v4491
    %v5059 = vpack.c.b16 %v4499, %v4492
    %v5060 = vpack.c.b16 %v4507, %v4500
    %v5061 = vpack.c.b16 %v4508, %v4501
    %v5062 = vpack.c.b16 %v4509, %v4502
    %v5063 = vpack.c.b16 %v4510, %v4503
    %v5064 = vpack.c.b16 %v4511, %v4504
    %v5065 = vpack.c.b16 %v4512, %v4505
    %v5066 = vpack.c.b16 %v4513, %v4506
    %v5067 = vpack.c.b16 %v4521, %v4514
    %v5068 = vpack.c.b16 %v4522, %v4515
    %v5069 = vpack.c.b16 %v4523, %v4516
    %v5070 = vpack.c.b16 %v4524, %v4517
    %v5071 = vpack.c.b16 %v4525, %v4518
    %v5072 = vpack.c.b16 %v4526, %v4519
    %v5073 = vpack.c.b16 %v4527, %v4520
    %v5074 = vpack.c.b16 %v4535, %v4528
    %v5075 = vpack.c.b16 %v4536, %v4529
    %v5076 = vpack.c.b16 %v4537, %v4530
    %v5077 = vpack.c.b16 %v4538, %v4531
    %v5078 = vpack.c.b16 %v4539, %v4532
    %v5079 = vpack.c.b16 %v4540, %v4533
    %v5080 = vpack.c.b16 %v4541, %v4534
    %v5081 = vpack.c.b16 %v4549, %v4542
    %v5082 = vpack.c.b16 %v4550, %v4543
    %v5083 = vpack.c.b16 %v4551, %v4544
    %v5084 = vpack.c.b16 %v4552, %v4545
    %v5085 = vpack.c.b16 %v4553, %v4546
    %v5086 = vpack.c.b16 %v4554, %v4547
    %v5087 = vpack.c.b16 %v4555, %v4548
    %v5088 = vpack.c.b16 %v4563, %v4556
    %v5089 = vpack.c.b16 %v4564, %v4557
    %v5090 = vpack.c.b16 %v4565, %v4558
    %v5091 = vpack.c.b16 %v4566, %v4559
    %v5092 = vpack.c.b16 %v4567, %v4560
    %v5093 = vpack.c.b16 %v4568, %v4561
    %v5094 = vpack.c.b16 %v4569, %v4562
    %v5095 = vpack.c.b16 %v4577, %v4570
    %v5096 = vpack.c.b16 %v4578, %v4571
    %v5097 = vpack.c.b16 %v4579, %v4572
    %v5098 = vpack.c.b16 %v4580, %v4573
    %v5099 = vpack.c.b16 %v4581, %v4574
    %v5100 = vpack.c.b16 %v4582, %v4575
    %v5101 = vpack.c.b16 %v4583, %v4576
    %v5102 = vpack.c.b16 %v4591, %v4584
    %v5103 = vpack.c.b16 %v4592, %v4585
    %v5104 = vpack.c.b16 %v4593, %v4586
    %v5105 = vpack.c.b16 %v4594, %v4587
    %v5106 = vpack.c.b16 %v4595, %v4588
    %v5107 = vpack.c.b16 %v4596, %v4589
    %v5108 = vpack.c.b16 %v4597, %v4590
    %v5109 = vpack.c.b16 %v4605, %v4598
    %v5110 = vpack.c.b16 %v4606, %v4599
    %v5111 = vpack.c.b16 %v4607, %v4600
    %v5112 = vpack.c.b16 %v4608, %v4601
    %v5113 = vpack.c.b16 %v4609, %v4602
    %v5114 = vpack.c.b16 %v4610, %v4603
    %v5115 = vpack.c.b16 %v4611, %v4604
    %v5116 = vpack.c.b16 %v4619, %v4612
    %v5117 = vpack.c.b16 %v4620, %v4613
    %v5118 = vpack.c.b16 %v4621, %v4614
    %v5119 = vpack.c.b16 %v4622, %v4615
    %v5120 = vpack.c.b16 %v4623, %v4616
    %v5121 = vpack.c.b16 %v4624, %v4617
    %v5122 = vpack.c.b16 %v4625, %v4618
    %v5123 = vpack.c.b16 %v4633, %v4626
    %v5124 = vpack.c.b16 %v4634, %v4627
    %v5125 = vpack.c.b16 %v4635, %v4628
    %v5126 = vpack.c.b16 %v4636, %v4629
    %v5127 = vpack.c.b16 %v4637, %v4630
    %v5128 = vpack.c.b16 %v4638, %v4631
    %v5129 = vpack.c.b16 %v4639, %v4632
    %v5130 = vpack.c.b16 %v4647, %v4640
    %v5131 = vpack.c.b16 %v4648, %v4641
    %v5132 = vpack.c.b16 %v4649, %v4642
    %v5133 = vpack.c.b16 %v4650, %v4643
    %v5134 = vpack.c.b16 %v4651, %v4644
    %v5135 = vpack.c.b16 %v4652, %v4645
    %v5136 = vpack.c.b16 %v4653, %v4646
    %v5137 = vpack.c.b16 %v4661, %v4654
    %v5138 = vpack.c.b16 %v4662, %v4655
    %v5139 = vpack.c.b16 %v4663, %v4656
    %v5140 = vpack.c.b16 %v4664, %v4657
    %v5141 = vpack.c.b16 %v4665, %v4658
    %v5142 = vpack.c.b16 %v4666, %v4659
    %v5143 = vpack.c.b16 %v4667, %v4660
    %v5144 = vpack.c.b16 %v4675, %v4668
    %v5145 = vpack.c.b16 %v4676, %v4669
    %v5146 = vpack.c.b16 %v4677, %v4670
    %v5147 = vpack.c.b16 %v4678, %v4671
    %v5148 = vpack.c.b16 %v4679, %v4672
    %v5149 = vpack.c.b16 %v4680, %v4673
    %v5150 = vpack.c.b16 %v4681, %v4674
    %v5151 = vpack.c.b16 %v4689, %v4682
    %v5152 = vpack.c.b16 %v4690, %v4683
    %v5153 = vpack.c.b16 %v4691, %v4684
    %v5154 = vpack.c.b16 %v4692, %v4685
    %v5155 = vpack.c.b16 %v4693, %v4686
    %v5156 = vpack.c.b16 %v4694, %v4687
    %v5157 = vpack.c.b16 %v4695, %v4688
    %v5158 = vpack.c.b16 %v4703, %v4696
    %v5159 = vpack.c.b16 %v4704, %v4697
    %v5160 = vpack.c.b16 %v4705, %v4698
    %v5161 = vpack.c.b16 %v4706, %v4699
    %v5162 = vpack.c.b16 %v4707, %v4700
    %v5163 = vpack.c.b16 %v4708, %v4701
    %v5164 = vpack.c.b16 %v4709, %v4702
    %v5165 = vpack.c.b16 %v4717, %v4710
    %v5166 = vpack.c.b16 %v4718, %v4711
    %v5167 = vpack.c.b16 %v4719, %v4712
    %v5168 = vpack.c.b16 %v4720, %v4713
    %v5169 = vpack.c.b16 %v4721, %v4714
    %v5170 = vpack.c.b16 %v4722, %v4715
    %v5171 = vpack.c.b16 %v4723, %v4716
    %5620 = vmatpush.bf16.msra.mxu0 %v4773
    %5621 = vmatpush.bf16.msra.mxu0 %v4766
    %5622 = vmatpush.bf16.msra.mxu0 %v4759
    %5623 = vmatpush.bf16.msra.mxu0 %v4752
    %5624 = vmatpush.bf16.msra.mxu0 %v4745
    %5625 = vmatpush.bf16.msra.mxu0 %v4738
    %5626 = vmatpush.bf16.msra.mxu0 %v4731
    %5627 = vmatpush.bf16.msra.mxu0 %v4724
    %5628 = vmatmul.bf16.gmra.mxu0 %v2780
    %v5629 = vpop.f32.mrf.mxu0
    %v5630 = vadd.f32 %v3302, %v5629
    %v5631 = vpop.f32.mrf.mxu0
    %5632 = vdwg.mxu0
    %5633 = vmatpush.bf16.msra.mxu0 %v4829
    %5634 = vmatpush.bf16.msra.mxu0 %v4822
    %5635 = vmatpush.bf16.msra.mxu0 %v4815
    %5636 = vmatpush.bf16.msra.mxu0 %v4808
    %5637 = vmatpush.bf16.msra.mxu0 %v4801
    %5638 = vmatpush.bf16.msra.mxu0 %v4794
    %5639 = vmatpush.bf16.msra.mxu0 %v4787
    %5640 = vmatpush.bf16.msra.mxu0 %v4780
    %5641 = vmatmul.bf16.gmra.mxu0 %v2781
    %v5642 = vpop.f32.mrf.mxu0
    %v5643 = vadd.f32 %v5630, %v5642
    %v5644 = vpop.f32.mrf.mxu0
    %5645 = vdwg.mxu0
    %5646 = vmatpush.bf16.msra.mxu0 %v4885
    %5647 = vmatpush.bf16.msra.mxu0 %v4878
    %5648 = vmatpush.bf16.msra.mxu0 %v4871
    %5649 = vmatpush.bf16.msra.mxu0 %v4864
    %5650 = vmatpush.bf16.msra.mxu0 %v4857
    %5651 = vmatpush.bf16.msra.mxu0 %v4850
    %5652 = vmatpush.bf16.msra.mxu0 %v4843
    %5653 = vmatpush.bf16.msra.mxu0 %v4836
    %5654 = vmatmul.bf16.gmra.mxu0 %v2782
    %v5655 = vpop.f32.mrf.mxu0
    %v5656 = vadd.f32 %v5643, %v5655
    %v5657 = vpop.f32.mrf.mxu0
    %5658 = vdwg.mxu0
    %5659 = vmatpush.bf16.msra.mxu0 %v4941
    %5660 = vmatpush.bf16.msra.mxu0 %v4934
    %5661 = vmatpush.bf16.msra.mxu0 %v4927
    %5662 = vmatpush.bf16.msra.mxu0 %v4920
    %5663 = vmatpush.bf16.msra.mxu0 %v4913
    %5664 = vmatpush.bf16.msra.mxu0 %v4906
    %5665 = vmatpush.bf16.msra.mxu0 %v4899
    %5666 = vmatpush.bf16.msra.mxu0 %v4892
    %5667 = vmatmul.bf16.gmra.mxu0 %v2783
    %v5668 = vpop.f32.mrf.mxu0
    %v5669 = vadd.f32 %v5656, %v5668
    %v5670 = vpop.f32.mrf.mxu0
    %5671 = vdwg.mxu0
    %5672 = vmatpush.bf16.msra.mxu0 %v4997
    %5673 = vmatpush.bf16.msra.mxu0 %v4990
    %5674 = vmatpush.bf16.msra.mxu0 %v4983
    %5675 = vmatpush.bf16.msra.mxu0 %v4976
    %5676 = vmatpush.bf16.msra.mxu0 %v4969
    %5677 = vmatpush.bf16.msra.mxu0 %v4962
    %5678 = vmatpush.bf16.msra.mxu0 %v4955
    %5679 = vmatpush.bf16.msra.mxu0 %v4948
    %5680 = vmatmul.bf16.gmra.mxu0 %v2784
    %v5681 = vpop.f32.mrf.mxu0
    %v5682 = vadd.f32 %v5669, %v5681
    %v5683 = vpop.f32.mrf.mxu0
    %5684 = vdwg.mxu0
    %5685 = vmatpush.bf16.msra.mxu0 %v5053
    %5686 = vmatpush.bf16.msra.mxu0 %v5046
    %5687 = vmatpush.bf16.msra.mxu0 %v5039
    %5688 = vmatpush.bf16.msra.mxu0 %v5032
    %5689 = vmatpush.bf16.msra.mxu0 %v5025
    %5690 = vmatpush.bf16.msra.mxu0 %v5018
    %5691 = vmatpush.bf16.msra.mxu0 %v5011
    %5692 = vmatpush.bf16.msra.mxu0 %v5004
    %5693 = vmatmul.bf16.gmra.mxu0 %v2785
    %v5694 = vpop.f32.mrf.mxu0
    %v5695 = vadd.f32 %v5682, %v5694
    %v5696 = vpop.f32.mrf.mxu0
    %5697 = vdwg.mxu0
    %5698 = vmatpush.bf16.msra.mxu0 %v5109
    %5699 = vmatpush.bf16.msra.mxu0 %v5102
    %5700 = vmatpush.bf16.msra.mxu0 %v5095
    %5701 = vmatpush.bf16.msra.mxu0 %v5088
    %5702 = vmatpush.bf16.msra.mxu0 %v5081
    %5703 = vmatpush.bf16.msra.mxu0 %v5074
    %5704 = vmatpush.bf16.msra.mxu0 %v5067
    %5705 = vmatpush.bf16.msra.mxu0 %v5060
    %5706 = vmatmul.bf16.gmra.mxu0 %v2786
    %v5707 = vpop.f32.mrf.mxu0
    %v5708 = vadd.f32 %v5695, %v5707
    %v5709 = vpop.f32.mrf.mxu0
    %5710 = vdwg.mxu0
    %5711 = vmatpush.bf16.msra.mxu0 %v5165
    %5712 = vmatpush.bf16.msra.mxu0 %v5158
    %5713 = vmatpush.bf16.msra.mxu0 %v5151
    %5714 = vmatpush.bf16.msra.mxu0 %v5144
    %5715 = vmatpush.bf16.msra.mxu0 %v5137
    %5716 = vmatpush.bf16.msra.mxu0 %v5130
    %5717 = vmatpush.bf16.msra.mxu0 %v5123
    %5718 = vmatpush.bf16.msra.mxu0 %v5116
    %5719 = vmatmul.bf16.gmra.mxu0 %v2787
    %v5720 = vpop.f32.mrf.mxu0
    %v5721 = vadd.f32 %v5708, %v5720
    %v5722 = vpop.f32.mrf.mxu0
    %5723 = vdwg.mxu0
    %5724 = vmatpush.bf16.msra.mxu0 %v4774
    %5725 = vmatpush.bf16.msra.mxu0 %v4767
    %5726 = vmatpush.bf16.msra.mxu0 %v4760
    %5727 = vmatpush.bf16.msra.mxu0 %v4753
    %5728 = vmatpush.bf16.msra.mxu0 %v4746
    %5729 = vmatpush.bf16.msra.mxu0 %v4739
    %5730 = vmatpush.bf16.msra.mxu0 %v4732
    %5731 = vmatpush.bf16.msra.mxu0 %v4725
    %5732 = vmatmul.bf16.gmra.mxu0 %v2780
    %v5733 = vpop.f32.mrf.mxu0
    %v5734 = vadd.f32 %v3303, %v5733
    %v5735 = vpop.f32.mrf.mxu0
    %5736 = vdwg.mxu0
    %5737 = vmatpush.bf16.msra.mxu0 %v4830
    %5738 = vmatpush.bf16.msra.mxu0 %v4823
    %5739 = vmatpush.bf16.msra.mxu0 %v4816
    %5740 = vmatpush.bf16.msra.mxu0 %v4809
    %5741 = vmatpush.bf16.msra.mxu0 %v4802
    %5742 = vmatpush.bf16.msra.mxu0 %v4795
    %5743 = vmatpush.bf16.msra.mxu0 %v4788
    %5744 = vmatpush.bf16.msra.mxu0 %v4781
    %5745 = vmatmul.bf16.gmra.mxu0 %v2781
    %v5746 = vpop.f32.mrf.mxu0
    %v5747 = vadd.f32 %v5734, %v5746
    %v5748 = vpop.f32.mrf.mxu0
    %5749 = vdwg.mxu0
    %5750 = vmatpush.bf16.msra.mxu0 %v4886
    %5751 = vmatpush.bf16.msra.mxu0 %v4879
    %5752 = vmatpush.bf16.msra.mxu0 %v4872
    %5753 = vmatpush.bf16.msra.mxu0 %v4865
    %5754 = vmatpush.bf16.msra.mxu0 %v4858
    %5755 = vmatpush.bf16.msra.mxu0 %v4851
    %5756 = vmatpush.bf16.msra.mxu0 %v4844
    %5757 = vmatpush.bf16.msra.mxu0 %v4837
    %5758 = vmatmul.bf16.gmra.mxu0 %v2782
    %v5759 = vpop.f32.mrf.mxu0
    %v5760 = vadd.f32 %v5747, %v5759
    %v5761 = vpop.f32.mrf.mxu0
    %5762 = vdwg.mxu0
    %5763 = vmatpush.bf16.msra.mxu0 %v4942
    %5764 = vmatpush.bf16.msra.mxu0 %v4935
    %5765 = vmatpush.bf16.msra.mxu0 %v4928
    %5766 = vmatpush.bf16.msra.mxu0 %v4921
    %5767 = vmatpush.bf16.msra.mxu0 %v4914
    %5768 = vmatpush.bf16.msra.mxu0 %v4907
    %5769 = vmatpush.bf16.msra.mxu0 %v4900
    %5770 = vmatpush.bf16.msra.mxu0 %v4893
    %5771 = vmatmul.bf16.gmra.mxu0 %v2783
    %v5772 = vpop.f32.mrf.mxu0
    %v5773 = vadd.f32 %v5760, %v5772
    %v5774 = vpop.f32.mrf.mxu0
    %5775 = vdwg.mxu0
    %5776 = vmatpush.bf16.msra.mxu0 %v4998
    %5777 = vmatpush.bf16.msra.mxu0 %v4991
    %5778 = vmatpush.bf16.msra.mxu0 %v4984
    %5779 = vmatpush.bf16.msra.mxu0 %v4977
    %5780 = vmatpush.bf16.msra.mxu0 %v4970
    %5781 = vmatpush.bf16.msra.mxu0 %v4963
    %5782 = vmatpush.bf16.msra.mxu0 %v4956
    %5783 = vmatpush.bf16.msra.mxu0 %v4949
    %5784 = vmatmul.bf16.gmra.mxu0 %v2784
    %v5785 = vpop.f32.mrf.mxu0
    %v5786 = vadd.f32 %v5773, %v5785
    %v5787 = vpop.f32.mrf.mxu0
    %5788 = vdwg.mxu0
    %5789 = vmatpush.bf16.msra.mxu0 %v5054
    %5790 = vmatpush.bf16.msra.mxu0 %v5047
    %5791 = vmatpush.bf16.msra.mxu0 %v5040
    %5792 = vmatpush.bf16.msra.mxu0 %v5033
    %5793 = vmatpush.bf16.msra.mxu0 %v5026
    %5794 = vmatpush.bf16.msra.mxu0 %v5019
    %5795 = vmatpush.bf16.msra.mxu0 %v5012
    %5796 = vmatpush.bf16.msra.mxu0 %v5005
    %5797 = vmatmul.bf16.gmra.mxu0 %v2785
    %v5798 = vpop.f32.mrf.mxu0
    %v5799 = vadd.f32 %v5786, %v5798
    %v5800 = vpop.f32.mrf.mxu0
    %5801 = vdwg.mxu0
    %5802 = vmatpush.bf16.msra.mxu0 %v5110
    %5803 = vmatpush.bf16.msra.mxu0 %v5103
    %5804 = vmatpush.bf16.msra.mxu0 %v5096
    %5805 = vmatpush.bf16.msra.mxu0 %v5089
    %5806 = vmatpush.bf16.msra.mxu0 %v5082
    %5807 = vmatpush.bf16.msra.mxu0 %v5075
    %5808 = vmatpush.bf16.msra.mxu0 %v5068
    %5809 = vmatpush.bf16.msra.mxu0 %v5061
    %5810 = vmatmul.bf16.gmra.mxu0 %v2786
    %v5811 = vpop.f32.mrf.mxu0
    %v5812 = vadd.f32 %v5799, %v5811
    %v5813 = vpop.f32.mrf.mxu0
    %5814 = vdwg.mxu0
    %5815 = vmatpush.bf16.msra.mxu0 %v5166
    %5816 = vmatpush.bf16.msra.mxu0 %v5159
    %5817 = vmatpush.bf16.msra.mxu0 %v5152
    %5818 = vmatpush.bf16.msra.mxu0 %v5145
    %5819 = vmatpush.bf16.msra.mxu0 %v5138
    %5820 = vmatpush.bf16.msra.mxu0 %v5131
    %5821 = vmatpush.bf16.msra.mxu0 %v5124
    %5822 = vmatpush.bf16.msra.mxu0 %v5117
    %5823 = vmatmul.bf16.gmra.mxu0 %v2787
    %v5824 = vpop.f32.mrf.mxu0
    %v5825 = vadd.f32 %v5812, %v5824
    %v5826 = vpop.f32.mrf.mxu0
    %5827 = vdwg.mxu0
    %5828 = vmatpush.bf16.msra.mxu0 %v4775
    %5829 = vmatpush.bf16.msra.mxu0 %v4768
    %5830 = vmatpush.bf16.msra.mxu0 %v4761
    %5831 = vmatpush.bf16.msra.mxu0 %v4754
    %5832 = vmatpush.bf16.msra.mxu0 %v4747
    %5833 = vmatpush.bf16.msra.mxu0 %v4740
    %5834 = vmatpush.bf16.msra.mxu0 %v4733
    %5835 = vmatpush.bf16.msra.mxu0 %v4726
    %5836 = vmatmul.bf16.gmra.mxu0 %v2780
    %v5837 = vpop.f32.mrf.mxu0
    %v5838 = vadd.f32 %v3304, %v5837
    %v5839 = vpop.f32.mrf.mxu0
    %5840 = vdwg.mxu0
    %5841 = vmatpush.bf16.msra.mxu0 %v4831
    %5842 = vmatpush.bf16.msra.mxu0 %v4824
    %5843 = vmatpush.bf16.msra.mxu0 %v4817
    %5844 = vmatpush.bf16.msra.mxu0 %v4810
    %5845 = vmatpush.bf16.msra.mxu0 %v4803
    %5846 = vmatpush.bf16.msra.mxu0 %v4796
    %5847 = vmatpush.bf16.msra.mxu0 %v4789
    %5848 = vmatpush.bf16.msra.mxu0 %v4782
    %5849 = vmatmul.bf16.gmra.mxu0 %v2781
    %v5850 = vpop.f32.mrf.mxu0
    %v5851 = vadd.f32 %v5838, %v5850
    %v5852 = vpop.f32.mrf.mxu0
    %5853 = vdwg.mxu0
    %5854 = vmatpush.bf16.msra.mxu0 %v4887
    %5855 = vmatpush.bf16.msra.mxu0 %v4880
    %5856 = vmatpush.bf16.msra.mxu0 %v4873
    %5857 = vmatpush.bf16.msra.mxu0 %v4866
    %5858 = vmatpush.bf16.msra.mxu0 %v4859
    %5859 = vmatpush.bf16.msra.mxu0 %v4852
    %5860 = vmatpush.bf16.msra.mxu0 %v4845
    %5861 = vmatpush.bf16.msra.mxu0 %v4838
    %5862 = vmatmul.bf16.gmra.mxu0 %v2782
    %v5863 = vpop.f32.mrf.mxu0
    %v5864 = vadd.f32 %v5851, %v5863
    %v5865 = vpop.f32.mrf.mxu0
    %5866 = vdwg.mxu0
    %5867 = vmatpush.bf16.msra.mxu0 %v4943
    %5868 = vmatpush.bf16.msra.mxu0 %v4936
    %5869 = vmatpush.bf16.msra.mxu0 %v4929
    %5870 = vmatpush.bf16.msra.mxu0 %v4922
    %5871 = vmatpush.bf16.msra.mxu0 %v4915
    %5872 = vmatpush.bf16.msra.mxu0 %v4908
    %5873 = vmatpush.bf16.msra.mxu0 %v4901
    %5874 = vmatpush.bf16.msra.mxu0 %v4894
    %5875 = vmatmul.bf16.gmra.mxu0 %v2783
    %v5876 = vpop.f32.mrf.mxu0
    %v5877 = vadd.f32 %v5864, %v5876
    %v5878 = vpop.f32.mrf.mxu0
    %5879 = vdwg.mxu0
    %5880 = vmatpush.bf16.msra.mxu0 %v4999
    %5881 = vmatpush.bf16.msra.mxu0 %v4992
    %5882 = vmatpush.bf16.msra.mxu0 %v4985
    %5883 = vmatpush.bf16.msra.mxu0 %v4978
    %5884 = vmatpush.bf16.msra.mxu0 %v4971
    %5885 = vmatpush.bf16.msra.mxu0 %v4964
    %5886 = vmatpush.bf16.msra.mxu0 %v4957
    %5887 = vmatpush.bf16.msra.mxu0 %v4950
    %5888 = vmatmul.bf16.gmra.mxu0 %v2784
    %v5889 = vpop.f32.mrf.mxu0
    %v5890 = vadd.f32 %v5877, %v5889
    %v5891 = vpop.f32.mrf.mxu0
    %5892 = vdwg.mxu0
    %5893 = vmatpush.bf16.msra.mxu0 %v5055
    %5894 = vmatpush.bf16.msra.mxu0 %v5048
    %5895 = vmatpush.bf16.msra.mxu0 %v5041
    %5896 = vmatpush.bf16.msra.mxu0 %v5034
    %5897 = vmatpush.bf16.msra.mxu0 %v5027
    %5898 = vmatpush.bf16.msra.mxu0 %v5020
    %5899 = vmatpush.bf16.msra.mxu0 %v5013
    %5900 = vmatpush.bf16.msra.mxu0 %v5006
    %5901 = vmatmul.bf16.gmra.mxu0 %v2785
    %v5902 = vpop.f32.mrf.mxu0
    %v5903 = vadd.f32 %v5890, %v5902
    %v5904 = vpop.f32.mrf.mxu0
    %5905 = vdwg.mxu0
    %5906 = vmatpush.bf16.msra.mxu0 %v5111
    %5907 = vmatpush.bf16.msra.mxu0 %v5104
    %5908 = vmatpush.bf16.msra.mxu0 %v5097
    %5909 = vmatpush.bf16.msra.mxu0 %v5090
    %5910 = vmatpush.bf16.msra.mxu0 %v5083
    %5911 = vmatpush.bf16.msra.mxu0 %v5076
    %5912 = vmatpush.bf16.msra.mxu0 %v5069
    %5913 = vmatpush.bf16.msra.mxu0 %v5062
    %5914 = vmatmul.bf16.gmra.mxu0 %v2786
    %v5915 = vpop.f32.mrf.mxu0
    %v5916 = vadd.f32 %v5903, %v5915
    %v5917 = vpop.f32.mrf.mxu0
    %5918 = vdwg.mxu0
    %5919 = vmatpush.bf16.msra.mxu0 %v5167
    %5920 = vmatpush.bf16.msra.mxu0 %v5160
    %5921 = vmatpush.bf16.msra.mxu0 %v5153
    %5922 = vmatpush.bf16.msra.mxu0 %v5146
    %5923 = vmatpush.bf16.msra.mxu0 %v5139
    %5924 = vmatpush.bf16.msra.mxu0 %v5132
    %5925 = vmatpush.bf16.msra.mxu0 %v5125
    %5926 = vmatpush.bf16.msra.mxu0 %v5118
    %5927 = vmatmul.bf16.gmra.mxu0 %v2787
    %v5928 = vpop.f32.mrf.mxu0
    %v5929 = vadd.f32 %v5916, %v5928
    %v5930 = vpop.f32.mrf.mxu0
    %5931 = vdwg.mxu0
    %5932 = vmatpush.bf16.msra.mxu0 %v4776
    %5933 = vmatpush.bf16.msra.mxu0 %v4769
    %5934 = vmatpush.bf16.msra.mxu0 %v4762
    %5935 = vmatpush.bf16.msra.mxu0 %v4755
    %5936 = vmatpush.bf16.msra.mxu0 %v4748
    %5937 = vmatpush.bf16.msra.mxu0 %v4741
    %5938 = vmatpush.bf16.msra.mxu0 %v4734
    %5939 = vmatpush.bf16.msra.mxu0 %v4727
    %5940 = vmatmul.bf16.gmra.mxu0 %v2780
    %v5941 = vpop.f32.mrf.mxu0
    %v5942 = vadd.f32 %v3305, %v5941
    %v5943 = vpop.f32.mrf.mxu0
    %5944 = vdwg.mxu0
    %5945 = vmatpush.bf16.msra.mxu0 %v4832
    %5946 = vmatpush.bf16.msra.mxu0 %v4825
    %5947 = vmatpush.bf16.msra.mxu0 %v4818
    %5948 = vmatpush.bf16.msra.mxu0 %v4811
    %5949 = vmatpush.bf16.msra.mxu0 %v4804
    %5950 = vmatpush.bf16.msra.mxu0 %v4797
    %5951 = vmatpush.bf16.msra.mxu0 %v4790
    %5952 = vmatpush.bf16.msra.mxu0 %v4783
    %5953 = vmatmul.bf16.gmra.mxu0 %v2781
    %v5954 = vpop.f32.mrf.mxu0
    %v5955 = vadd.f32 %v5942, %v5954
    %v5956 = vpop.f32.mrf.mxu0
    %5957 = vdwg.mxu0
    %5958 = vmatpush.bf16.msra.mxu0 %v4888
    %5959 = vmatpush.bf16.msra.mxu0 %v4881
    %5960 = vmatpush.bf16.msra.mxu0 %v4874
    %5961 = vmatpush.bf16.msra.mxu0 %v4867
    %5962 = vmatpush.bf16.msra.mxu0 %v4860
    %5963 = vmatpush.bf16.msra.mxu0 %v4853
    %5964 = vmatpush.bf16.msra.mxu0 %v4846
    %5965 = vmatpush.bf16.msra.mxu0 %v4839
    %5966 = vmatmul.bf16.gmra.mxu0 %v2782
    %v5967 = vpop.f32.mrf.mxu0
    %v5968 = vadd.f32 %v5955, %v5967
    %v5969 = vpop.f32.mrf.mxu0
    %5970 = vdwg.mxu0
    %5971 = vmatpush.bf16.msra.mxu0 %v4944
    %5972 = vmatpush.bf16.msra.mxu0 %v4937
    %5973 = vmatpush.bf16.msra.mxu0 %v4930
    %5974 = vmatpush.bf16.msra.mxu0 %v4923
    %5975 = vmatpush.bf16.msra.mxu0 %v4916
    %5976 = vmatpush.bf16.msra.mxu0 %v4909
    %5977 = vmatpush.bf16.msra.mxu0 %v4902
    %5978 = vmatpush.bf16.msra.mxu0 %v4895
    %5979 = vmatmul.bf16.gmra.mxu0 %v2783
    %v5980 = vpop.f32.mrf.mxu0
    %v5981 = vadd.f32 %v5968, %v5980
    %v5982 = vpop.f32.mrf.mxu0
    %5983 = vdwg.mxu0
    %5984 = vmatpush.bf16.msra.mxu0 %v5000
    %5985 = vmatpush.bf16.msra.mxu0 %v4993
    %5986 = vmatpush.bf16.msra.mxu0 %v4986
    %5987 = vmatpush.bf16.msra.mxu0 %v4979
    %5988 = vmatpush.bf16.msra.mxu0 %v4972
    %5989 = vmatpush.bf16.msra.mxu0 %v4965
    %5990 = vmatpush.bf16.msra.mxu0 %v4958
    %5991 = vmatpush.bf16.msra.mxu0 %v4951
    %5992 = vmatmul.bf16.gmra.mxu0 %v2784
    %v5993 = vpop.f32.mrf.mxu0
    %v5994 = vadd.f32 %v5981, %v5993
    %v5995 = vpop.f32.mrf.mxu0
    %5996 = vdwg.mxu0
    %5997 = vmatpush.bf16.msra.mxu0 %v5056
    %5998 = vmatpush.bf16.msra.mxu0 %v5049
    %5999 = vmatpush.bf16.msra.mxu0 %v5042
    %6000 = vmatpush.bf16.msra.mxu0 %v5035
    %6001 = vmatpush.bf16.msra.mxu0 %v5028
    %6002 = vmatpush.bf16.msra.mxu0 %v5021
    %6003 = vmatpush.bf16.msra.mxu0 %v5014
    %6004 = vmatpush.bf16.msra.mxu0 %v5007
    %6005 = vmatmul.bf16.gmra.mxu0 %v2785
    %v6006 = vpop.f32.mrf.mxu0
    %v6007 = vadd.f32 %v5994, %v6006
    %v6008 = vpop.f32.mrf.mxu0
    %6009 = vdwg.mxu0
    %6010 = vmatpush.bf16.msra.mxu0 %v5112
    %6011 = vmatpush.bf16.msra.mxu0 %v5105
    %6012 = vmatpush.bf16.msra.mxu0 %v5098
    %6013 = vmatpush.bf16.msra.mxu0 %v5091
    %6014 = vmatpush.bf16.msra.mxu0 %v5084
    %6015 = vmatpush.bf16.msra.mxu0 %v5077
    %6016 = vmatpush.bf16.msra.mxu0 %v5070
    %6017 = vmatpush.bf16.msra.mxu0 %v5063
    %6018 = vmatmul.bf16.gmra.mxu0 %v2786
    %v6019 = vpop.f32.mrf.mxu0
    %v6020 = vadd.f32 %v6007, %v6019
    %v6021 = vpop.f32.mrf.mxu0
    %6022 = vdwg.mxu0
    %6023 = vmatpush.bf16.msra.mxu0 %v5168
    %6024 = vmatpush.bf16.msra.mxu0 %v5161
    %6025 = vmatpush.bf16.msra.mxu0 %v5154
    %6026 = vmatpush.bf16.msra.mxu0 %v5147
    %6027 = vmatpush.bf16.msra.mxu0 %v5140
    %6028 = vmatpush.bf16.msra.mxu0 %v5133
    %6029 = vmatpush.bf16.msra.mxu0 %v5126
    %6030 = vmatpush.bf16.msra.mxu0 %v5119
    %6031 = vmatmul.bf16.gmra.mxu0 %v2787
    %v6032 = vpop.f32.mrf.mxu0
    %v6033 = vadd.f32 %v6020, %v6032
    %v6034 = vpop.f32.mrf.mxu0
    %6035 = vdwg.mxu0
    %6036 = vmatpush.bf16.msra.mxu0 %v4777
    %6037 = vmatpush.bf16.msra.mxu0 %v4770
    %6038 = vmatpush.bf16.msra.mxu0 %v4763
    %6039 = vmatpush.bf16.msra.mxu0 %v4756
    %6040 = vmatpush.bf16.msra.mxu0 %v4749
    %6041 = vmatpush.bf16.msra.mxu0 %v4742
    %6042 = vmatpush.bf16.msra.mxu0 %v4735
    %6043 = vmatpush.bf16.msra.mxu0 %v4728
    %6044 = vmatmul.bf16.gmra.mxu0 %v2780
    %v6045 = vpop.f32.mrf.mxu0
    %v6046 = vadd.f32 %v3306, %v6045
    %v6047 = vpop.f32.mrf.mxu0
    %6048 = vdwg.mxu0
    %6049 = vmatpush.bf16.msra.mxu0 %v4833
    %6050 = vmatpush.bf16.msra.mxu0 %v4826
    %6051 = vmatpush.bf16.msra.mxu0 %v4819
    %6052 = vmatpush.bf16.msra.mxu0 %v4812
    %6053 = vmatpush.bf16.msra.mxu0 %v4805
    %6054 = vmatpush.bf16.msra.mxu0 %v4798
    %6055 = vmatpush.bf16.msra.mxu0 %v4791
    %6056 = vmatpush.bf16.msra.mxu0 %v4784
    %6057 = vmatmul.bf16.gmra.mxu0 %v2781
    %v6058 = vpop.f32.mrf.mxu0
    %v6059 = vadd.f32 %v6046, %v6058
    %v6060 = vpop.f32.mrf.mxu0
    %6061 = vdwg.mxu0
    %6062 = vmatpush.bf16.msra.mxu0 %v4889
    %6063 = vmatpush.bf16.msra.mxu0 %v4882
    %6064 = vmatpush.bf16.msra.mxu0 %v4875
    %6065 = vmatpush.bf16.msra.mxu0 %v4868
    %6066 = vmatpush.bf16.msra.mxu0 %v4861
    %6067 = vmatpush.bf16.msra.mxu0 %v4854
    %6068 = vmatpush.bf16.msra.mxu0 %v4847
    %6069 = vmatpush.bf16.msra.mxu0 %v4840
    %6070 = vmatmul.bf16.gmra.mxu0 %v2782
    %v6071 = vpop.f32.mrf.mxu0
    %v6072 = vadd.f32 %v6059, %v6071
    %v6073 = vpop.f32.mrf.mxu0
    %6074 = vdwg.mxu0
    %6075 = vmatpush.bf16.msra.mxu0 %v4945
    %6076 = vmatpush.bf16.msra.mxu0 %v4938
    %6077 = vmatpush.bf16.msra.mxu0 %v4931
    %6078 = vmatpush.bf16.msra.mxu0 %v4924
    %6079 = vmatpush.bf16.msra.mxu0 %v4917
    %6080 = vmatpush.bf16.msra.mxu0 %v4910
    %6081 = vmatpush.bf16.msra.mxu0 %v4903
    %6082 = vmatpush.bf16.msra.mxu0 %v4896
    %6083 = vmatmul.bf16.gmra.mxu0 %v2783
    %v6084 = vpop.f32.mrf.mxu0
    %v6085 = vadd.f32 %v6072, %v6084
    %v6086 = vpop.f32.mrf.mxu0
    %6087 = vdwg.mxu0
    %6088 = vmatpush.bf16.msra.mxu0 %v5001
    %6089 = vmatpush.bf16.msra.mxu0 %v4994
    %6090 = vmatpush.bf16.msra.mxu0 %v4987
    %6091 = vmatpush.bf16.msra.mxu0 %v4980
    %6092 = vmatpush.bf16.msra.mxu0 %v4973
    %6093 = vmatpush.bf16.msra.mxu0 %v4966
    %6094 = vmatpush.bf16.msra.mxu0 %v4959
    %6095 = vmatpush.bf16.msra.mxu0 %v4952
    %6096 = vmatmul.bf16.gmra.mxu0 %v2784
    %v6097 = vpop.f32.mrf.mxu0
    %v6098 = vadd.f32 %v6085, %v6097
    %v6099 = vpop.f32.mrf.mxu0
    %6100 = vdwg.mxu0
    %6101 = vmatpush.bf16.msra.mxu0 %v5057
    %6102 = vmatpush.bf16.msra.mxu0 %v5050
    %6103 = vmatpush.bf16.msra.mxu0 %v5043
    %6104 = vmatpush.bf16.msra.mxu0 %v5036
    %6105 = vmatpush.bf16.msra.mxu0 %v5029
    %6106 = vmatpush.bf16.msra.mxu0 %v5022
    %6107 = vmatpush.bf16.msra.mxu0 %v5015
    %6108 = vmatpush.bf16.msra.mxu0 %v5008
    %6109 = vmatmul.bf16.gmra.mxu0 %v2785
    %v6110 = vpop.f32.mrf.mxu0
    %v6111 = vadd.f32 %v6098, %v6110
    %v6112 = vpop.f32.mrf.mxu0
    %6113 = vdwg.mxu0
    %6114 = vmatpush.bf16.msra.mxu0 %v5113
    %6115 = vmatpush.bf16.msra.mxu0 %v5106
    %6116 = vmatpush.bf16.msra.mxu0 %v5099
    %6117 = vmatpush.bf16.msra.mxu0 %v5092
    %6118 = vmatpush.bf16.msra.mxu0 %v5085
    %6119 = vmatpush.bf16.msra.mxu0 %v5078
    %6120 = vmatpush.bf16.msra.mxu0 %v5071
    %6121 = vmatpush.bf16.msra.mxu0 %v5064
    %6122 = vmatmul.bf16.gmra.mxu0 %v2786
    %v6123 = vpop.f32.mrf.mxu0
    %v6124 = vadd.f32 %v6111, %v6123
    %v6125 = vpop.f32.mrf.mxu0
    %6126 = vdwg.mxu0
    %6127 = vmatpush.bf16.msra.mxu0 %v5169
    %6128 = vmatpush.bf16.msra.mxu0 %v5162
    %6129 = vmatpush.bf16.msra.mxu0 %v5155
    %6130 = vmatpush.bf16.msra.mxu0 %v5148
    %6131 = vmatpush.bf16.msra.mxu0 %v5141
    %6132 = vmatpush.bf16.msra.mxu0 %v5134
    %6133 = vmatpush.bf16.msra.mxu0 %v5127
    %6134 = vmatpush.bf16.msra.mxu0 %v5120
    %6135 = vmatmul.bf16.gmra.mxu0 %v2787
    %v6136 = vpop.f32.mrf.mxu0
    %v6137 = vadd.f32 %v6124, %v6136
    %v6138 = vpop.f32.mrf.mxu0
    %6139 = vdwg.mxu0
    %6140 = vmatpush.bf16.msra.mxu0 %v4778
    %6141 = vmatpush.bf16.msra.mxu0 %v4771
    %6142 = vmatpush.bf16.msra.mxu0 %v4764
    %6143 = vmatpush.bf16.msra.mxu0 %v4757
    %6144 = vmatpush.bf16.msra.mxu0 %v4750
    %6145 = vmatpush.bf16.msra.mxu0 %v4743
    %6146 = vmatpush.bf16.msra.mxu0 %v4736
    %6147 = vmatpush.bf16.msra.mxu0 %v4729
    %6148 = vmatmul.bf16.gmra.mxu0 %v2780
    %v6149 = vpop.f32.mrf.mxu0
    %v6150 = vadd.f32 %v3307, %v6149
    %v6151 = vpop.f32.mrf.mxu0
    %6152 = vdwg.mxu0
    %6153 = vmatpush.bf16.msra.mxu0 %v4834
    %6154 = vmatpush.bf16.msra.mxu0 %v4827
    %6155 = vmatpush.bf16.msra.mxu0 %v4820
    %6156 = vmatpush.bf16.msra.mxu0 %v4813
    %6157 = vmatpush.bf16.msra.mxu0 %v4806
    %6158 = vmatpush.bf16.msra.mxu0 %v4799
    %6159 = vmatpush.bf16.msra.mxu0 %v4792
    %6160 = vmatpush.bf16.msra.mxu0 %v4785
    %6161 = vmatmul.bf16.gmra.mxu0 %v2781
    %v6162 = vpop.f32.mrf.mxu0
    %v6163 = vadd.f32 %v6150, %v6162
    %v6164 = vpop.f32.mrf.mxu0
    %6165 = vdwg.mxu0
    %6166 = vmatpush.bf16.msra.mxu0 %v4890
    %6167 = vmatpush.bf16.msra.mxu0 %v4883
    %6168 = vmatpush.bf16.msra.mxu0 %v4876
    %6169 = vmatpush.bf16.msra.mxu0 %v4869
    %6170 = vmatpush.bf16.msra.mxu0 %v4862
    %6171 = vmatpush.bf16.msra.mxu0 %v4855
    %6172 = vmatpush.bf16.msra.mxu0 %v4848
    %6173 = vmatpush.bf16.msra.mxu0 %v4841
    %6174 = vmatmul.bf16.gmra.mxu0 %v2782
    %v6175 = vpop.f32.mrf.mxu0
    %v6176 = vadd.f32 %v6163, %v6175
    %v6177 = vpop.f32.mrf.mxu0
    %6178 = vdwg.mxu0
    %6179 = vmatpush.bf16.msra.mxu0 %v4946
    %6180 = vmatpush.bf16.msra.mxu0 %v4939
    %6181 = vmatpush.bf16.msra.mxu0 %v4932
    %6182 = vmatpush.bf16.msra.mxu0 %v4925
    %6183 = vmatpush.bf16.msra.mxu0 %v4918
    %6184 = vmatpush.bf16.msra.mxu0 %v4911
    %6185 = vmatpush.bf16.msra.mxu0 %v4904
    %6186 = vmatpush.bf16.msra.mxu0 %v4897
    %6187 = vmatmul.bf16.gmra.mxu0 %v2783
    %v6188 = vpop.f32.mrf.mxu0
    %v6189 = vadd.f32 %v6176, %v6188
    %v6190 = vpop.f32.mrf.mxu0
    %6191 = vdwg.mxu0
    %6192 = vmatpush.bf16.msra.mxu0 %v5002
    %6193 = vmatpush.bf16.msra.mxu0 %v4995
    %6194 = vmatpush.bf16.msra.mxu0 %v4988
    %6195 = vmatpush.bf16.msra.mxu0 %v4981
    %6196 = vmatpush.bf16.msra.mxu0 %v4974
    %6197 = vmatpush.bf16.msra.mxu0 %v4967
    %6198 = vmatpush.bf16.msra.mxu0 %v4960
    %6199 = vmatpush.bf16.msra.mxu0 %v4953
    %6200 = vmatmul.bf16.gmra.mxu0 %v2784
    %v6201 = vpop.f32.mrf.mxu0
    %v6202 = vadd.f32 %v6189, %v6201
    %v6203 = vpop.f32.mrf.mxu0
    %6204 = vdwg.mxu0
    %6205 = vmatpush.bf16.msra.mxu0 %v5058
    %6206 = vmatpush.bf16.msra.mxu0 %v5051
    %6207 = vmatpush.bf16.msra.mxu0 %v5044
    %6208 = vmatpush.bf16.msra.mxu0 %v5037
    %6209 = vmatpush.bf16.msra.mxu0 %v5030
    %6210 = vmatpush.bf16.msra.mxu0 %v5023
    %6211 = vmatpush.bf16.msra.mxu0 %v5016
    %6212 = vmatpush.bf16.msra.mxu0 %v5009
    %6213 = vmatmul.bf16.gmra.mxu0 %v2785
    %v6214 = vpop.f32.mrf.mxu0
    %v6215 = vadd.f32 %v6202, %v6214
    %v6216 = vpop.f32.mrf.mxu0
    %6217 = vdwg.mxu0
    %6218 = vmatpush.bf16.msra.mxu0 %v5114
    %6219 = vmatpush.bf16.msra.mxu0 %v5107
    %6220 = vmatpush.bf16.msra.mxu0 %v5100
    %6221 = vmatpush.bf16.msra.mxu0 %v5093
    %6222 = vmatpush.bf16.msra.mxu0 %v5086
    %6223 = vmatpush.bf16.msra.mxu0 %v5079
    %6224 = vmatpush.bf16.msra.mxu0 %v5072
    %6225 = vmatpush.bf16.msra.mxu0 %v5065
    %6226 = vmatmul.bf16.gmra.mxu0 %v2786
    %v6227 = vpop.f32.mrf.mxu0
    %v6228 = vadd.f32 %v6215, %v6227
    %v6229 = vpop.f32.mrf.mxu0
    %6230 = vdwg.mxu0
    %6231 = vmatpush.bf16.msra.mxu0 %v5170
    %6232 = vmatpush.bf16.msra.mxu0 %v5163
    %6233 = vmatpush.bf16.msra.mxu0 %v5156
    %6234 = vmatpush.bf16.msra.mxu0 %v5149
    %6235 = vmatpush.bf16.msra.mxu0 %v5142
    %6236 = vmatpush.bf16.msra.mxu0 %v5135
    %6237 = vmatpush.bf16.msra.mxu0 %v5128
    %6238 = vmatpush.bf16.msra.mxu0 %v5121
    %6239 = vmatmul.bf16.gmra.mxu0 %v2787
    %v6240 = vpop.f32.mrf.mxu0
    %v6241 = vadd.f32 %v6228, %v6240
    %v6242 = vpop.f32.mrf.mxu0
    %6243 = vdwg.mxu0
    %6244 = vmatpush.bf16.msra.mxu0 %v4779
    %6245 = vmatpush.bf16.msra.mxu0 %v4772
    %6246 = vmatpush.bf16.msra.mxu0 %v4765
    %6247 = vmatpush.bf16.msra.mxu0 %v4758
    %6248 = vmatpush.bf16.msra.mxu0 %v4751
    %6249 = vmatpush.bf16.msra.mxu0 %v4744
    %6250 = vmatpush.bf16.msra.mxu0 %v4737
    %6251 = vmatpush.bf16.msra.mxu0 %v4730
    %6252 = vmatmul.bf16.gmra.mxu0 %v2780
    %v6253 = vpop.f32.mrf.mxu0
    %v6254 = vadd.f32 %v3308, %v6253
    %v6255 = vpop.f32.mrf.mxu0
    %6256 = vdwg.mxu0
    %6257 = vmatpush.bf16.msra.mxu0 %v4835
    %6258 = vmatpush.bf16.msra.mxu0 %v4828
    %6259 = vmatpush.bf16.msra.mxu0 %v4821
    %6260 = vmatpush.bf16.msra.mxu0 %v4814
    %6261 = vmatpush.bf16.msra.mxu0 %v4807
    %6262 = vmatpush.bf16.msra.mxu0 %v4800
    %6263 = vmatpush.bf16.msra.mxu0 %v4793
    %6264 = vmatpush.bf16.msra.mxu0 %v4786
    %6265 = vmatmul.bf16.gmra.mxu0 %v2781
    %v6266 = vpop.f32.mrf.mxu0
    %v6267 = vadd.f32 %v6254, %v6266
    %v6268 = vpop.f32.mrf.mxu0
    %6269 = vdwg.mxu0
    %6270 = vmatpush.bf16.msra.mxu0 %v4891
    %6271 = vmatpush.bf16.msra.mxu0 %v4884
    %6272 = vmatpush.bf16.msra.mxu0 %v4877
    %6273 = vmatpush.bf16.msra.mxu0 %v4870
    %6274 = vmatpush.bf16.msra.mxu0 %v4863
    %6275 = vmatpush.bf16.msra.mxu0 %v4856
    %6276 = vmatpush.bf16.msra.mxu0 %v4849
    %6277 = vmatpush.bf16.msra.mxu0 %v4842
    %6278 = vmatmul.bf16.gmra.mxu0 %v2782
    %v6279 = vpop.f32.mrf.mxu0
    %v6280 = vadd.f32 %v6267, %v6279
    %v6281 = vpop.f32.mrf.mxu0
    %6282 = vdwg.mxu0
    %6283 = vmatpush.bf16.msra.mxu0 %v4947
    %6284 = vmatpush.bf16.msra.mxu0 %v4940
    %6285 = vmatpush.bf16.msra.mxu0 %v4933
    %6286 = vmatpush.bf16.msra.mxu0 %v4926
    %6287 = vmatpush.bf16.msra.mxu0 %v4919
    %6288 = vmatpush.bf16.msra.mxu0 %v4912
    %6289 = vmatpush.bf16.msra.mxu0 %v4905
    %6290 = vmatpush.bf16.msra.mxu0 %v4898
    %6291 = vmatmul.bf16.gmra.mxu0 %v2783
    %v6292 = vpop.f32.mrf.mxu0
    %v6293 = vadd.f32 %v6280, %v6292
    %v6294 = vpop.f32.mrf.mxu0
    %6295 = vdwg.mxu0
    %6296 = vmatpush.bf16.msra.mxu0 %v5003
    %6297 = vmatpush.bf16.msra.mxu0 %v4996
    %6298 = vmatpush.bf16.msra.mxu0 %v4989
    %6299 = vmatpush.bf16.msra.mxu0 %v4982
    %6300 = vmatpush.bf16.msra.mxu0 %v4975
    %6301 = vmatpush.bf16.msra.mxu0 %v4968
    %6302 = vmatpush.bf16.msra.mxu0 %v4961
    %6303 = vmatpush.bf16.msra.mxu0 %v4954
    %6304 = vmatmul.bf16.gmra.mxu0 %v2784
    %v6305 = vpop.f32.mrf.mxu0
    %v6306 = vadd.f32 %v6293, %v6305
    %v6307 = vpop.f32.mrf.mxu0
    %6308 = vdwg.mxu0
    %6309 = vmatpush.bf16.msra.mxu0 %v5059
    %6310 = vmatpush.bf16.msra.mxu0 %v5052
    %6311 = vmatpush.bf16.msra.mxu0 %v5045
    %6312 = vmatpush.bf16.msra.mxu0 %v5038
    %6313 = vmatpush.bf16.msra.mxu0 %v5031
    %6314 = vmatpush.bf16.msra.mxu0 %v5024
    %6315 = vmatpush.bf16.msra.mxu0 %v5017
    %6316 = vmatpush.bf16.msra.mxu0 %v5010
    %6317 = vmatmul.bf16.gmra.mxu0 %v2785
    %v6318 = vpop.f32.mrf.mxu0
    %v6319 = vadd.f32 %v6306, %v6318
    %v6320 = vpop.f32.mrf.mxu0
    %6321 = vdwg.mxu0
    %6322 = vmatpush.bf16.msra.mxu0 %v5115
    %6323 = vmatpush.bf16.msra.mxu0 %v5108
    %6324 = vmatpush.bf16.msra.mxu0 %v5101
    %6325 = vmatpush.bf16.msra.mxu0 %v5094
    %6326 = vmatpush.bf16.msra.mxu0 %v5087
    %6327 = vmatpush.bf16.msra.mxu0 %v5080
    %6328 = vmatpush.bf16.msra.mxu0 %v5073
    %6329 = vmatpush.bf16.msra.mxu0 %v5066
    %6330 = vmatmul.bf16.gmra.mxu0 %v2786
    %v6331 = vpop.f32.mrf.mxu0
    %v6332 = vadd.f32 %v6319, %v6331
    %v6333 = vpop.f32.mrf.mxu0
    %6334 = vdwg.mxu0
    %6335 = vmatpush.bf16.msra.mxu0 %v5171
    %6336 = vmatpush.bf16.msra.mxu0 %v5164
    %6337 = vmatpush.bf16.msra.mxu0 %v5157
    %6338 = vmatpush.bf16.msra.mxu0 %v5150
    %6339 = vmatpush.bf16.msra.mxu0 %v5143
    %6340 = vmatpush.bf16.msra.mxu0 %v5136
    %6341 = vmatpush.bf16.msra.mxu0 %v5129
    %6342 = vmatpush.bf16.msra.mxu0 %v5122
    %6343 = vmatmul.bf16.gmra.mxu0 %v2787
    %v6344 = vpop.f32.mrf.mxu0
    %v6345 = vadd.f32 %v6332, %v6344
    %v6346 = vpop.f32.mrf.mxu0
    %6347 = vdwg.mxu0
    %v6348 = vtanh.pop %v5721
    %v6349 = vtanh.pop %v5825
    %v6350 = vtanh.pop %v5929
    %v6351 = vtanh.pop %v6033
    %v6352 = vtanh.pop %v6137
    %v6353 = vtanh.pop %v6241
    %v6354 = vtanh.pop %v6345
    %6355 = vst [vmem:[#allocation17] sm:$0xff] %v6348
    %6356 = vst [vmem:[#allocation17 + $0x8] sm:$0xff] %v6349
    %6357 = vst [vmem:[#allocation17 + $0x10] sm:$0xff] %v6350
    %6358 = vst [vmem:[#allocation17 + $0x18] sm:$0xff] %v6351
    %6359 = vst [vmem:[#allocation17 + $0x20] sm:$0xff] %v6352
    %6360 = vst [vmem:[#allocation17 + $0x28] sm:$0xff] %v6353
    %6361 = vst [vmem:[#allocation17 + $0x30] sm:$0xff] %v6354
    // Predicated region
    $region74: #{tpu_custom_call.1} parent=1 // pred_check
      _
    $region75: #{tpu_custom_call.1} parent=1 // pred_check_branch
      %6363 = sbr.rel (0) target = $region77
    $region76: #{tpu_custom_call.1} parent=1 // pred_region
      %6365 = vsyncadd [#allocation4], 0
      %s6367 = sshll.u32 [#allocation17], 4
      %s6368 = int_to_ptr.vmem [resolvable:$true] %s6367
      %s6369 = sshll.u32 %s9, 4
      %s6370 = int_to_ptr.hbm [resolvable:$true] %s6369
      %6372 = dma.vmem_to_hbm [thread:$0]  %s6368, 896, %s6370, [#allocation4]
    $region77: #{tpu_custom_call.1} parent=1 // pred_fallthru
      _
    // Predicated region
    $region78: #{tpu_custom_call.1} parent=1 // pred_check
      _
    $region79: #{tpu_custom_call.1} parent=1 // pred_check_branch
      %6374 = sbr.rel (0) target = $region81
    $region80: #{tpu_custom_call.1} parent=1 // pred_region
      %6376 = dma.done [#allocation4], 896
    $region81: #{tpu_custom_call.1} parent=1 // pred_fallthru
      _
    %6377 = vsyncpa [#allocation3], 1
    %6378 = vsyncpa [#allocation6], 1
    %6379 = vsyncpa [#allocation9], 1
    %6380 = vsyncpa [#allocation12], 1
    %6381 = vsyncpa [#allocation15], 1
    %6382 = vsyncpa [#allocation4], 1

</llo_original>
